<compile_context>
chip_gen: v5e
topology: v5e:2x2
jax: 0.10.0
libtpu: 0.0.40
codegen_flags: <defaults>
</compile_context>

<pallas_src>
import functools
import math

import jax
import jax.numpy as jnp
import numpy as np
from jax.experimental import pallas as pl
from jax.experimental.pallas import tpu as pltpu

LANE = 128
# Set to jnp.bfloat16 for 2x MXU throughput / half the weight+activation bytes
# at production scale (accumulation stays f32 via preferred_element_type).
MATMUL_DTYPE = jnp.float32


def _round_up(x, m):
    return (x + m - 1) // m * m


# ----------------------------------------------------------------------------
# Kernel 1: time-parallel x-path convolutions (no recurrence), grid = (T,)
#   xpre[t] = im2col(pad(x[t])) @ [conv_zx | conv_rx | conv_h1] + [bz | br | bh1]
# ----------------------------------------------------------------------------
def _xconv_kernel(x_ref, wx_ref, bx_ref, xpre_ref, xpad_ref, *, B, H, W, Cin):
    # Every step fully re-initializes its scratch, so this kernel is safe to
    # shard across cores ("parallel" grid axis on multi-TC chips).
    xpad_ref[...] = jnp.zeros_like(xpad_ref)
    xpad_ref[:, 1:H + 1, 1:W + 1, :] = x_ref[0]

    xv = xpad_ref[...]                                   # (B, H+2, W+2, Cin)
    M = B * H * W
    cols = [xv[:, dy:dy + H, dx:dx + W, :].reshape(M, Cin)
            for dy in range(3) for dx in range(3)]
    patch = jnp.concatenate(cols, axis=-1)               # (M, 9*Cin)

    acc = jnp.dot(patch.astype(MATMUL_DTYPE), wx_ref[...].astype(MATMUL_DTYPE),
                  preferred_element_type=jnp.float32)    # (M, Npad)
    xpre_ref[0] = acc + bx_ref[...]


# ----------------------------------------------------------------------------
# Kernel 2: sequential ConvGRU recurrence, grid = (T,) ("arbitrary")
#   one fused im2col matmul on the hidden carry per step + gate arithmetic
# ----------------------------------------------------------------------------
def _gru_step_kernel(xpre_ref, wh_ref, bh2_ref, out_ref, hpad_ref,
                     *, B, H, W, Ch):
    t = pl.program_id(0)

    @pl.when(t == 0)
    def _init():
        # zero the padded carry; the halo is never written again, so it stays
        # zero (== 'SAME' zero padding of the conv on h) for every step.
        hpad_ref[...] = jnp.zeros_like(hpad_ref)

    hv = hpad_ref[...]                                   # (B, H+2, W+2, Ch)
    M = B * H * W
    cols = [hv[:, dy:dy + H, dx:dx + W, :].reshape(M, Ch)
            for dy in range(3) for dx in range(3)]
    patch = jnp.concatenate(cols, axis=-1)               # (M, 9*Ch)
    h_prev = cols[4]                                     # centre tap == h_{t-1}

    # fused [conv_zh | conv_rh | conv_h2] in one MXU matmul (K = 9*Ch)
    hconv = jnp.dot(patch.astype(MATMUL_DTYPE), wh_ref[...].astype(MATMUL_DTYPE),
                    preferred_element_type=jnp.float32)  # (M, Npad)

    xpre = xpre_ref[0]                                   # (M, Npad), biases folded
    z = jax.nn.sigmoid(xpre[:, 0 * Ch:1 * Ch] + hconv[:, 0 * Ch:1 * Ch])
    r = jax.nn.sigmoid(xpre[:, 1 * Ch:2 * Ch] + hconv[:, 1 * Ch:2 * Ch])
    h_hat = jnp.tanh(xpre[:, 2 * Ch:3 * Ch]
                     + r * (hconv[:, 2 * Ch:3 * Ch] + bh2_ref[...]))
    h_new = (1.0 - z) * h_hat + z * h_prev               # (M, Ch)

    h_blk = h_new.reshape(B, H, W, Ch)                   # free retiling
    hpad_ref[:, 1:H + 1, 1:W + 1, :] = h_blk             # carry for step t+1
    out_ref[0] = h_blk.astype(out_ref.dtype)


# ----------------------------------------------------------------------------
# Per-layer wrapper: two pallas_calls (parallel x-path, then the recurrence)
# ----------------------------------------------------------------------------
def convgru_layer_pallas(x_seq, fused):
    """x_seq: (T, B, H, W, Cin) f32 -> (T, B, H, W, Ch) f32."""
    T, B, H, W, Cin = x_seq.shape
    wx, bx, wh, bh2, Ch = fused
    Npad = wx.shape[-1]
    M = B * H * W

    # ---- pass 1: time-parallel x-path pre-activations ---------------------
    xpre = pl.pallas_call(
        functools.partial(_xconv_kernel, B=B, H=H, W=W, Cin=Cin),
        out_shape=jax.ShapeDtypeStruct((T, M, Npad), jnp.float32),
        grid_spec=pltpu.PrefetchScalarGridSpec(
            num_scalar_prefetch=0,
            grid=(T,),
            in_specs=[
                pl.BlockSpec((1, B, H, W, Cin), lambda t: (t, 0, 0, 0, 0)),
                pl.BlockSpec(wx.shape, lambda t: (0, 0)),
                pl.BlockSpec(bx.shape, lambda t: (0, 0)),
            ],
            out_specs=pl.BlockSpec((1, M, Npad), lambda t: (t, 0, 0)),
            scratch_shapes=[pltpu.VMEM((B, H + 2, W + 2, Cin), jnp.float32)],
        ),
        compiler_params=pltpu.CompilerParams(
            dimension_semantics=("parallel",)),
        cost_estimate=pl.CostEstimate(
            flops=2 * T * M * (9 * Cin) * Npad,
            transcendentals=0,
            bytes_accessed=4 * (T * B * H * W * Cin + T * M * Npad + wx.size)),
    )(x_seq, wx, bx)

    # ---- pass 2: sequential recurrence -------------------------------------
    out = pl.pallas_call(
        functools.partial(_gru_step_kernel, B=B, H=H, W=W, Ch=Ch),
        out_shape=jax.ShapeDtypeStruct((T, B, H, W, Ch), jnp.float32),
        grid_spec=pltpu.PrefetchScalarGridSpec(
            num_scalar_prefetch=0,
            grid=(T,),
            in_specs=[
                pl.BlockSpec((1, M, Npad), lambda t: (t, 0, 0)),
                pl.BlockSpec(wh.shape, lambda t: (0, 0)),
                pl.BlockSpec(bh2.shape, lambda t: (0, 0)),
            ],
            out_specs=pl.BlockSpec((1, B, H, W, Ch), lambda t: (t, 0, 0, 0, 0)),
            scratch_shapes=[pltpu.VMEM((B, H + 2, W + 2, Ch), jnp.float32)],
        ),
        compiler_params=pltpu.CompilerParams(
            dimension_semantics=("arbitrary",)),
        cost_estimate=pl.CostEstimate(
            flops=T * (2 * M * (9 * Ch) * Npad + 12 * M * Ch),
            transcendentals=3 * T * M * Ch,
            bytes_accessed=4 * (T * M * Npad + T * M * Ch + wh.size)),
    )(xpre, wh, bh2)
    return out


# ----------------------------------------------------------------------------
# Parameter init (deterministic, mirrors ConvGRUCell.reset_parameters)
# ----------------------------------------------------------------------------
def _xavier_hwio(key, cin, cout, ks, gain):
    kh, kw = ks
    fan_in, fan_out = cin * kh * kw, cout * kh * kw
    bound = gain * math.sqrt(6.0 / (fan_in + fan_out))
    return jax.random.uniform(key, (kh, kw, cin, cout), jnp.float32, -bound, bound)


def init_convgru_params(key, input_dim, hidden_dims, kernel_size=(3, 3)):
    gain = 5.0 / 3.0  # nn.init.calculate_gain('tanh')
    raw = []
    for i, Ch in enumerate(hidden_dims):
        Cin = input_dim if i == 0 else hidden_dims[i - 1]
        key, k1, k2, k3 = jax.random.split(key, 4)
        raw.append(dict(
            w_zr=_xavier_hwio(k1, Cin + Ch, 2 * Ch, kernel_size, gain),
            b_zr=jnp.zeros((2 * Ch,), jnp.float32),
            w_h1=_xavier_hwio(k2, Cin, Ch, kernel_size, gain),
            b_h1=jnp.zeros((Ch,), jnp.float32),
            w_h2=_xavier_hwio(k3, Ch, Ch, kernel_size, gain),
            b_h2=jnp.zeros((Ch,), jnp.float32),
        ))
    return raw


def _fuse_for_kernel(p, Cin, Ch):
    """Split conv_zr into x/h halves, fuse weights along Cout, reshape to the
    im2col-matmul form, and zero-pad Cout to a multiple of 128 lanes."""
    Nout = 3 * Ch
    Npad = _round_up(Nout, LANE)

    wz, wr = p['w_zr'][..., :Ch], p['w_zr'][..., Ch:]
    bz, br = p['b_zr'][:Ch], p['b_zr'][Ch:]

    # x path: [conv_zx | conv_rx | conv_h1]  ->  (9*Cin, Npad)
    wx = jnp.concatenate([wz[:, :, :Cin, :], wr[:, :, :Cin, :], p['w_h1']], -1)
    wx = jnp.pad(wx.reshape(9 * Cin, Nout), ((0, 0), (0, Npad - Nout)))
    bx = jnp.concatenate([bz, br, p['b_h1']])
    bx = jnp.pad(bx, (0, Npad - Nout)).reshape(1, Npad)

    # h path: [conv_zh | conv_rh | conv_h2]  ->  (9*Ch, Npad)
    wh = jnp.concatenate([wz[:, :, Cin:, :], wr[:, :, Cin:, :], p['w_h2']], -1)
    wh = jnp.pad(wh.reshape(9 * Ch, Nout), ((0, 0), (0, Npad - Nout)))
    bh2 = p['b_h2'].reshape(1, Ch)

    return (wx, bx, wh, bh2, Ch)


# ----------------------------------------------------------------------------
# Full ConvGRU forward (batch_first=True, eval mode), PyTorch NCHW in/out
# ----------------------------------------------------------------------------
def convgru_forward(x_btchw, raw_params, input_dim, hidden_dims):
    x = jnp.transpose(x_btchw, (1, 0, 3, 4, 2)).astype(jnp.float32)  # (T,B,H,W,C)
    cur = x
    last_states = []
    for i, p in enumerate(raw_params):
        Cin = input_dim if i == 0 else hidden_dims[i - 1]
        fused = _fuse_for_kernel(p, Cin, hidden_dims[i])
        cur = convgru_layer_pallas(cur, fused)            # (T, B, H, W, Ch)
        last_states.append(cur[-1])                       # (B, H, W, Ch)
    layer_output = jnp.transpose(cur, (1, 0, 4, 2, 3))                # (B,T,C,H,W)
    last = jnp.stack([jnp.transpose(h, (0, 3, 1, 2)) for h in last_states], 0)
    return layer_output, last                                          # (L,B,C,H,W)


# ----------------------------------------------------------------------------
# Pure-JAX reference (numerical validation only)
# ----------------------------------------------------------------------------
def _conv_same_ref(x, w, b):
    y = jax.lax.conv_general_dilated(x, w, (1, 1), 'SAME',
                                     dimension_numbers=('NHWC', 'HWIO', 'NHWC'))
    return y + b


def _cell_ref(x, h, p, Ch):
    zr = jax.nn.sigmoid(_conv_same_ref(jnp.concatenate([x, h], -1),
                                       p['w_zr'], p['b_zr']))
    z, r = zr[..., :Ch], zr[..., Ch:]
    h_hat = jnp.tanh(_conv_same_ref(x, p['w_h1'], p['b_h1'])
                     + r * _conv_same_ref(h, p['w_h2'], p['b_h2']))
    return (1.0 - z) * h_hat + z * h


def convgru_forward_ref(x_btchw, raw_params, input_dim, hidden_dims):
    x = jnp.transpose(x_btchw, (1, 0, 3, 4, 2))
    cur = x
    last = []
    for i, p in enumerate(raw_params):
        Ch = hidden_dims[i]
        h = jnp.zeros(cur.shape[1:4] + (Ch,), jnp.float32)
        outs = []
        for t in range(cur.shape[0]):
            h = _cell_ref(cur[t], h, p, Ch)
            outs.append(h)
        cur = jnp.stack(outs, 0)
        last.append(h)
    layer_output = jnp.transpose(cur, (1, 0, 4, 2, 3))
    last = jnp.stack([jnp.transpose(h, (0, 3, 1, 2)) for h in last], 0)
    return layer_output, last


# ----------------------------------------------------------------------------
if __name__ == "__main__":
    B, T, C_IN, H, W = 2, 8, 4, 8, 8
    HIDDEN = (32, 32)          # n_layers = 2

    key = jax.random.PRNGKey(0)
    kx, kp = jax.random.split(key)
    x = jax.random.normal(kx, (B, T, C_IN, H, W), jnp.float32)   # (B,T,C,H,W)

    params = init_convgru_params(kp, C_IN, HIDDEN)

    fwd = jax.jit(functools.partial(convgru_forward,
                                    input_dim=C_IN, hidden_dims=HIDDEN))
    layer_out, last_states = fwd(x, params)
    layer_out = jax.block_until_ready(layer_out)
    last_states = jax.block_until_ready(last_states)

    ref_out, ref_last = convgru_forward_ref(x, params, C_IN, HIDDEN)
    ref_out = jax.block_until_ready(ref_out)

    np.testing.assert_allclose(np.asarray(layer_out), np.asarray(ref_out),
                               rtol=0.0, atol=3e-2)
    np.testing.assert_allclose(np.asarray(last_states), np.asarray(ref_last),
                               rtol=0.0, atol=3e-2)
    print("KERNEL_OK")
</pallas_src>

<mosaic_0001>
module attributes {stable_mosaic.version = 11 : i64} {
  func.func @_xconv_kernel(%arg0: i32, %arg1: memref<1x2x8x8x4xf32, #tpu.memory_space<vmem>>, %arg2: memref<36x128xf32, #tpu.memory_space<vmem>>, %arg3: memref<1x128xf32, #tpu.memory_space<vmem>>, %arg4: memref<1x128x128xf32, #tpu.memory_space<vmem>>, %arg5: memref<2x10x10x4xf32, #tpu.memory_space<vmem>>) attributes {dimension_semantics = [#tpu.dimension_semantics<parallel>], iteration_bounds = array<i64: 8>, scalar_prefetch = 0 : i64, scratch_operands = 1 : i64, tpu.core_type = #tpu.core_type<tc>, window_params = [{transform_indices = @transform_0, window_bounds = array<i64: 1, 2, 8, 8, 4>}, {pipeline_mode = #tpu.pipeline_mode<synchronous>, transform_indices = @transform_1, window_bounds = array<i64: 36, 128>}, {pipeline_mode = #tpu.pipeline_mode<synchronous>, transform_indices = @transform_2, window_bounds = array<i64: 1, 128>}, {transform_indices = @transform_3, window_bounds = array<i64: 1, 128, 128>}]} {
    %cst = arith.constant 0.000000e+00 : f32
    %0 = vector.broadcast %cst : f32 to vector<2x10x10x4xf32>
    %c0 = arith.constant 0 : index
    %c0_0 = arith.constant 0 : index
    %c0_1 = arith.constant 0 : index
    %c0_2 = arith.constant 0 : index
    %1 = vector.load %arg5[%c0, %c0_0, %c0_1, %c0_2] : memref<2x10x10x4xf32, #tpu.memory_space<vmem>>, vector<2x10x10x4xf32>
    tpu.vector_store %arg5[%c0, %c0_0, %c0_1, %c0_2], %0 {strides = array<i32>} : memref<2x10x10x4xf32, #tpu.memory_space<vmem>>, vector<2x10x10x4xf32>,
    %c0_3 = arith.constant 0 : index
    %c0_4 = arith.constant 0 : index
    %c0_5 = arith.constant 0 : index
    %c0_6 = arith.constant 0 : index
    %c0_7 = arith.constant 0 : index
    %2 = vector.load %arg1[%c0_3, %c0_4, %c0_5, %c0_6, %c0_7] : memref<1x2x8x8x4xf32, #tpu.memory_space<vmem>>, vector<1x2x8x8x4xf32>
    %3 = vector.shape_cast %2 : vector<1x2x8x8x4xf32> to vector<2x8x8x4xf32>
    %c0_8 = arith.constant 0 : index
    %c1 = arith.constant 1 : index
    %c1_9 = arith.constant 1 : index
    %c0_10 = arith.constant 0 : index
    %4 = vector.load %arg5[%c0_8, %c1, %c1_9, %c0_10] : memref<2x10x10x4xf32, #tpu.memory_space<vmem>>, vector<2x8x8x4xf32>
    tpu.vector_store %arg5[%c0_8, %c1, %c1_9, %c0_10], %3 {strides = array<i32>} : memref<2x10x10x4xf32, #tpu.memory_space<vmem>>, vector<2x8x8x4xf32>,
    %c0_11 = arith.constant 0 : index
    %c0_12 = arith.constant 0 : index
    %c0_13 = arith.constant 0 : index
    %c0_14 = arith.constant 0 : index
    %5 = vector.load %arg5[%c0_11, %c0_12, %c0_13, %c0_14] : memref<2x10x10x4xf32, #tpu.memory_space<vmem>>, vector<2x10x10x4xf32>
    %6 = vector.extract_strided_slice %5 {offsets = [0, 0, 0, 0], sizes = [2, 8, 8, 4], strides = [1, 1, 1, 1]} : vector<2x10x10x4xf32> to vector<2x8x8x4xf32>
    %7 = vector.shape_cast %6 : vector<2x8x8x4xf32> to vector<128x4xf32>
    %8 = vector.extract_strided_slice %5 {offsets = [0, 0, 1, 0], sizes = [2, 8, 8, 4], strides = [1, 1, 1, 1]} : vector<2x10x10x4xf32> to vector<2x8x8x4xf32>
    %9 = vector.shape_cast %8 : vector<2x8x8x4xf32> to vector<128x4xf32>
    %10 = vector.extract_strided_slice %5 {offsets = [0, 0, 2, 0], sizes = [2, 8, 8, 4], strides = [1, 1, 1, 1]} : vector<2x10x10x4xf32> to vector<2x8x8x4xf32>
    %11 = vector.shape_cast %10 : vector<2x8x8x4xf32> to vector<128x4xf32>
    %12 = vector.extract_strided_slice %5 {offsets = [0, 1, 0, 0], sizes = [2, 8, 8, 4], strides = [1, 1, 1, 1]} : vector<2x10x10x4xf32> to vector<2x8x8x4xf32>
    %13 = vector.shape_cast %12 : vector<2x8x8x4xf32> to vector<128x4xf32>
    %14 = vector.extract_strided_slice %5 {offsets = [0, 1, 1, 0], sizes = [2, 8, 8, 4], strides = [1, 1, 1, 1]} : vector<2x10x10x4xf32> to vector<2x8x8x4xf32>
    %15 = vector.shape_cast %14 : vector<2x8x8x4xf32> to vector<128x4xf32>
    %16 = vector.extract_strided_slice %5 {offsets = [0, 1, 2, 0], sizes = [2, 8, 8, 4], strides = [1, 1, 1, 1]} : vector<2x10x10x4xf32> to vector<2x8x8x4xf32>
    %17 = vector.shape_cast %16 : vector<2x8x8x4xf32> to vector<128x4xf32>
    %18 = vector.extract_strided_slice %5 {offsets = [0, 2, 0, 0], sizes = [2, 8, 8, 4], strides = [1, 1, 1, 1]} : vector<2x10x10x4xf32> to vector<2x8x8x4xf32>
    %19 = vector.shape_cast %18 : vector<2x8x8x4xf32> to vector<128x4xf32>
    %20 = vector.extract_strided_slice %5 {offsets = [0, 2, 1, 0], sizes = [2, 8, 8, 4], strides = [1, 1, 1, 1]} : vector<2x10x10x4xf32> to vector<2x8x8x4xf32>
    %21 = vector.shape_cast %20 : vector<2x8x8x4xf32> to vector<128x4xf32>
    %22 = vector.extract_strided_slice %5 {offsets = [0, 2, 2, 0], sizes = [2, 8, 8, 4], strides = [1, 1, 1, 1]} : vector<2x10x10x4xf32> to vector<2x8x8x4xf32>
    %23 = vector.shape_cast %22 : vector<2x8x8x4xf32> to vector<128x4xf32>
    %24 = tpu.concatenate %7, %9, %11, %13, %15, %17, %19, %21, %23 in 1 : vector<128x4xf32>, vector<128x4xf32>, vector<128x4xf32>, vector<128x4xf32>, vector<128x4xf32>, vector<128x4xf32>, vector<128x4xf32>, vector<128x4xf32>, vector<128x4xf32> -> vector<128x36xf32>
    %c0_15 = arith.constant 0 : index
    %c0_16 = arith.constant 0 : index
    %25 = vector.load %arg2[%c0_15, %c0_16] : memref<36x128xf32, #tpu.memory_space<vmem>>, vector<36x128xf32>
    %cst_17 = arith.constant dense<0.000000e+00> : vector<128x128xf32>
    %26 = tpu.matmul %24, %25, %cst_17 {dimension_numbers = #tpu.dot_dimension_numbers<[1], [0], [0], [1], [0, 0, 1, 1], [], []>} : vector<128x36xf32>, vector<36x128xf32>, vector<128x128xf32> -> vector<128x128xf32>
    %c0_18 = arith.constant 0 : index
    %c0_19 = arith.constant 0 : index
    %27 = vector.load %arg3[%c0_18, %c0_19] : memref<1x128xf32, #tpu.memory_space<vmem>>, vector<1x128xf32>
    %28 = vector.broadcast %27 : vector<1x128xf32> to vector<128x128xf32>
    %29 = arith.addf %26, %28 : vector<128x128xf32>
    %c0_20 = arith.constant 0 : index
    %c0_21 = arith.constant 0 : index
    %c0_22 = arith.constant 0 : index
    %30 = vector.load %arg4[%c0_20, %c0_21, %c0_22] : memref<1x128x128xf32, #tpu.memory_space<vmem>>, vector<1x128x128xf32>
    %31 = vector.shape_cast %30 : vector<1x128x128xf32> to vector<128x128xf32>
    %32 = vector.shape_cast %29 : vector<128x128xf32> to vector<1x128x128xf32>
    tpu.vector_store %arg4[%c0_20, %c0_21, %c0_22], %32 {strides = array<i32>} : memref<1x128x128xf32, #tpu.memory_space<vmem>>, vector<1x128x128xf32>,
    return
  }
  func.func @transform_0(%arg0: i32) -> (i32, i32, i32, i32, i32) {
    %c0_i32 = arith.constant 0 : i32
    %c0_i32_0 = arith.constant 0 : i32
    %c0_i32_1 = arith.constant 0 : i32
    %c0_i32_2 = arith.constant 0 : i32
    %c0_i32_3 = arith.constant 0 : i32
    return %arg0, %c0_i32, %c0_i32_0, %c0_i32_1, %c0_i32_2 : i32, i32, i32, i32, i32
  }
  func.func @transform_1(%arg0: i32) -> (i32, i32) {
    %c0_i32 = arith.constant 0 : i32
    %c0_i32_0 = arith.constant 0 : i32
    %c0_i32_1 = arith.constant 0 : i32
    return %c0_i32, %c0_i32_0 : i32, i32
  }
  func.func @transform_2(%arg0: i32) -> (i32, i32) {
    %c0_i32 = arith.constant 0 : i32
    %c0_i32_0 = arith.constant 0 : i32
    %c0_i32_1 = arith.constant 0 : i32
    return %c0_i32, %c0_i32_0 : i32, i32
  }
  func.func @transform_3(%arg0: i32) -> (i32, i32, i32) {
    %c0_i32 = arith.constant 0 : i32
    %c0_i32_0 = arith.constant 0 : i32
    %c0_i32_1 = arith.constant 0 : i32
    return %arg0, %c0_i32, %c0_i32_0 : i32, i32, i32
  }
}

module attributes {stable_mosaic.version = 11 : i64} {
  func.func @_gru_step_kernel(%arg0: i32, %arg1: memref<1x128x128xf32, #tpu.memory_space<vmem>>, %arg2: memref<288x128xf32, #tpu.memory_space<vmem>>, %arg3: memref<1x32xf32, #tpu.memory_space<vmem>>, %arg4: memref<1x2x8x8x32xf32, #tpu.memory_space<vmem>>, %arg5: memref<2x10x10x32xf32, #tpu.memory_space<vmem>>) attributes {dimension_semantics = [#tpu.dimension_semantics<arbitrary>], iteration_bounds = array<i64: 8>, scalar_prefetch = 0 : i64, scratch_operands = 1 : i64, tpu.core_type = #tpu.core_type<tc>, window_params = [{transform_indices = @transform_0, window_bounds = array<i64: 1, 128, 128>}, {pipeline_mode = #tpu.pipeline_mode<synchronous>, transform_indices = @transform_1, window_bounds = array<i64: 288, 128>}, {pipeline_mode = #tpu.pipeline_mode<synchronous>, transform_indices = @transform_2, window_bounds = array<i64: 1, 32>}, {transform_indices = @transform_3, window_bounds = array<i64: 1, 2, 8, 8, 32>}]} {
    %c0_i32 = arith.constant 0 : i32
    %0 = arith.cmpi eq, %arg0, %c0_i32 : i32
    %1 = arith.extui %0 : i1 to i32
    %c0_i32_0 = arith.constant 0 : i32
    %2 = arith.cmpi ne, %1, %c0_i32_0 : i32
    scf.if %2 {
      %cst_22 = arith.constant 0.000000e+00 : f32
      %61 = vector.broadcast %cst_22 : f32 to vector<2x10x10x32xf32>
      %c0_23 = arith.constant 0 : index
      %c0_24 = arith.constant 0 : index
      %c0_25 = arith.constant 0 : index
      %c0_26 = arith.constant 0 : index
      %62 = vector.load %arg5[%c0_23, %c0_24, %c0_25, %c0_26] : memref<2x10x10x32xf32, #tpu.memory_space<vmem>>, vector<2x10x10x32xf32>
      tpu.vector_store %arg5[%c0_23, %c0_24, %c0_25, %c0_26], %61 {strides = array<i32>} : memref<2x10x10x32xf32, #tpu.memory_space<vmem>>, vector<2x10x10x32xf32>,
    } else {
    }
    %c0 = arith.constant 0 : index
    %c0_1 = arith.constant 0 : index
    %c0_2 = arith.constant 0 : index
    %c0_3 = arith.constant 0 : index
    %3 = vector.load %arg5[%c0, %c0_1, %c0_2, %c0_3] : memref<2x10x10x32xf32, #tpu.memory_space<vmem>>, vector<2x10x10x32xf32>
    %4 = vector.extract_strided_slice %3 {offsets = [0, 0, 0, 0], sizes = [2, 8, 8, 32], strides = [1, 1, 1, 1]} : vector<2x10x10x32xf32> to vector<2x8x8x32xf32>
    %5 = vector.shape_cast %4 : vector<2x8x8x32xf32> to vector<128x32xf32>
    %6 = vector.extract_strided_slice %3 {offsets = [0, 0, 1, 0], sizes = [2, 8, 8, 32], strides = [1, 1, 1, 1]} : vector<2x10x10x32xf32> to vector<2x8x8x32xf32>
    %7 = vector.shape_cast %6 : vector<2x8x8x32xf32> to vector<128x32xf32>
    %8 = vector.extract_strided_slice %3 {offsets = [0, 0, 2, 0], sizes = [2, 8, 8, 32], strides = [1, 1, 1, 1]} : vector<2x10x10x32xf32> to vector<2x8x8x32xf32>
    %9 = vector.shape_cast %8 : vector<2x8x8x32xf32> to vector<128x32xf32>
    %10 = vector.extract_strided_slice %3 {offsets = [0, 1, 0, 0], sizes = [2, 8, 8, 32], strides = [1, 1, 1, 1]} : vector<2x10x10x32xf32> to vector<2x8x8x32xf32>
    %11 = vector.shape_cast %10 : vector<2x8x8x32xf32> to vector<128x32xf32>
    %12 = vector.extract_strided_slice %3 {offsets = [0, 1, 1, 0], sizes = [2, 8, 8, 32], strides = [1, 1, 1, 1]} : vector<2x10x10x32xf32> to vector<2x8x8x32xf32>
    %13 = vector.shape_cast %12 : vector<2x8x8x32xf32> to vector<128x32xf32>
    %14 = vector.extract_strided_slice %3 {offsets = [0, 1, 2, 0], sizes = [2, 8, 8, 32], strides = [1, 1, 1, 1]} : vector<2x10x10x32xf32> to vector<2x8x8x32xf32>
    %15 = vector.shape_cast %14 : vector<2x8x8x32xf32> to vector<128x32xf32>
    %16 = vector.extract_strided_slice %3 {offsets = [0, 2, 0, 0], sizes = [2, 8, 8, 32], strides = [1, 1, 1, 1]} : vector<2x10x10x32xf32> to vector<2x8x8x32xf32>
    %17 = vector.shape_cast %16 : vector<2x8x8x32xf32> to vector<128x32xf32>
    %18 = vector.extract_strided_slice %3 {offsets = [0, 2, 1, 0], sizes = [2, 8, 8, 32], strides = [1, 1, 1, 1]} : vector<2x10x10x32xf32> to vector<2x8x8x32xf32>
    %19 = vector.shape_cast %18 : vector<2x8x8x32xf32> to vector<128x32xf32>
    %20 = vector.extract_strided_slice %3 {offsets = [0, 2, 2, 0], sizes = [2, 8, 8, 32], strides = [1, 1, 1, 1]} : vector<2x10x10x32xf32> to vector<2x8x8x32xf32>
    %21 = vector.shape_cast %20 : vector<2x8x8x32xf32> to vector<128x32xf32>
    %22 = tpu.concatenate %5, %7, %9, %11, %13, %15, %17, %19, %21 in 1 : vector<128x32xf32>, vector<128x32xf32>, vector<128x32xf32>, vector<128x32xf32>, vector<128x32xf32>, vector<128x32xf32>, vector<128x32xf32>, vector<128x32xf32>, vector<128x32xf32> -> vector<128x288xf32>
    %c0_4 = arith.constant 0 : index
    %c0_5 = arith.constant 0 : index
    %23 = vector.load %arg2[%c0_4, %c0_5] : memref<288x128xf32, #tpu.memory_space<vmem>>, vector<288x128xf32>
    %cst = arith.constant dense<0.000000e+00> : vector<128x128xf32>
    %24 = tpu.matmul %22, %23, %cst {dimension_numbers = #tpu.dot_dimension_numbers<[1], [0], [0], [1], [0, 0, 1, 1], [], []>} : vector<128x288xf32>, vector<288x128xf32>, vector<128x128xf32> -> vector<128x128xf32>
    %c0_6 = arith.constant 0 : index
    %c0_7 = arith.constant 0 : index
    %c0_8 = arith.constant 0 : index
    %25 = vector.load %arg1[%c0_6, %c0_7, %c0_8] : memref<1x128x128xf32, #tpu.memory_space<vmem>>, vector<1x128x128xf32>
    %26 = vector.shape_cast %25 : vector<1x128x128xf32> to vector<128x128xf32>
    %27 = vector.extract_strided_slice %26 {offsets = [0, 0], sizes = [128, 32], strides = [1, 1]} : vector<128x128xf32> to vector<128x32xf32>
    %28 = vector.extract_strided_slice %24 {offsets = [0, 0], sizes = [128, 32], strides = [1, 1]} : vector<128x128xf32> to vector<128x32xf32>
    %29 = arith.addf %27, %28 : vector<128x32xf32>
    %30 = arith.negf %29 : vector<128x32xf32>
    %31 = math.exp %30 : vector<128x32xf32>
    %cst_9 = arith.constant 1.000000e+00 : f32
    %32 = vector.broadcast %cst_9 : f32 to vector<128x32xf32>
    %33 = arith.addf %32, %31 : vector<128x32xf32>
    %34 = arith.divf %32, %33 : vector<128x32xf32>
    %35 = vector.extract_strided_slice %26 {offsets = [0, 32], sizes = [128, 32], strides = [1, 1]} : vector<128x128xf32> to vector<128x32xf32>
    %36 = vector.extract_strided_slice %24 {offsets = [0, 32], sizes = [128, 32], strides = [1, 1]} : vector<128x128xf32> to vector<128x32xf32>
    %37 = arith.addf %35, %36 : vector<128x32xf32>
    %38 = arith.negf %37 : vector<128x32xf32>
    %39 = math.exp %38 : vector<128x32xf32>
    %cst_10 = arith.constant 1.000000e+00 : f32
    %40 = vector.broadcast %cst_10 : f32 to vector<128x32xf32>
    %41 = arith.addf %40, %39 : vector<128x32xf32>
    %42 = arith.divf %40, %41 : vector<128x32xf32>
    %43 = vector.extract_strided_slice %26 {offsets = [0, 64], sizes = [128, 32], strides = [1, 1]} : vector<128x128xf32> to vector<128x32xf32>
    %44 = vector.extract_strided_slice %24 {offsets = [0, 64], sizes = [128, 32], strides = [1, 1]} : vector<128x128xf32> to vector<128x32xf32>
    %c0_11 = arith.constant 0 : index
    %c0_12 = arith.constant 0 : index
    %45 = vector.load %arg3[%c0_11, %c0_12] : memref<1x32xf32, #tpu.memory_space<vmem>>, vector<1x32xf32>
    %46 = vector.broadcast %45 : vector<1x32xf32> to vector<128x32xf32>
    %47 = arith.addf %44, %46 : vector<128x32xf32>
    %48 = arith.mulf %42, %47 : vector<128x32xf32>
    %49 = arith.addf %43, %48 : vector<128x32xf32>
    %50 = math.tanh %49 : vector<128x32xf32>
    %cst_13 = arith.constant 1.000000e+00 : f32
    %51 = vector.broadcast %cst_13 : f32 to vector<128x32xf32>
    %52 = arith.subf %51, %34 : vector<128x32xf32>
    %53 = arith.mulf %52, %50 : vector<128x32xf32>
    %54 = arith.mulf %34, %13 : vector<128x32xf32>
    %55 = arith.addf %53, %54 : vector<128x32xf32>
    %56 = vector.shape_cast %55 : vector<128x32xf32> to vector<2x8x8x32xf32>
    %c0_14 = arith.constant 0 : index
    %c1 = arith.constant 1 : index
    %c1_15 = arith.constant 1 : index
    %c0_16 = arith.constant 0 : index
    %57 = vector.load %arg5[%c0_14, %c1, %c1_15, %c0_16] : memref<2x10x10x32xf32, #tpu.memory_space<vmem>>, vector<2x8x8x32xf32>
    tpu.vector_store %arg5[%c0_14, %c1, %c1_15, %c0_16], %56 {strides = array<i32>} : memref<2x10x10x32xf32, #tpu.memory_space<vmem>>, vector<2x8x8x32xf32>,
    %c0_17 = arith.constant 0 : index
    %c0_18 = arith.constant 0 : index
    %c0_19 = arith.constant 0 : index
    %c0_20 = arith.constant 0 : index
    %c0_21 = arith.constant 0 : index
    %58 = vector.load %arg4[%c0_17, %c0_18, %c0_19, %c0_20, %c0_21] : memref<1x2x8x8x32xf32, #tpu.memory_space<vmem>>, vector<1x2x8x8x32xf32>
    %59 = vector.shape_cast %58 : vector<1x2x8x8x32xf32> to vector<2x8x8x32xf32>
    %60 = vector.shape_cast %56 : vector<2x8x8x32xf32> to vector<1x2x8x8x32xf32>
    tpu.vector_store %arg4[%c0_17, %c0_18, %c0_19, %c0_20, %c0_21], %60 {strides = array<i32>} : memref<1x2x8x8x32xf32, #tpu.memory_space<vmem>>, vector<1x2x8x8x32xf32>,
    return
  }
  func.func @transform_0(%arg0: i32) -> (i32, i32, i32) {
    %c0_i32 = arith.constant 0 : i32
    %c0_i32_0 = arith.constant 0 : i32
    %c0_i32_1 = arith.constant 0 : i32
    return %arg0, %c0_i32, %c0_i32_0 : i32, i32, i32
  }
  func.func @transform_1(%arg0: i32) -> (i32, i32) {
    %c0_i32 = arith.constant 0 : i32
    %c0_i32_0 = arith.constant 0 : i32
    %c0_i32_1 = arith.constant 0 : i32
    return %c0_i32, %c0_i32_0 : i32, i32
  }
  func.func @transform_2(%arg0: i32) -> (i32, i32) {
    %c0_i32 = arith.constant 0 : i32
    %c0_i32_0 = arith.constant 0 : i32
    %c0_i32_1 = arith.constant 0 : i32
    return %c0_i32, %c0_i32_0 : i32, i32
  }
  func.func @transform_3(%arg0: i32) -> (i32, i32, i32, i32, i32) {
    %c0_i32 = arith.constant 0 : i32
    %c0_i32_0 = arith.constant 0 : i32
    %c0_i32_1 = arith.constant 0 : i32
    %c0_i32_2 = arith.constant 0 : i32
    %c0_i32_3 = arith.constant 0 : i32
    return %arg0, %c0_i32, %c0_i32_0, %c0_i32_1, %c0_i32_2 : i32, i32, i32, i32, i32
  }
}

module attributes {stable_mosaic.version = 11 : i64} {
  func.func @_xconv_kernel(%arg0: i32, %arg1: memref<1x2x8x8x32xf32, #tpu.memory_space<vmem>>, %arg2: memref<288x128xf32, #tpu.memory_space<vmem>>, %arg3: memref<1x128xf32, #tpu.memory_space<vmem>>, %arg4: memref<1x128x128xf32, #tpu.memory_space<vmem>>, %arg5: memref<2x10x10x32xf32, #tpu.memory_space<vmem>>) attributes {dimension_semantics = [#tpu.dimension_semantics<parallel>], iteration_bounds = array<i64: 8>, scalar_prefetch = 0 : i64, scratch_operands = 1 : i64, tpu.core_type = #tpu.core_type<tc>, window_params = [{transform_indices = @transform_0, window_bounds = array<i64: 1, 2, 8, 8, 32>}, {pipeline_mode = #tpu.pipeline_mode<synchronous>, transform_indices = @transform_1, window_bounds = array<i64: 288, 128>}, {pipeline_mode = #tpu.pipeline_mode<synchronous>, transform_indices = @transform_2, window_bounds = array<i64: 1, 128>}, {transform_indices = @transform_3, window_bounds = array<i64: 1, 128, 128>}]} {
    %cst = arith.constant 0.000000e+00 : f32
    %0 = vector.broadcast %cst : f32 to vector<2x10x10x32xf32>
    %c0 = arith.constant 0 : index
    %c0_0 = arith.constant 0 : index
    %c0_1 = arith.constant 0 : index
    %c0_2 = arith.constant 0 : index
    %1 = vector.load %arg5[%c0, %c0_0, %c0_1, %c0_2] : memref<2x10x10x32xf32, #tpu.memory_space<vmem>>, vector<2x10x10x32xf32>
    tpu.vector_store %arg5[%c0, %c0_0, %c0_1, %c0_2], %0 {strides = array<i32>} : memref<2x10x10x32xf32, #tpu.memory_space<vmem>>, vector<2x10x10x32xf32>,
    %c0_3 = arith.constant 0 : index
    %c0_4 = arith.constant 0 : index
    %c0_5 = arith.constant 0 : index
    %c0_6 = arith.constant 0 : index
    %c0_7 = arith.constant 0 : index
    %2 = vector.load %arg1[%c0_3, %c0_4, %c0_5, %c0_6, %c0_7] : memref<1x2x8x8x32xf32, #tpu.memory_space<vmem>>, vector<1x2x8x8x32xf32>
    %3 = vector.shape_cast %2 : vector<1x2x8x8x32xf32> to vector<2x8x8x32xf32>
    %c0_8 = arith.constant 0 : index
    %c1 = arith.constant 1 : index
    %c1_9 = arith.constant 1 : index
    %c0_10 = arith.constant 0 : index
    %4 = vector.load %arg5[%c0_8, %c1, %c1_9, %c0_10] : memref<2x10x10x32xf32, #tpu.memory_space<vmem>>, vector<2x8x8x32xf32>
    tpu.vector_store %arg5[%c0_8, %c1, %c1_9, %c0_10], %3 {strides = array<i32>} : memref<2x10x10x32xf32, #tpu.memory_space<vmem>>, vector<2x8x8x32xf32>,
    %c0_11 = arith.constant 0 : index
    %c0_12 = arith.constant 0 : index
    %c0_13 = arith.constant 0 : index
    %c0_14 = arith.constant 0 : index
    %5 = vector.load %arg5[%c0_11, %c0_12, %c0_13, %c0_14] : memref<2x10x10x32xf32, #tpu.memory_space<vmem>>, vector<2x10x10x32xf32>
    %6 = vector.extract_strided_slice %5 {offsets = [0, 0, 0, 0], sizes = [2, 8, 8, 32], strides = [1, 1, 1, 1]} : vector<2x10x10x32xf32> to vector<2x8x8x32xf32>
    %7 = vector.shape_cast %6 : vector<2x8x8x32xf32> to vector<128x32xf32>
    %8 = vector.extract_strided_slice %5 {offsets = [0, 0, 1, 0], sizes = [2, 8, 8, 32], strides = [1, 1, 1, 1]} : vector<2x10x10x32xf32> to vector<2x8x8x32xf32>
    %9 = vector.shape_cast %8 : vector<2x8x8x32xf32> to vector<128x32xf32>
    %10 = vector.extract_strided_slice %5 {offsets = [0, 0, 2, 0], sizes = [2, 8, 8, 32], strides = [1, 1, 1, 1]} : vector<2x10x10x32xf32> to vector<2x8x8x32xf32>
    %11 = vector.shape_cast %10 : vector<2x8x8x32xf32> to vector<128x32xf32>
    %12 = vector.extract_strided_slice %5 {offsets = [0, 1, 0, 0], sizes = [2, 8, 8, 32], strides = [1, 1, 1, 1]} : vector<2x10x10x32xf32> to vector<2x8x8x32xf32>
    %13 = vector.shape_cast %12 : vector<2x8x8x32xf32> to vector<128x32xf32>
    %14 = vector.extract_strided_slice %5 {offsets = [0, 1, 1, 0], sizes = [2, 8, 8, 32], strides = [1, 1, 1, 1]} : vector<2x10x10x32xf32> to vector<2x8x8x32xf32>
    %15 = vector.shape_cast %14 : vector<2x8x8x32xf32> to vector<128x32xf32>
    %16 = vector.extract_strided_slice %5 {offsets = [0, 1, 2, 0], sizes = [2, 8, 8, 32], strides = [1, 1, 1, 1]} : vector<2x10x10x32xf32> to vector<2x8x8x32xf32>
    %17 = vector.shape_cast %16 : vector<2x8x8x32xf32> to vector<128x32xf32>
    %18 = vector.extract_strided_slice %5 {offsets = [0, 2, 0, 0], sizes = [2, 8, 8, 32], strides = [1, 1, 1, 1]} : vector<2x10x10x32xf32> to vector<2x8x8x32xf32>
    %19 = vector.shape_cast %18 : vector<2x8x8x32xf32> to vector<128x32xf32>
    %20 = vector.extract_strided_slice %5 {offsets = [0, 2, 1, 0], sizes = [2, 8, 8, 32], strides = [1, 1, 1, 1]} : vector<2x10x10x32xf32> to vector<2x8x8x32xf32>
    %21 = vector.shape_cast %20 : vector<2x8x8x32xf32> to vector<128x32xf32>
    %22 = vector.extract_strided_slice %5 {offsets = [0, 2, 2, 0], sizes = [2, 8, 8, 32], strides = [1, 1, 1, 1]} : vector<2x10x10x32xf32> to vector<2x8x8x32xf32>
    %23 = vector.shape_cast %22 : vector<2x8x8x32xf32> to vector<128x32xf32>
    %24 = tpu.concatenate %7, %9, %11, %13, %15, %17, %19, %21, %23 in 1 : vector<128x32xf32>, vector<128x32xf32>, vector<128x32xf32>, vector<128x32xf32>, vector<128x32xf32>, vector<128x32xf32>, vector<128x32xf32>, vector<128x32xf32>, vector<128x32xf32> -> vector<128x288xf32>
    %c0_15 = arith.constant 0 : index
    %c0_16 = arith.constant 0 : index
    %25 = vector.load %arg2[%c0_15, %c0_16] : memref<288x128xf32, #tpu.memory_space<vmem>>, vector<288x128xf32>
    %cst_17 = arith.constant dense<0.000000e+00> : vector<128x128xf32>
    %26 = tpu.matmul %24, %25, %cst_17 {dimension_numbers = #tpu.dot_dimension_numbers<[1], [0], [0], [1], [0, 0, 1, 1], [], []>} : vector<128x288xf32>, vector<288x128xf32>, vector<128x128xf32> -> vector<128x128xf32>
    %c0_18 = arith.constant 0 : index
    %c0_19 = arith.constant 0 : index
    %27 = vector.load %arg3[%c0_18, %c0_19] : memref<1x128xf32, #tpu.memory_space<vmem>>, vector<1x128xf32>
    %28 = vector.broadcast %27 : vector<1x128xf32> to vector<128x128xf32>
    %29 = arith.addf %26, %28 : vector<128x128xf32>
    %c0_20 = arith.constant 0 : index
    %c0_21 = arith.constant 0 : index
    %c0_22 = arith.constant 0 : index
    %30 = vector.load %arg4[%c0_20, %c0_21, %c0_22] : memref<1x128x128xf32, #tpu.memory_space<vmem>>, vector<1x128x128xf32>
    %31 = vector.shape_cast %30 : vector<1x128x128xf32> to vector<128x128xf32>
    %32 = vector.shape_cast %29 : vector<128x128xf32> to vector<1x128x128xf32>
    tpu.vector_store %arg4[%c0_20, %c0_21, %c0_22], %32 {strides = array<i32>} : memref<1x128x128xf32, #tpu.memory_space<vmem>>, vector<1x128x128xf32>,
    return
  }
  func.func @transform_0(%arg0: i32) -> (i32, i32, i32, i32, i32) {
    %c0_i32 = arith.constant 0 : i32
    %c0_i32_0 = arith.constant 0 : i32
    %c0_i32_1 = arith.constant 0 : i32
    %c0_i32_2 = arith.constant 0 : i32
    %c0_i32_3 = arith.constant 0 : i32
    return %arg0, %c0_i32, %c0_i32_0, %c0_i32_1, %c0_i32_2 : i32, i32, i32, i32, i32
  }
  func.func @transform_1(%arg0: i32) -> (i32, i32) {
    %c0_i32 = arith.constant 0 : i32
    %c0_i32_0 = arith.constant 0 : i32
    %c0_i32_1 = arith.constant 0 : i32
    return %c0_i32, %c0_i32_0 : i32, i32
  }
  func.func @transform_2(%arg0: i32) -> (i32, i32) {
    %c0_i32 = arith.constant 0 : i32
    %c0_i32_0 = arith.constant 0 : i32
    %c0_i32_1 = arith.constant 0 : i32
    return %c0_i32, %c0_i32_0 : i32, i32
  }
  func.func @transform_3(%arg0: i32) -> (i32, i32, i32) {
    %c0_i32 = arith.constant 0 : i32
    %c0_i32_0 = arith.constant 0 : i32
    %c0_i32_1 = arith.constant 0 : i32
    return %arg0, %c0_i32, %c0_i32_0 : i32, i32, i32
  }
}

</mosaic_0001>

<llo_original>
// kernel: convgru_forward.6
$region0: #{convgru_forward.6}
  #allocation0 [shape = 'u32[]', space=smem, size = 0x4, offset = 0x4, fixed_abs, tag = 'smem constant byte address 0x4 - core index']
  #allocation1 [shape = 'u32[72,128]{1,0:T(1,128)}', space=vmem, size = 0x9000, scoped, tag = 'internal scratch']
  #allocation2 [shape = 'f32[2,10,10,32]{3,2,1,0:T(8,128)}', space=vmem, size = 0x28000, scoped, tag = 'scratch operand']
  %s0 = inlined_call_operand.vmem [shape: f32[8,2,8,8,32], index: 0, kind: input, shape index: {}]
  %s1 = inlined_call_operand.vmem [shape: f32[288,128], index: 1, kind: input, shape index: {}]
  %s2 = inlined_call_operand.vmem [shape: f32[1,128], index: 2, kind: input, shape index: {}]
  %s3 = inlined_call_operand.vmem [shape: f32[8,128,128], index: 3, kind: output, shape index: {}]
  %s4 = sld [smem:[#allocation0]]
  $region45: #{convgru_forward.6} parent=0
    _
  %s6 = ssub.s32 1, %s4
  %s7 = scalar_select 0, %s6, %s4
  loop: start=0, step=1, limit=10
  $region2: #{convgru_forward.6} parent=0 // loop_pre_header
    _
  $region3: #{convgru_forward.6} parent=0 // loop_header
    %s9 = sphi 0, %s13
    %p10 = scmp.ge.s32.totalorder %s9, 10
    %s19 = sphi 0, %s21
    %s22 = sphi 0, %s19
    %s23 = sphi 0, %s22
    %s39 = sphi 0, %s23
    %s43 = sphi 0, %s43
    %s45 = sphi 0, %s43
    %s46 = sphi 0, %s45
    %s60 = sphi 0, %s46
    %s64 = sphi 0, %s64
    %s66 = sphi 0, %s64
    %s67 = sphi 0, %s66
    %s81 = sphi 0, %s67
    %s87 = sphi 0, %s89
    %s90 = sphi 0, %s87
    %s91 = sphi 0, %s90
    %s107 = sphi 0, %s91
  $region4: #{convgru_forward.6} parent=0 // loop_header_branch
    %12 = sbr.rel (%p10) target = $region8
  $region5: #{convgru_forward.6} parent=0 // loop_body
    %s14 = ssub.s32 %s9, 1
    %s15 = ssub.s32 %s9, 2
    %s16 = sadd.s32 %s9, 1
    %s17 = ssub.s32 %s9, %s16
    %p18 = scmp.eq.s32.totalorder %s17, 0
    %s20 = sadd.s32 %s19, 1
    %s21 = scalar_select %p18, %s19, %s20
    %p24 = pneg %p18
    %p25 = scmp.eq.s32.totalorder %s9, 7
    %p26 = por %p24, %p25
    %p27 = scmp.ne.s32.totalorder %s19, %s22
    %p28 = scmp.eq.s32.totalorder %s9, 0
    %p29 = por %p27, %p28
    %p30 = scmp.ne.s32.totalorder %s19, %s22
    %p31 = scmp.eq.s32.totalorder %s14, 7
    %p32 = por %p30, %p31
    %p33 = scmp.ne.s32.totalorder %s22, %s23
    %p34 = scmp.eq.s32.totalorder %s14, 0
    %p35 = por %p33, %p34
    %p36 = scmp.ne.s32.totalorder %s22, %s23
    %p37 = scmp.eq.s32.totalorder %s15, 7
    %p38 = por %p36, %p37
    %p40 = scmp.ne.s32.totalorder %s23, %s39
    %p41 = scmp.eq.s32.totalorder %s15, 0
    %p42 = por %p40, %p41
    %s44 = sadd.s32 %s43, 1
    %p47 = scmp.eq.s32.totalorder %s9, 7
    %p48 = scmp.ne.s32.totalorder %s43, %s45
    %p49 = scmp.eq.s32.totalorder %s9, 0
    %p50 = por %p48, %p49
    %p51 = scmp.ne.s32.totalorder %s43, %s45
    %p52 = scmp.eq.s32.totalorder %s14, 7
    %p53 = por %p51, %p52
    %p54 = scmp.ne.s32.totalorder %s45, %s46
    %p55 = scmp.eq.s32.totalorder %s14, 0
    %p56 = por %p54, %p55
    %p57 = scmp.ne.s32.totalorder %s45, %s46
    %p58 = scmp.eq.s32.totalorder %s15, 7
    %p59 = por %p57, %p58
    %p61 = scmp.ne.s32.totalorder %s46, %s60
    %p62 = scmp.eq.s32.totalorder %s15, 0
    %p63 = por %p61, %p62
    %s65 = sadd.s32 %s64, 1
    %p68 = scmp.eq.s32.totalorder %s9, 7
    %p69 = scmp.ne.s32.totalorder %s64, %s66
    %p70 = scmp.eq.s32.totalorder %s9, 0
    %p71 = por %p69, %p70
    %p72 = scmp.ne.s32.totalorder %s64, %s66
    %p73 = scmp.eq.s32.totalorder %s14, 7
    %p74 = por %p72, %p73
    %p75 = scmp.ne.s32.totalorder %s66, %s67
    %p76 = scmp.eq.s32.totalorder %s14, 0
    %p77 = por %p75, %p76
    %p78 = scmp.ne.s32.totalorder %s66, %s67
    %p79 = scmp.eq.s32.totalorder %s15, 7
    %p80 = por %p78, %p79
    %p82 = scmp.ne.s32.totalorder %s67, %s81
    %p83 = scmp.eq.s32.totalorder %s15, 0
    %p84 = por %p82, %p83
    %s85 = ssub.s32 %s9, %s16
    %p86 = scmp.eq.s32.totalorder %s85, 0
    %s88 = sadd.s32 %s87, 1
    %s89 = scalar_select %p86, %s87, %s88
    %p92 = pneg %p86
    %p93 = scmp.eq.s32.totalorder %s9, 7
    %p94 = por %p92, %p93
    %p95 = scmp.ne.s32.totalorder %s87, %s90
    %p96 = scmp.eq.s32.totalorder %s9, 0
    %p97 = por %p95, %p96
    %p98 = scmp.ne.s32.totalorder %s87, %s90
    %p99 = scmp.eq.s32.totalorder %s14, 7
    %p100 = por %p98, %p99
    %p101 = scmp.ne.s32.totalorder %s90, %s91
    %p102 = scmp.eq.s32.totalorder %s14, 0
    %p103 = por %p101, %p102
    %p104 = scmp.ne.s32.totalorder %s90, %s91
    %p105 = scmp.eq.s32.totalorder %s15, 7
    %p106 = por %p104, %p105
    %p108 = scmp.ne.s32.totalorder %s91, %s107
    %p109 = scmp.eq.s32.totalorder %s15, 0
    %p110 = por %p108, %p109
    %p111 = scmp.le.s32.totalorder 1, %s9
    %p112 = scmp.lt.s32.totalorder %s9, 9
    %p113 = pnand %p111, %p112
    %p114 = pneg %p113
    // Predicated region
    $region9: #{convgru_forward.6} parent=5 // pred_check
      _
    $region10: #{convgru_forward.6} parent=5 // pred_check_branch
      %116 = sbr.rel (%p113) target = $region12
    $region11: #{convgru_forward.6} parent=5 // pred_region
      %s117 = ssub.s32 %s9, 1
      // Predicated region
      $region13: #{convgru_forward.6} parent=11 // pred_check
        %p118 = pneg %p56
      $region14: #{convgru_forward.6} parent=11 // pred_check_branch
        %120 = sbr.rel (%p118) target = $region16
      $region15: #{convgru_forward.6} parent=11 // pred_region
        _
      $region16: #{convgru_forward.6} parent=11 // pred_fallthru
        _
      // Predicated region
      $region17: #{convgru_forward.6} parent=11 // pred_check
        %p121 = pneg %p77
      $region18: #{convgru_forward.6} parent=11 // pred_check_branch
        %123 = sbr.rel (%p121) target = $region20
      $region19: #{convgru_forward.6} parent=11 // pred_region
        _
      $region20: #{convgru_forward.6} parent=11 // pred_fallthru
        _
    $region12: #{convgru_forward.6} parent=5 // pred_fallthru
      _
    %p124 = scmp.lt.s32.totalorder %s9, 8
    // Predicated region
    $region21: #{convgru_forward.6} parent=5 // pred_check
      %p125 = pneg %p124
    $region22: #{convgru_forward.6} parent=5 // pred_check_branch
      %127 = sbr.rel (%p125) target = $region24
    $region23: #{convgru_forward.6} parent=5 // pred_region
      // Predicated region
      $region25: #{convgru_forward.6} parent=23 // pred_check
        %p128 = pneg %p29
      $region26: #{convgru_forward.6} parent=23 // pred_check_branch
        %130 = sbr.rel (%p128) target = $region28
      $region27: #{convgru_forward.6} parent=23 // pred_region
        %p131 = scmp.lt.s32.totalorder %s9, 7
        %s132 = scalar_select %p131, %s9, 7
        %s133 = smul.addr %s132, 16
        %s134 = smul.addr %s133, 8
        %s135 = scalar_lea.vmem %s0, %s134
      $region28: #{convgru_forward.6} parent=23 // pred_fallthru
        _
    $region24: #{convgru_forward.6} parent=5 // pred_fallthru
      _
    %p136 = scmp.le.s32.totalorder 1, %s9
    %p137 = scmp.lt.s32.totalorder %s9, 9
    %p138 = pnand %p136, %p137
    %p139 = pneg %p138
    // Predicated region
    $region29: #{convgru_forward.6} parent=5 // pred_check
      _
    $region30: #{convgru_forward.6} parent=5 // pred_check_branch
      %141 = sbr.rel (%p138) target = $region32
    $region31: #{convgru_forward.6} parent=5 // pred_region
      %s142 = ssub.s32 %s9, 1
      %p143 = scmp.lt.s32.totalorder %s14, 7
      %s144 = scalar_select %p143, %s14, 7
      %s145 = smul.addr %s144, 16
      %s146 = smul.addr %s145, 8
      %s147 = scalar_lea.vmem %s0, %s146
      %p148 = pneg %p35
      %p149 = pneg %p32
      %p150 = pneg %p56
      %p151 = pneg %p53
      %p152 = pneg %p77
      %p153 = pneg %p74
      %p154 = pneg %p103
      %p155 = pneg %p100
      %p156 = scmp.lt.s32.totalorder %s14, 7
      %s157 = scalar_select %p156, %s14, 7
      %s158 = smul.addr %s157, 16
      %s159 = smul.addr %s158, 8
      %s160 = scalar_lea.vmem %s3, %s159
      %p161 = scmp.lt.s32.totalorder %s14, 7
      %s162 = scalar_select %p161, %s14, 7
      %s163 = smul.addr %s162, 16
      %s164 = smul.addr %s163, 8
      %s165 = scalar_lea.vmem %s0, %s164
      %p166 = scmp.lt.s32.totalorder %s14, 7
      %s167 = scalar_select %p166, %s14, 7
      %s168 = smul.addr %s167, 16
      %s169 = smul.addr %s168, 8
      %s170 = scalar_lea.vmem %s3, %s169
      %vm171 = vcmask 261120
      %172 = vst.msk [vmem:[#allocation2] sm:$0xff] %vm171, 0.0
      %vm173 = vcmask 254976
      %174 = vst.msk [vmem:[#allocation2 + $0x8] sm:$0x3] %vm173, 0.0
      %175 = vst.msk [vmem:[#allocation2 + $0x10] sm:$0xff] %vm171, 0.0
      %176 = vst.msk [vmem:[#allocation2 + $0x18] sm:$0x3] %vm173, 0.0
      %177 = vst.msk [vmem:[#allocation2 + $0x20] sm:$0xff] %vm171, 0.0
      %178 = vst.msk [vmem:[#allocation2 + $0x28] sm:$0x3] %vm173, 0.0
      %179 = vst.msk [vmem:[#allocation2 + $0x30] sm:$0xff] %vm171, 0.0
      %180 = vst.msk [vmem:[#allocation2 + $0x38] sm:$0x3] %vm173, 0.0
      %181 = vst.msk [vmem:[#allocation2 + $0x40] sm:$0xff] %vm171, 0.0
      %182 = vst.msk [vmem:[#allocation2 + $0x48] sm:$0x3] %vm173, 0.0
      %183 = vst.msk [vmem:[#allocation2 + $0x50] sm:$0xff] %vm171, 0.0
      %184 = vst.msk [vmem:[#allocation2 + $0x58] sm:$0x3] %vm173, 0.0
      %185 = vst.msk [vmem:[#allocation2 + $0x60] sm:$0xff] %vm171, 0.0
      %186 = vst.msk [vmem:[#allocation2 + $0x68] sm:$0x3] %vm173, 0.0
      %187 = vst.msk [vmem:[#allocation2 + $0x70] sm:$0xff] %vm171, 0.0
      %188 = vst.msk [vmem:[#allocation2 + $0x78] sm:$0x3] %vm173, 0.0
      %189 = vst.msk [vmem:[#allocation2 + $0x80] sm:$0xff] %vm171, 0.0
      %190 = vst.msk [vmem:[#allocation2 + $0x88] sm:$0x3] %vm173, 0.0
      %191 = vst.msk [vmem:[#allocation2 + $0x90] sm:$0xff] %vm171, 0.0
      %192 = vst.msk [vmem:[#allocation2 + $0x98] sm:$0x3] %vm173, 0.0
      %193 = vst.msk [vmem:[#allocation2 + $0xa0] sm:$0xff] %vm171, 0.0
      %194 = vst.msk [vmem:[#allocation2 + $0xa8] sm:$0x3] %vm173, 0.0
      %195 = vst.msk [vmem:[#allocation2 + $0xb0] sm:$0xff] %vm171, 0.0
      %196 = vst.msk [vmem:[#allocation2 + $0xb8] sm:$0x3] %vm173, 0.0
      %197 = vst.msk [vmem:[#allocation2 + $0xc0] sm:$0xff] %vm171, 0.0
      %198 = vst.msk [vmem:[#allocation2 + $0xc8] sm:$0x3] %vm173, 0.0
      %199 = vst.msk [vmem:[#allocation2 + $0xd0] sm:$0xff] %vm171, 0.0
      %200 = vst.msk [vmem:[#allocation2 + $0xd8] sm:$0x3] %vm173, 0.0
      %201 = vst.msk [vmem:[#allocation2 + $0xe0] sm:$0xff] %vm171, 0.0
      %202 = vst.msk [vmem:[#allocation2 + $0xe8] sm:$0x3] %vm173, 0.0
      %203 = vst.msk [vmem:[#allocation2 + $0xf0] sm:$0xff] %vm171, 0.0
      %204 = vst.msk [vmem:[#allocation2 + $0xf8] sm:$0x3] %vm173, 0.0
      %205 = vst.msk [vmem:[#allocation2 + $0x100] sm:$0xff] %vm171, 0.0
      %206 = vst.msk [vmem:[#allocation2 + $0x108] sm:$0x3] %vm173, 0.0
      %207 = vst.msk [vmem:[#allocation2 + $0x110] sm:$0xff] %vm171, 0.0
      %208 = vst.msk [vmem:[#allocation2 + $0x118] sm:$0x3] %vm173, 0.0
      %209 = vst.msk [vmem:[#allocation2 + $0x120] sm:$0xff] %vm171, 0.0
      %210 = vst.msk [vmem:[#allocation2 + $0x128] sm:$0x3] %vm173, 0.0
      %211 = vst.msk [vmem:[#allocation2 + $0x130] sm:$0xff] %vm171, 0.0
      %212 = vst.msk [vmem:[#allocation2 + $0x138] sm:$0x3] %vm173, 0.0
      %v213 = vld [vmem:[%s165] sm:$0xff]
      %v214 = vld [vmem:[%s165 + $0x8] sm:$0xff]
      %v215 = vld [vmem:[%s165 + $0x10] sm:$0xff]
      %v216 = vld [vmem:[%s165 + $0x18] sm:$0xff]
      %v217 = vld [vmem:[%s165 + $0x20] sm:$0xff]
      %v218 = vld [vmem:[%s165 + $0x28] sm:$0xff]
      %v219 = vld [vmem:[%s165 + $0x30] sm:$0xff]
      %v220 = vld [vmem:[%s165 + $0x38] sm:$0xff]
      %v221 = vld [vmem:[%s165 + $0x40] sm:$0xff]
      %v222 = vld [vmem:[%s165 + $0x48] sm:$0xff]
      %v223 = vld [vmem:[%s165 + $0x50] sm:$0xff]
      %v224 = vld [vmem:[%s165 + $0x58] sm:$0xff]
      %v225 = vld [vmem:[%s165 + $0x60] sm:$0xff]
      %v226 = vld [vmem:[%s165 + $0x68] sm:$0xff]
      %v227 = vld [vmem:[%s165 + $0x70] sm:$0xff]
      %v228 = vld [vmem:[%s165 + $0x78] sm:$0xff]
      %s229 = scalar_lea.vmem [#allocation2], 16
      %230 = vst.msk [vmem:[%s229 + $0x1] sm:$0xff] %vm171, %v213
      %231 = vst.msk [vmem:[%s229 + $0x11] sm:$0xff] %vm171, %v214
      %232 = vst.msk [vmem:[%s229 + $0x21] sm:$0xff] %vm171, %v215
      %233 = vst.msk [vmem:[%s229 + $0x31] sm:$0xff] %vm171, %v216
      %234 = vst.msk [vmem:[%s229 + $0x41] sm:$0xff] %vm171, %v217
      %235 = vst.msk [vmem:[%s229 + $0x51] sm:$0xff] %vm171, %v218
      %236 = vst.msk [vmem:[%s229 + $0x61] sm:$0xff] %vm171, %v219
      %237 = vst.msk [vmem:[%s229 + $0x71] sm:$0xff] %vm171, %v220
      %238 = vst.msk [vmem:[%s229 + $0xa1] sm:$0xff] %vm171, %v221
      %239 = vst.msk [vmem:[%s229 + $0xb1] sm:$0xff] %vm171, %v222
      %240 = vst.msk [vmem:[%s229 + $0xc1] sm:$0xff] %vm171, %v223
      %241 = vst.msk [vmem:[%s229 + $0xd1] sm:$0xff] %vm171, %v224
      %242 = vst.msk [vmem:[%s229 + $0xe1] sm:$0xff] %vm171, %v225
      %243 = vst.msk [vmem:[%s229 + $0xf1] sm:$0xff] %vm171, %v226
      %244 = vst.msk [vmem:[%s229 + $0x101] sm:$0xff] %vm171, %v227
      %245 = vst.msk [vmem:[%s229 + $0x111] sm:$0xff] %vm171, %v228
      %v246 = vld [vmem:[#allocation2] sm:$0xff]
      %v247 = vld [vmem:[#allocation2 + $0x8] sm:$0x3]
      %v248 = vld [vmem:[#allocation2 + $0x10] sm:$0xff]
      %v249 = vld [vmem:[#allocation2 + $0x18] sm:$0x3]
      %v250 = vld [vmem:[#allocation2 + $0x20] sm:$0xff]
      %v251 = vld [vmem:[#allocation2 + $0x28] sm:$0x3]
      %v252 = vld [vmem:[#allocation2 + $0x30] sm:$0xff]
      %v253 = vld [vmem:[#allocation2 + $0x38] sm:$0x3]
      %v254 = vld [vmem:[#allocation2 + $0x40] sm:$0xff]
      %v255 = vld [vmem:[#allocation2 + $0x48] sm:$0x3]
      %v256 = vld [vmem:[#allocation2 + $0x50] sm:$0xff]
      %v257 = vld [vmem:[#allocation2 + $0x58] sm:$0x3]
      %v258 = vld [vmem:[#allocation2 + $0x60] sm:$0xff]
      %v259 = vld [vmem:[#allocation2 + $0x68] sm:$0x3]
      %v260 = vld [vmem:[#allocation2 + $0x70] sm:$0xff]
      %v261 = vld [vmem:[#allocation2 + $0x78] sm:$0x3]
      %v262 = vld [vmem:[#allocation2 + $0x80] sm:$0xff]
      %v263 = vld [vmem:[#allocation2 + $0x88] sm:$0x3]
      %v264 = vld [vmem:[#allocation2 + $0x90] sm:$0xff]
      %v265 = vld [vmem:[#allocation2 + $0x98] sm:$0x3]
      %v266 = vld [vmem:[#allocation2 + $0xa0] sm:$0xff]
      %v267 = vld [vmem:[#allocation2 + $0xa8] sm:$0x3]
      %v268 = vld [vmem:[#allocation2 + $0xb0] sm:$0xff]
      %v269 = vld [vmem:[#allocation2 + $0xb8] sm:$0x3]
      %v270 = vld [vmem:[#allocation2 + $0xc0] sm:$0xff]
      %v271 = vld [vmem:[#allocation2 + $0xc8] sm:$0x3]
      %v272 = vld [vmem:[#allocation2 + $0xd0] sm:$0xff]
      %v273 = vld [vmem:[#allocation2 + $0xd8] sm:$0x3]
      %v274 = vld [vmem:[#allocation2 + $0xe0] sm:$0xff]
      %v275 = vld [vmem:[#allocation2 + $0xe8] sm:$0x3]
      %v276 = vld [vmem:[#allocation2 + $0xf0] sm:$0xff]
      %v277 = vld [vmem:[#allocation2 + $0xf8] sm:$0x3]
      %v278 = vld [vmem:[#allocation2 + $0x100] sm:$0xff]
      %v279 = vld [vmem:[#allocation2 + $0x108] sm:$0x3]
      %v280 = vld [vmem:[#allocation2 + $0x110] sm:$0xff]
      %v281 = vld [vmem:[#allocation2 + $0x118] sm:$0x3]
      %v282 = vld [vmem:[#allocation2 + $0x120] sm:$0xff]
      %v283 = vld [vmem:[#allocation2 + $0x128] sm:$0x3]
      %v284 = vld [vmem:[#allocation2 + $0x130] sm:$0xff]
      %v285 = vld [vmem:[#allocation2 + $0x138] sm:$0x3]
      %vm318 = vcmask 1046528
      %v319 = vrot.slane %v246, 1
      %v320 = vrot.slane %v247, 1
      %v321 = vsel %vm318, %v319, %v320
      %v322 = vrot.slane %v248, 1
      %v323 = vrot.slane %v249, 1
      %v324 = vsel %vm318, %v322, %v323
      %v325 = vrot.slane %v250, 1
      %v326 = vrot.slane %v251, 1
      %v327 = vsel %vm318, %v325, %v326
      %v328 = vrot.slane %v252, 1
      %v329 = vrot.slane %v253, 1
      %v330 = vsel %vm318, %v328, %v329
      %v331 = vrot.slane %v254, 1
      %v332 = vrot.slane %v255, 1
      %v333 = vsel %vm318, %v331, %v332
      %v334 = vrot.slane %v256, 1
      %v335 = vrot.slane %v257, 1
      %v336 = vsel %vm318, %v334, %v335
      %v337 = vrot.slane %v258, 1
      %v338 = vrot.slane %v259, 1
      %v339 = vsel %vm318, %v337, %v338
      %v340 = vrot.slane %v260, 1
      %v341 = vrot.slane %v261, 1
      %v342 = vsel %vm318, %v340, %v341
      %v343 = vrot.slane %v266, 1
      %v344 = vrot.slane %v267, 1
      %v345 = vsel %vm318, %v343, %v344
      %v346 = vrot.slane %v268, 1
      %v347 = vrot.slane %v269, 1
      %v348 = vsel %vm318, %v346, %v347
      %v349 = vrot.slane %v270, 1
      %v350 = vrot.slane %v271, 1
      %v351 = vsel %vm318, %v349, %v350
      %v352 = vrot.slane %v272, 1
      %v353 = vrot.slane %v273, 1
      %v354 = vsel %vm318, %v352, %v353
      %v355 = vrot.slane %v274, 1
      %v356 = vrot.slane %v275, 1
      %v357 = vsel %vm318, %v355, %v356
      %v358 = vrot.slane %v276, 1
      %v359 = vrot.slane %v277, 1
      %v360 = vsel %vm318, %v358, %v359
      %v361 = vrot.slane %v278, 1
      %v362 = vrot.slane %v279, 1
      %v363 = vsel %vm318, %v361, %v362
      %v364 = vrot.slane %v280, 1
      %v365 = vrot.slane %v281, 1
      %v366 = vsel %vm318, %v364, %v365
      %vm367 = vcmask 1045504
      %v368 = vrot.slane %v246, 2
      %v369 = vrot.slane %v247, 2
      %v370 = vsel %vm367, %v368, %v369
      %v371 = vrot.slane %v248, 2
      %v372 = vrot.slane %v249, 2
      %v373 = vsel %vm367, %v371, %v372
      %v374 = vrot.slane %v250, 2
      %v375 = vrot.slane %v251, 2
      %v376 = vsel %vm367, %v374, %v375
      %v377 = vrot.slane %v252, 2
      %v378 = vrot.slane %v253, 2
      %v379 = vsel %vm367, %v377, %v378
      %v380 = vrot.slane %v254, 2
      %v381 = vrot.slane %v255, 2
      %v382 = vsel %vm367, %v380, %v381
      %v383 = vrot.slane %v256, 2
      %v384 = vrot.slane %v257, 2
      %v385 = vsel %vm367, %v383, %v384
      %v386 = vrot.slane %v258, 2
      %v387 = vrot.slane %v259, 2
      %v388 = vsel %vm367, %v386, %v387
      %v389 = vrot.slane %v260, 2
      %v390 = vrot.slane %v261, 2
      %v391 = vsel %vm367, %v389, %v390
      %v392 = vrot.slane %v266, 2
      %v393 = vrot.slane %v267, 2
      %v394 = vsel %vm367, %v392, %v393
      %v395 = vrot.slane %v268, 2
      %v396 = vrot.slane %v269, 2
      %v397 = vsel %vm367, %v395, %v396
      %v398 = vrot.slane %v270, 2
      %v399 = vrot.slane %v271, 2
      %v400 = vsel %vm367, %v398, %v399
      %v401 = vrot.slane %v272, 2
      %v402 = vrot.slane %v273, 2
      %v403 = vsel %vm367, %v401, %v402
      %v404 = vrot.slane %v274, 2
      %v405 = vrot.slane %v275, 2
      %v406 = vsel %vm367, %v404, %v405
      %v407 = vrot.slane %v276, 2
      %v408 = vrot.slane %v277, 2
      %v409 = vsel %vm367, %v407, %v408
      %v410 = vrot.slane %v278, 2
      %v411 = vrot.slane %v279, 2
      %v412 = vsel %vm367, %v410, %v411
      %v413 = vrot.slane %v280, 2
      %v414 = vrot.slane %v281, 2
      %v415 = vsel %vm367, %v413, %v414
      %v420 = vrot.slane %v262, 1
      %v421 = vrot.slane %v263, 1
      %v422 = vsel %vm318, %v420, %v421
      %v423 = vrot.slane %v282, 1
      %v424 = vrot.slane %v283, 1
      %v425 = vsel %vm318, %v423, %v424
      %v442 = vrot.slane %v262, 2
      %v443 = vrot.slane %v263, 2
      %v444 = vsel %vm367, %v442, %v443
      %v445 = vrot.slane %v282, 2
      %v446 = vrot.slane %v283, 2
      %v447 = vsel %vm367, %v445, %v446
      %v452 = vrot.slane %v264, 1
      %v453 = vrot.slane %v265, 1
      %v454 = vsel %vm318, %v452, %v453
      %v455 = vrot.slane %v284, 1
      %v456 = vrot.slane %v285, 1
      %v457 = vsel %vm318, %v455, %v456
      %v458 = vrot.slane %v264, 2
      %v459 = vrot.slane %v265, 2
      %v460 = vsel %vm367, %v458, %v459
      %v461 = vrot.slane %v284, 2
      %v462 = vrot.slane %v285, 2
      %v463 = vsel %vm367, %v461, %v462
      %464 = vrot.lane.b32.xlu0 %v321, 32
      %v465 = vpop.permute.xlu0 %464
      %466 = vrot.lane.b32.xlu0 %v324, 32
      %v467 = vpop.permute.xlu0 %466
      %468 = vrot.lane.b32.xlu0 %v327, 32
      %v469 = vpop.permute.xlu0 %468
      %470 = vrot.lane.b32.xlu0 %v330, 32
      %v471 = vpop.permute.xlu0 %470
      %472 = vrot.lane.b32.xlu0 %v333, 32
      %v473 = vpop.permute.xlu0 %472
      %474 = vrot.lane.b32.xlu0 %v336, 32
      %v475 = vpop.permute.xlu0 %474
      %476 = vrot.lane.b32.xlu0 %v339, 32
      %v477 = vpop.permute.xlu0 %476
      %478 = vrot.lane.b32.xlu0 %v342, 32
      %v479 = vpop.permute.xlu0 %478
      %480 = vrot.lane.b32.xlu0 %v345, 32
      %v481 = vpop.permute.xlu0 %480
      %482 = vrot.lane.b32.xlu0 %v348, 32
      %v483 = vpop.permute.xlu0 %482
      %484 = vrot.lane.b32.xlu0 %v351, 32
      %v485 = vpop.permute.xlu0 %484
      %486 = vrot.lane.b32.xlu0 %v354, 32
      %v487 = vpop.permute.xlu0 %486
      %488 = vrot.lane.b32.xlu0 %v357, 32
      %v489 = vpop.permute.xlu0 %488
      %490 = vrot.lane.b32.xlu0 %v360, 32
      %v491 = vpop.permute.xlu0 %490
      %492 = vrot.lane.b32.xlu0 %v363, 32
      %v493 = vpop.permute.xlu0 %492
      %494 = vrot.lane.b32.xlu0 %v366, 32
      %v495 = vpop.permute.xlu0 %494
      %512 = vrot.lane.b32.xlu0 %v370, 64
      %v513 = vpop.permute.xlu0 %512
      %514 = vrot.lane.b32.xlu0 %v373, 64
      %v515 = vpop.permute.xlu0 %514
      %516 = vrot.lane.b32.xlu0 %v376, 64
      %v517 = vpop.permute.xlu0 %516
      %518 = vrot.lane.b32.xlu0 %v379, 64
      %v519 = vpop.permute.xlu0 %518
      %520 = vrot.lane.b32.xlu0 %v382, 64
      %v521 = vpop.permute.xlu0 %520
      %522 = vrot.lane.b32.xlu0 %v385, 64
      %v523 = vpop.permute.xlu0 %522
      %524 = vrot.lane.b32.xlu0 %v388, 64
      %v525 = vpop.permute.xlu0 %524
      %526 = vrot.lane.b32.xlu0 %v391, 64
      %v527 = vpop.permute.xlu0 %526
      %528 = vrot.lane.b32.xlu0 %v394, 64
      %v529 = vpop.permute.xlu0 %528
      %530 = vrot.lane.b32.xlu0 %v397, 64
      %v531 = vpop.permute.xlu0 %530
      %532 = vrot.lane.b32.xlu0 %v400, 64
      %v533 = vpop.permute.xlu0 %532
      %534 = vrot.lane.b32.xlu0 %v403, 64
      %v535 = vpop.permute.xlu0 %534
      %536 = vrot.lane.b32.xlu0 %v406, 64
      %v537 = vpop.permute.xlu0 %536
      %538 = vrot.lane.b32.xlu0 %v409, 64
      %v539 = vpop.permute.xlu0 %538
      %540 = vrot.lane.b32.xlu0 %v412, 64
      %v541 = vpop.permute.xlu0 %540
      %542 = vrot.lane.b32.xlu0 %v415, 64
      %v543 = vpop.permute.xlu0 %542
      %560 = vrot.lane.b32.xlu0 %v248, 96
      %v561 = vpop.permute.xlu0 %560
      %562 = vrot.lane.b32.xlu0 %v250, 96
      %v563 = vpop.permute.xlu0 %562
      %564 = vrot.lane.b32.xlu0 %v252, 96
      %v565 = vpop.permute.xlu0 %564
      %566 = vrot.lane.b32.xlu0 %v254, 96
      %v567 = vpop.permute.xlu0 %566
      %568 = vrot.lane.b32.xlu0 %v256, 96
      %v569 = vpop.permute.xlu0 %568
      %570 = vrot.lane.b32.xlu0 %v258, 96
      %v571 = vpop.permute.xlu0 %570
      %572 = vrot.lane.b32.xlu0 %v260, 96
      %v573 = vpop.permute.xlu0 %572
      %574 = vrot.lane.b32.xlu0 %v262, 96
      %v575 = vpop.permute.xlu0 %574
      %576 = vrot.lane.b32.xlu0 %v268, 96
      %v577 = vpop.permute.xlu0 %576
      %578 = vrot.lane.b32.xlu0 %v270, 96
      %v579 = vpop.permute.xlu0 %578
      %580 = vrot.lane.b32.xlu0 %v272, 96
      %v581 = vpop.permute.xlu0 %580
      %582 = vrot.lane.b32.xlu0 %v274, 96
      %v583 = vpop.permute.xlu0 %582
      %584 = vrot.lane.b32.xlu0 %v276, 96
      %v585 = vpop.permute.xlu0 %584
      %586 = vrot.lane.b32.xlu0 %v278, 96
      %v587 = vpop.permute.xlu0 %586
      %588 = vrot.lane.b32.xlu0 %v280, 96
      %v589 = vpop.permute.xlu0 %588
      %590 = vrot.lane.b32.xlu0 %v282, 96
      %v591 = vpop.permute.xlu0 %590
      %608 = vrot.lane.b32.xlu0 %v373, 32
      %v609 = vpop.permute.xlu0 %608
      %610 = vrot.lane.b32.xlu0 %v376, 32
      %v611 = vpop.permute.xlu0 %610
      %612 = vrot.lane.b32.xlu0 %v379, 32
      %v613 = vpop.permute.xlu0 %612
      %614 = vrot.lane.b32.xlu0 %v382, 32
      %v615 = vpop.permute.xlu0 %614
      %616 = vrot.lane.b32.xlu0 %v385, 32
      %v617 = vpop.permute.xlu0 %616
      %618 = vrot.lane.b32.xlu0 %v388, 32
      %v619 = vpop.permute.xlu0 %618
      %620 = vrot.lane.b32.xlu0 %v391, 32
      %v621 = vpop.permute.xlu0 %620
      %622 = vrot.lane.b32.xlu0 %v444, 32
      %v623 = vpop.permute.xlu0 %622
      %624 = vrot.lane.b32.xlu0 %v397, 32
      %v625 = vpop.permute.xlu0 %624
      %626 = vrot.lane.b32.xlu0 %v400, 32
      %v627 = vpop.permute.xlu0 %626
      %628 = vrot.lane.b32.xlu0 %v403, 32
      %v629 = vpop.permute.xlu0 %628
      %630 = vrot.lane.b32.xlu0 %v406, 32
      %v631 = vpop.permute.xlu0 %630
      %632 = vrot.lane.b32.xlu0 %v409, 32
      %v633 = vpop.permute.xlu0 %632
      %634 = vrot.lane.b32.xlu0 %v412, 32
      %v635 = vpop.permute.xlu0 %634
      %636 = vrot.lane.b32.xlu0 %v415, 32
      %v637 = vpop.permute.xlu0 %636
      %638 = vrot.lane.b32.xlu0 %v447, 32
      %v639 = vpop.permute.xlu0 %638
      %656 = vrot.lane.b32.xlu0 %v250, 64
      %v657 = vpop.permute.xlu0 %656
      %658 = vrot.lane.b32.xlu0 %v252, 64
      %v659 = vpop.permute.xlu0 %658
      %660 = vrot.lane.b32.xlu0 %v254, 64
      %v661 = vpop.permute.xlu0 %660
      %662 = vrot.lane.b32.xlu0 %v256, 64
      %v663 = vpop.permute.xlu0 %662
      %664 = vrot.lane.b32.xlu0 %v258, 64
      %v665 = vpop.permute.xlu0 %664
      %666 = vrot.lane.b32.xlu0 %v260, 64
      %v667 = vpop.permute.xlu0 %666
      %668 = vrot.lane.b32.xlu0 %v262, 64
      %v669 = vpop.permute.xlu0 %668
      %670 = vrot.lane.b32.xlu0 %v264, 64
      %v671 = vpop.permute.xlu0 %670
      %672 = vrot.lane.b32.xlu0 %v270, 64
      %v673 = vpop.permute.xlu0 %672
      %674 = vrot.lane.b32.xlu0 %v272, 64
      %v675 = vpop.permute.xlu0 %674
      %676 = vrot.lane.b32.xlu0 %v274, 64
      %v677 = vpop.permute.xlu0 %676
      %678 = vrot.lane.b32.xlu0 %v276, 64
      %v679 = vpop.permute.xlu0 %678
      %680 = vrot.lane.b32.xlu0 %v278, 64
      %v681 = vpop.permute.xlu0 %680
      %682 = vrot.lane.b32.xlu0 %v280, 64
      %v683 = vpop.permute.xlu0 %682
      %684 = vrot.lane.b32.xlu0 %v282, 64
      %v685 = vpop.permute.xlu0 %684
      %686 = vrot.lane.b32.xlu0 %v284, 64
      %v687 = vpop.permute.xlu0 %686
      %704 = vrot.lane.b32.xlu0 %v327, 96
      %v705 = vpop.permute.xlu0 %704
      %706 = vrot.lane.b32.xlu0 %v330, 96
      %v707 = vpop.permute.xlu0 %706
      %708 = vrot.lane.b32.xlu0 %v333, 96
      %v709 = vpop.permute.xlu0 %708
      %710 = vrot.lane.b32.xlu0 %v336, 96
      %v711 = vpop.permute.xlu0 %710
      %712 = vrot.lane.b32.xlu0 %v339, 96
      %v713 = vpop.permute.xlu0 %712
      %714 = vrot.lane.b32.xlu0 %v342, 96
      %v715 = vpop.permute.xlu0 %714
      %716 = vrot.lane.b32.xlu0 %v422, 96
      %v717 = vpop.permute.xlu0 %716
      %718 = vrot.lane.b32.xlu0 %v454, 96
      %v719 = vpop.permute.xlu0 %718
      %720 = vrot.lane.b32.xlu0 %v351, 96
      %v721 = vpop.permute.xlu0 %720
      %722 = vrot.lane.b32.xlu0 %v354, 96
      %v723 = vpop.permute.xlu0 %722
      %724 = vrot.lane.b32.xlu0 %v357, 96
      %v725 = vpop.permute.xlu0 %724
      %726 = vrot.lane.b32.xlu0 %v360, 96
      %v727 = vpop.permute.xlu0 %726
      %728 = vrot.lane.b32.xlu0 %v363, 96
      %v729 = vpop.permute.xlu0 %728
      %730 = vrot.lane.b32.xlu0 %v366, 96
      %v731 = vpop.permute.xlu0 %730
      %732 = vrot.lane.b32.xlu0 %v425, 96
      %v733 = vpop.permute.xlu0 %732
      %734 = vrot.lane.b32.xlu0 %v457, 96
      %v735 = vpop.permute.xlu0 %734
      %v752 = vsel %vm171, %v246, %v465
      %v753 = vsel %vm171, %v248, %v467
      %v754 = vsel %vm171, %v250, %v469
      %v755 = vsel %vm171, %v252, %v471
      %v756 = vsel %vm171, %v254, %v473
      %v757 = vsel %vm171, %v256, %v475
      %v758 = vsel %vm171, %v258, %v477
      %v759 = vsel %vm171, %v260, %v479
      %v760 = vsel %vm171, %v266, %v481
      %v761 = vsel %vm171, %v268, %v483
      %v762 = vsel %vm171, %v270, %v485
      %v763 = vsel %vm171, %v272, %v487
      %v764 = vsel %vm171, %v274, %v489
      %v765 = vsel %vm171, %v276, %v491
      %v766 = vsel %vm171, %v278, %v493
      %v767 = vsel %vm171, %v280, %v495
      %vm768 = vcmask 523264
      %v769 = vsel %vm768, %v752, %v513
      %v770 = vsel %vm768, %v753, %v515
      %v771 = vsel %vm768, %v754, %v517
      %v772 = vsel %vm768, %v755, %v519
      %v773 = vsel %vm768, %v756, %v521
      %v774 = vsel %vm768, %v757, %v523
      %v775 = vsel %vm768, %v758, %v525
      %v776 = vsel %vm768, %v759, %v527
      %v777 = vsel %vm768, %v760, %v529
      %v778 = vsel %vm768, %v761, %v531
      %v779 = vsel %vm768, %v762, %v533
      %v780 = vsel %vm768, %v763, %v535
      %v781 = vsel %vm768, %v764, %v537
      %v782 = vsel %vm768, %v765, %v539
      %v783 = vsel %vm768, %v766, %v541
      %v784 = vsel %vm768, %v767, %v543
      %vm785 = vcmask 785408
      %v786 = vsel %vm785, %v769, %v561
      %v787 = vsel %vm785, %v770, %v563
      %v788 = vsel %vm785, %v771, %v565
      %v789 = vsel %vm785, %v772, %v567
      %v790 = vsel %vm785, %v773, %v569
      %v791 = vsel %vm785, %v774, %v571
      %v792 = vsel %vm785, %v775, %v573
      %v793 = vsel %vm785, %v776, %v575
      %v794 = vsel %vm785, %v777, %v577
      %v795 = vsel %vm785, %v778, %v579
      %v796 = vsel %vm785, %v779, %v581
      %v797 = vsel %vm785, %v780, %v583
      %v798 = vsel %vm785, %v781, %v585
      %v799 = vsel %vm785, %v782, %v587
      %v800 = vsel %vm785, %v783, %v589
      %v801 = vsel %vm785, %v784, %v591
      %v802 = vsel %vm171, %v324, %v609
      %v803 = vsel %vm171, %v327, %v611
      %v804 = vsel %vm171, %v330, %v613
      %v805 = vsel %vm171, %v333, %v615
      %v806 = vsel %vm171, %v336, %v617
      %v807 = vsel %vm171, %v339, %v619
      %v808 = vsel %vm171, %v342, %v621
      %v809 = vsel %vm171, %v422, %v623
      %v810 = vsel %vm171, %v348, %v625
      %v811 = vsel %vm171, %v351, %v627
      %v812 = vsel %vm171, %v354, %v629
      %v813 = vsel %vm171, %v357, %v631
      %v814 = vsel %vm171, %v360, %v633
      %v815 = vsel %vm171, %v363, %v635
      %v816 = vsel %vm171, %v366, %v637
      %v817 = vsel %vm171, %v425, %v639
      %v818 = vsel %vm768, %v802, %v657
      %v819 = vsel %vm768, %v803, %v659
      %v820 = vsel %vm768, %v804, %v661
      %v821 = vsel %vm768, %v805, %v663
      %v822 = vsel %vm768, %v806, %v665
      %v823 = vsel %vm768, %v807, %v667
      %v824 = vsel %vm768, %v808, %v669
      %v825 = vsel %vm768, %v809, %v671
      %v826 = vsel %vm768, %v810, %v673
      %v827 = vsel %vm768, %v811, %v675
      %v828 = vsel %vm768, %v812, %v677
      %v829 = vsel %vm768, %v813, %v679
      %v830 = vsel %vm768, %v814, %v681
      %v831 = vsel %vm768, %v815, %v683
      %v832 = vsel %vm768, %v816, %v685
      %v833 = vsel %vm768, %v817, %v687
      %v834 = vsel %vm785, %v818, %v705
      %v835 = vsel %vm785, %v819, %v707
      %v836 = vsel %vm785, %v820, %v709
      %v837 = vsel %vm785, %v821, %v711
      %v838 = vsel %vm785, %v822, %v713
      %v839 = vsel %vm785, %v823, %v715
      %v840 = vsel %vm785, %v824, %v717
      %v841 = vsel %vm785, %v825, %v719
      %v842 = vsel %vm785, %v826, %v721
      %v843 = vsel %vm785, %v827, %v723
      %v844 = vsel %vm785, %v828, %v725
      %v845 = vsel %vm785, %v829, %v727
      %v846 = vsel %vm785, %v830, %v729
      %v847 = vsel %vm785, %v831, %v731
      %v848 = vsel %vm785, %v832, %v733
      %v849 = vsel %vm785, %v833, %v735
      %v850 = vld [vmem:[%s1] sm:$0xff]
      %v851 = vld [vmem:[%s1 + $0x8] sm:$0xff]
      %v852 = vld [vmem:[%s1 + $0x10] sm:$0xff]
      %v853 = vld [vmem:[%s1 + $0x18] sm:$0xff]
      %v854 = vld [vmem:[%s1 + $0x20] sm:$0xff]
      %v855 = vld [vmem:[%s1 + $0x28] sm:$0xff]
      %v856 = vld [vmem:[%s1 + $0x30] sm:$0xff]
      %v857 = vld [vmem:[%s1 + $0x38] sm:$0xff]
      %v858 = vld [vmem:[%s1 + $0x40] sm:$0xff]
      %v859 = vld [vmem:[%s1 + $0x48] sm:$0xff]
      %v860 = vld [vmem:[%s1 + $0x50] sm:$0xff]
      %v861 = vld [vmem:[%s1 + $0x58] sm:$0xff]
      %v862 = vld [vmem:[%s1 + $0x60] sm:$0xff]
      %v863 = vld [vmem:[%s1 + $0x68] sm:$0xff]
      %v864 = vld [vmem:[%s1 + $0x70] sm:$0xff]
      %v865 = vld [vmem:[%s1 + $0x78] sm:$0xff]
      %v866 = vld [vmem:[%s1 + $0x80] sm:$0xff]
      %v867 = vld [vmem:[%s1 + $0x88] sm:$0xff]
      %v868 = vld [vmem:[%s1 + $0x90] sm:$0xff]
      %v869 = vld [vmem:[%s1 + $0x98] sm:$0xff]
      %v870 = vld [vmem:[%s1 + $0xa0] sm:$0xff]
      %v871 = vld [vmem:[%s1 + $0xa8] sm:$0xff]
      %v872 = vld [vmem:[%s1 + $0xb0] sm:$0xff]
      %v873 = vld [vmem:[%s1 + $0xb8] sm:$0xff]
      %v874 = vld [vmem:[%s1 + $0xc0] sm:$0xff]
      %v875 = vld [vmem:[%s1 + $0xc8] sm:$0xff]
      %v876 = vld [vmem:[%s1 + $0xd0] sm:$0xff]
      %v877 = vld [vmem:[%s1 + $0xd8] sm:$0xff]
      %v878 = vld [vmem:[%s1 + $0xe0] sm:$0xff]
      %v879 = vld [vmem:[%s1 + $0xe8] sm:$0xff]
      %v880 = vld [vmem:[%s1 + $0xf0] sm:$0xff]
      %v881 = vld [vmem:[%s1 + $0xf8] sm:$0xff]
      %v882 = vld [vmem:[%s1 + $0x100] sm:$0xff]
      %v883 = vld [vmem:[%s1 + $0x108] sm:$0xff]
      %v884 = vld [vmem:[%s1 + $0x110] sm:$0xff]
      %v885 = vld [vmem:[%s1 + $0x118] sm:$0xff]
      %v886 = vld [vmem:[%s2] sm:$0x1]
      %v888 = vperm.slane %v886, 0
      %v890 = vsel %vm171, %v376, 0
      %v892 = vsel %vm171, %v379, 0
      %v894 = vsel %vm171, %v382, 0
      %v896 = vsel %vm171, %v385, 0
      %v898 = vsel %vm171, %v388, 0
      %v900 = vsel %vm171, %v391, 0
      %v902 = vsel %vm171, %v444, 0
      %v904 = vsel %vm171, %v460, 0
      %v906 = vsel %vm171, %v400, 0
      %v908 = vsel %vm171, %v403, 0
      %v910 = vsel %vm171, %v406, 0
      %v912 = vsel %vm171, %v409, 0
      %v914 = vsel %vm171, %v412, 0
      %v916 = vsel %vm171, %v415, 0
      %v918 = vsel %vm171, %v447, 0
      %v920 = vsel %vm171, %v463, 0
      %922 = vmatpush.msra.mxu0 %v865
      %923 = vmatpush.msra.mxu0 %v864
      %924 = vmatpush.msra.mxu0 %v863
      %925 = vmatpush.msra.mxu0 %v862
      %926 = vmatpush.msra.mxu0 %v861
      %927 = vmatpush.msra.mxu0 %v860
      %928 = vmatpush.msra.mxu0 %v859
      %929 = vmatpush.msra.mxu0 %v858
      %930 = vmatpush.msra.mxu0 %v857
      %931 = vmatpush.msra.mxu0 %v856
      %932 = vmatpush.msra.mxu0 %v855
      %933 = vmatpush.msra.mxu0 %v854
      %934 = vmatpush.msra.mxu0 %v853
      %935 = vmatpush.msra.mxu0 %v852
      %936 = vmatpush.msra.mxu0 %v851
      %937 = vmatpush.msra.mxu0 %v850
      %938 = vmatmul.f32.gmra.mxu0 %v786
      %v939 = vpop.f32.mrf.mxu0
      %v940 = vadd.f32 %v888, %v939
      %941 = vmatmul.f32.gmra.mxu0 %v787
      %v942 = vpop.f32.mrf.mxu0
      %v943 = vadd.f32 %v888, %v942
      %944 = vmatmul.f32.gmra.mxu0 %v788
      %v945 = vpop.f32.mrf.mxu0
      %v946 = vadd.f32 %v888, %v945
      %947 = vmatmul.f32.gmra.mxu0 %v789
      %v948 = vpop.f32.mrf.mxu0
      %v949 = vadd.f32 %v888, %v948
      %950 = vmatmul.f32.gmra.mxu0 %v790
      %v951 = vpop.f32.mrf.mxu0
      %v952 = vadd.f32 %v888, %v951
      %953 = vmatmul.f32.gmra.mxu0 %v791
      %v954 = vpop.f32.mrf.mxu0
      %v955 = vadd.f32 %v888, %v954
      %956 = vmatmul.f32.gmra.mxu0 %v792
      %v957 = vpop.f32.mrf.mxu0
      %v958 = vadd.f32 %v888, %v957
      %959 = vmatmul.f32.gmra.mxu0 %v793
      %v960 = vpop.f32.mrf.mxu0
      %v961 = vadd.f32 %v888, %v960
      %962 = vmatmul.f32.gmra.mxu0 %v794
      %v963 = vpop.f32.mrf.mxu0
      %v964 = vadd.f32 %v888, %v963
      %965 = vmatmul.f32.gmra.mxu0 %v795
      %v966 = vpop.f32.mrf.mxu0
      %v967 = vadd.f32 %v888, %v966
      %968 = vmatmul.f32.gmra.mxu0 %v796
      %v969 = vpop.f32.mrf.mxu0
      %v970 = vadd.f32 %v888, %v969
      %971 = vmatmul.f32.gmra.mxu0 %v797
      %v972 = vpop.f32.mrf.mxu0
      %v973 = vadd.f32 %v888, %v972
      %974 = vmatmul.f32.gmra.mxu0 %v798
      %v975 = vpop.f32.mrf.mxu0
      %v976 = vadd.f32 %v888, %v975
      %977 = vmatmul.f32.gmra.mxu0 %v799
      %v978 = vpop.f32.mrf.mxu0
      %v979 = vadd.f32 %v888, %v978
      %980 = vmatmul.f32.gmra.mxu0 %v800
      %v981 = vpop.f32.mrf.mxu0
      %v982 = vadd.f32 %v888, %v981
      %983 = vmatmul.f32.gmra.mxu0 %v801
      %v984 = vpop.f32.mrf.mxu0
      %v985 = vadd.f32 %v888, %v984
      %986 = vdwg.mxu0
      %987 = vmatpush.msra.mxu0 %v881
      %988 = vmatpush.msra.mxu0 %v880
      %989 = vmatpush.msra.mxu0 %v879
      %990 = vmatpush.msra.mxu0 %v878
      %991 = vmatpush.msra.mxu0 %v877
      %992 = vmatpush.msra.mxu0 %v876
      %993 = vmatpush.msra.mxu0 %v875
      %994 = vmatpush.msra.mxu0 %v874
      %995 = vmatpush.msra.mxu0 %v873
      %996 = vmatpush.msra.mxu0 %v872
      %997 = vmatpush.msra.mxu0 %v871
      %998 = vmatpush.msra.mxu0 %v870
      %999 = vmatpush.msra.mxu0 %v869
      %1000 = vmatpush.msra.mxu0 %v868
      %1001 = vmatpush.msra.mxu0 %v867
      %1002 = vmatpush.msra.mxu0 %v866
      %1003 = vmatmul.f32.gmra.mxu0 %v834
      %v1004 = vpop.f32.mrf.mxu0
      %v1005 = vadd.f32 %v940, %v1004
      %1006 = vmatmul.f32.gmra.mxu0 %v835
      %v1007 = vpop.f32.mrf.mxu0
      %v1008 = vadd.f32 %v943, %v1007
      %1009 = vmatmul.f32.gmra.mxu0 %v836
      %v1010 = vpop.f32.mrf.mxu0
      %v1011 = vadd.f32 %v946, %v1010
      %1012 = vmatmul.f32.gmra.mxu0 %v837
      %v1013 = vpop.f32.mrf.mxu0
      %v1014 = vadd.f32 %v949, %v1013
      %1015 = vmatmul.f32.gmra.mxu0 %v838
      %v1016 = vpop.f32.mrf.mxu0
      %v1017 = vadd.f32 %v952, %v1016
      %1018 = vmatmul.f32.gmra.mxu0 %v839
      %v1019 = vpop.f32.mrf.mxu0
      %v1020 = vadd.f32 %v955, %v1019
      %1021 = vmatmul.f32.gmra.mxu0 %v840
      %v1022 = vpop.f32.mrf.mxu0
      %v1023 = vadd.f32 %v958, %v1022
      %1024 = vmatmul.f32.gmra.mxu0 %v841
      %v1025 = vpop.f32.mrf.mxu0
      %v1026 = vadd.f32 %v961, %v1025
      %1027 = vmatmul.f32.gmra.mxu0 %v842
      %v1028 = vpop.f32.mrf.mxu0
      %v1029 = vadd.f32 %v964, %v1028
      %1030 = vmatmul.f32.gmra.mxu0 %v843
      %v1031 = vpop.f32.mrf.mxu0
      %v1032 = vadd.f32 %v967, %v1031
      %1033 = vmatmul.f32.gmra.mxu0 %v844
      %v1034 = vpop.f32.mrf.mxu0
      %v1035 = vadd.f32 %v970, %v1034
      %1036 = vmatmul.f32.gmra.mxu0 %v845
      %v1037 = vpop.f32.mrf.mxu0
      %v1038 = vadd.f32 %v973, %v1037
      %1039 = vmatmul.f32.gmra.mxu0 %v846
      %v1040 = vpop.f32.mrf.mxu0
      %v1041 = vadd.f32 %v976, %v1040
      %1042 = vmatmul.f32.gmra.mxu0 %v847
      %v1043 = vpop.f32.mrf.mxu0
      %v1044 = vadd.f32 %v979, %v1043
      %1045 = vmatmul.f32.gmra.mxu0 %v848
      %v1046 = vpop.f32.mrf.mxu0
      %v1047 = vadd.f32 %v982, %v1046
      %1048 = vmatmul.f32.gmra.mxu0 %v849
      %v1049 = vpop.f32.mrf.mxu0
      %v1050 = vadd.f32 %v985, %v1049
      %1051 = vdwg.mxu0
      %1052 = vmatpush.msra.mxu0 0.0
      %1053 = vmatpush.msra.mxu0 0.0
      %1054 = vmatpush.msra.mxu0 0.0
      %1055 = vmatpush.msra.mxu0 0.0
      %1056 = vmatpush.msra.mxu0 0.0
      %1057 = vmatpush.msra.mxu0 0.0
      %1058 = vmatpush.msra.mxu0 0.0
      %1059 = vmatpush.msra.mxu0 0.0
      %1060 = vmatpush.msra.mxu0 0.0
      %1061 = vmatpush.msra.mxu0 0.0
      %1062 = vmatpush.msra.mxu0 0.0
      %1063 = vmatpush.msra.mxu0 0.0
      %1064 = vmatpush.msra.mxu0 %v885
      %1065 = vmatpush.msra.mxu0 %v884
      %1066 = vmatpush.msra.mxu0 %v883
      %1067 = vmatpush.msra.mxu0 %v882
      %1068 = vmatmul.f32.gmra.mxu0 %v890
      %v1069 = vpop.f32.mrf.mxu0
      %v1070 = vadd.f32 %v1005, %v1069
      %1071 = vmatmul.f32.gmra.mxu0 %v892
      %v1072 = vpop.f32.mrf.mxu0
      %v1073 = vadd.f32 %v1008, %v1072
      %1074 = vmatmul.f32.gmra.mxu0 %v894
      %v1075 = vpop.f32.mrf.mxu0
      %v1076 = vadd.f32 %v1011, %v1075
      %1077 = vmatmul.f32.gmra.mxu0 %v896
      %v1078 = vpop.f32.mrf.mxu0
      %v1079 = vadd.f32 %v1014, %v1078
      %1080 = vmatmul.f32.gmra.mxu0 %v898
      %v1081 = vpop.f32.mrf.mxu0
      %v1082 = vadd.f32 %v1017, %v1081
      %1083 = vmatmul.f32.gmra.mxu0 %v900
      %v1084 = vpop.f32.mrf.mxu0
      %v1085 = vadd.f32 %v1020, %v1084
      %1086 = vmatmul.f32.gmra.mxu0 %v902
      %v1087 = vpop.f32.mrf.mxu0
      %v1088 = vadd.f32 %v1023, %v1087
      %1089 = vmatmul.f32.gmra.mxu0 %v904
      %v1090 = vpop.f32.mrf.mxu0
      %v1091 = vadd.f32 %v1026, %v1090
      %1092 = vmatmul.f32.gmra.mxu0 %v906
      %v1093 = vpop.f32.mrf.mxu0
      %v1094 = vadd.f32 %v1029, %v1093
      %1095 = vmatmul.f32.gmra.mxu0 %v908
      %v1096 = vpop.f32.mrf.mxu0
      %v1097 = vadd.f32 %v1032, %v1096
      %1098 = vmatmul.f32.gmra.mxu0 %v910
      %v1099 = vpop.f32.mrf.mxu0
      %v1100 = vadd.f32 %v1035, %v1099
      %1101 = vmatmul.f32.gmra.mxu0 %v912
      %v1102 = vpop.f32.mrf.mxu0
      %v1103 = vadd.f32 %v1038, %v1102
      %1104 = vmatmul.f32.gmra.mxu0 %v914
      %v1105 = vpop.f32.mrf.mxu0
      %v1106 = vadd.f32 %v1041, %v1105
      %1107 = vmatmul.f32.gmra.mxu0 %v916
      %v1108 = vpop.f32.mrf.mxu0
      %v1109 = vadd.f32 %v1044, %v1108
      %1110 = vmatmul.f32.gmra.mxu0 %v918
      %v1111 = vpop.f32.mrf.mxu0
      %v1112 = vadd.f32 %v1047, %v1111
      %1113 = vmatmul.f32.gmra.mxu0 %v920
      %v1114 = vpop.f32.mrf.mxu0
      %v1115 = vadd.f32 %v1050, %v1114
      %1116 = vdwg.mxu0
      %1117 = vst [vmem:[%s170] sm:$0xff] %v1070
      %1118 = vst [vmem:[%s170 + $0x8] sm:$0xff] %v1073
      %1119 = vst [vmem:[%s170 + $0x10] sm:$0xff] %v1076
      %1120 = vst [vmem:[%s170 + $0x18] sm:$0xff] %v1079
      %1121 = vst [vmem:[%s170 + $0x20] sm:$0xff] %v1082
      %1122 = vst [vmem:[%s170 + $0x28] sm:$0xff] %v1085
      %1123 = vst [vmem:[%s170 + $0x30] sm:$0xff] %v1088
      %1124 = vst [vmem:[%s170 + $0x38] sm:$0xff] %v1091
      %1125 = vst [vmem:[%s170 + $0x40] sm:$0xff] %v1094
      %1126 = vst [vmem:[%s170 + $0x48] sm:$0xff] %v1097
      %1127 = vst [vmem:[%s170 + $0x50] sm:$0xff] %v1100
      %1128 = vst [vmem:[%s170 + $0x58] sm:$0xff] %v1103
      %1129 = vst [vmem:[%s170 + $0x60] sm:$0xff] %v1106
      %1130 = vst [vmem:[%s170 + $0x68] sm:$0xff] %v1109
      %1131 = vst [vmem:[%s170 + $0x70] sm:$0xff] %v1112
      %1132 = vst [vmem:[%s170 + $0x78] sm:$0xff] %v1115
      %p1133 = scmp.lt.s32.totalorder %s14, 7
      %s1134 = scalar_select %p1133, %s14, 7
      %s1135 = smul.addr %s1134, 16
      %s1136 = smul.addr %s1135, 8
      %s1137 = scalar_lea.vmem %s3, %s1136
      // Predicated region
      $region33: #{convgru_forward.6} parent=31 // pred_check
        %p1138 = pneg %p100
      $region34: #{convgru_forward.6} parent=31 // pred_check_branch
        %1140 = sbr.rel (%p1138) target = $region36
      $region35: #{convgru_forward.6} parent=31 // pred_region
        _
      $region36: #{convgru_forward.6} parent=31 // pred_fallthru
        _
    $region32: #{convgru_forward.6} parent=5 // pred_fallthru
      _
    %p1141 = scmp.le.s32.totalorder 2, %s9
    // Predicated region
    $region37: #{convgru_forward.6} parent=5 // pred_check
      %p1142 = pneg %p1141
    $region38: #{convgru_forward.6} parent=5 // pred_check_branch
      %1144 = sbr.rel (%p1142) target = $region40
    $region39: #{convgru_forward.6} parent=5 // pred_region
      %s1145 = ssub.s32 %s9, 2
      // Predicated region
      $region41: #{convgru_forward.6} parent=39 // pred_check
        %p1146 = pneg %p106
      $region42: #{convgru_forward.6} parent=39 // pred_check_branch
        %1148 = sbr.rel (%p1146) target = $region44
      $region43: #{convgru_forward.6} parent=39 // pred_region
        %p1149 = scmp.lt.s32.totalorder %s15, 7
        %s1150 = scalar_select %p1149, %s15, 7
        %s1151 = smul.addr %s1150, 16
        %s1152 = smul.addr %s1151, 8
        %s1153 = scalar_lea.vmem %s3, %s1152
      $region44: #{convgru_forward.6} parent=39 // pred_fallthru
        _
    $region40: #{convgru_forward.6} parent=5 // pred_fallthru
      _
  $region6: #{convgru_forward.6} parent=0 // loop_footer
    %s13 = sadd.s32 1, %s9
  $region7: #{convgru_forward.6} parent=0 // loop_footer_branch
    %8 = sbr.rel target = $region3
  $region8: #{convgru_forward.6} parent=0 // loop_exit
    _

// kernel: convgru_forward.5
$region0: #{convgru_forward.5}
  #allocation0 [shape = 'u32[]', space=smem, size = 0x4, offset = 0x4, fixed_abs, tag = 'smem constant byte address 0x4 - core index']
  #allocation1 [shape = 'u32[72,128]{1,0:T(1,128)}', space=vmem, size = 0x9000, scoped, tag = 'internal scratch']
  #allocation2 [shape = 'f32[2,10,10,32]{3,2,1,0:T(8,128)}', space=vmem, size = 0x28000, scoped, tag = 'scratch operand']
  %s0 = inlined_call_operand.vmem [shape: f32[8,128,128], index: 0, kind: input, shape index: {}]
  %s1 = inlined_call_operand.vmem [shape: f32[288,128], index: 1, kind: input, shape index: {}]
  %s2 = inlined_call_operand.vmem [shape: f32[1,32], index: 2, kind: input, shape index: {}]
  %s3 = inlined_call_operand.vmem [shape: f32[8,2,8,8,32], index: 3, kind: output, shape index: {}]
  %s4 = sld [smem:[#allocation0]]
  $region49: #{convgru_forward.5} parent=0
    _
  %s6 = ssub.s32 1, %s4
  %s7 = scalar_select 0, %s6, %s4
  loop: start=0, step=1, limit=10
  $region2: #{convgru_forward.5} parent=0 // loop_pre_header
    _
  $region3: #{convgru_forward.5} parent=0 // loop_header
    %s9 = sphi 0, %s13
    %p10 = scmp.ge.s32.totalorder %s9, 10
    %s19 = sphi 0, %s21
    %s22 = sphi 0, %s19
    %s23 = sphi 0, %s22
    %s39 = sphi 0, %s23
    %s43 = sphi 0, %s43
    %s45 = sphi 0, %s43
    %s46 = sphi 0, %s45
    %s60 = sphi 0, %s46
    %s64 = sphi 0, %s64
    %s66 = sphi 0, %s64
    %s67 = sphi 0, %s66
    %s81 = sphi 0, %s67
    %s87 = sphi 0, %s89
    %s90 = sphi 0, %s87
    %s91 = sphi 0, %s90
    %s107 = sphi 0, %s91
  $region4: #{convgru_forward.5} parent=0 // loop_header_branch
    %12 = sbr.rel (%p10) target = $region8
  $region5: #{convgru_forward.5} parent=0 // loop_body
    %s14 = ssub.s32 %s9, 1
    %s15 = ssub.s32 %s9, 2
    %s16 = sadd.s32 %s9, 1
    %s17 = ssub.s32 %s9, %s16
    %p18 = scmp.eq.s32.totalorder %s17, 0
    %s20 = sadd.s32 %s19, 1
    %s21 = scalar_select %p18, %s19, %s20
    %p24 = pneg %p18
    %p25 = scmp.eq.s32.totalorder %s9, 7
    %p26 = por %p24, %p25
    %p27 = scmp.ne.s32.totalorder %s19, %s22
    %p28 = scmp.eq.s32.totalorder %s9, 0
    %p29 = por %p27, %p28
    %p30 = scmp.ne.s32.totalorder %s19, %s22
    %p31 = scmp.eq.s32.totalorder %s14, 7
    %p32 = por %p30, %p31
    %p33 = scmp.ne.s32.totalorder %s22, %s23
    %p34 = scmp.eq.s32.totalorder %s14, 0
    %p35 = por %p33, %p34
    %p36 = scmp.ne.s32.totalorder %s22, %s23
    %p37 = scmp.eq.s32.totalorder %s15, 7
    %p38 = por %p36, %p37
    %p40 = scmp.ne.s32.totalorder %s23, %s39
    %p41 = scmp.eq.s32.totalorder %s15, 0
    %p42 = por %p40, %p41
    %s44 = sadd.s32 %s43, 1
    %p47 = scmp.eq.s32.totalorder %s9, 7
    %p48 = scmp.ne.s32.totalorder %s43, %s45
    %p49 = scmp.eq.s32.totalorder %s9, 0
    %p50 = por %p48, %p49
    %p51 = scmp.ne.s32.totalorder %s43, %s45
    %p52 = scmp.eq.s32.totalorder %s14, 7
    %p53 = por %p51, %p52
    %p54 = scmp.ne.s32.totalorder %s45, %s46
    %p55 = scmp.eq.s32.totalorder %s14, 0
    %p56 = por %p54, %p55
    %p57 = scmp.ne.s32.totalorder %s45, %s46
    %p58 = scmp.eq.s32.totalorder %s15, 7
    %p59 = por %p57, %p58
    %p61 = scmp.ne.s32.totalorder %s46, %s60
    %p62 = scmp.eq.s32.totalorder %s15, 0
    %p63 = por %p61, %p62
    %s65 = sadd.s32 %s64, 1
    %p68 = scmp.eq.s32.totalorder %s9, 7
    %p69 = scmp.ne.s32.totalorder %s64, %s66
    %p70 = scmp.eq.s32.totalorder %s9, 0
    %p71 = por %p69, %p70
    %p72 = scmp.ne.s32.totalorder %s64, %s66
    %p73 = scmp.eq.s32.totalorder %s14, 7
    %p74 = por %p72, %p73
    %p75 = scmp.ne.s32.totalorder %s66, %s67
    %p76 = scmp.eq.s32.totalorder %s14, 0
    %p77 = por %p75, %p76
    %p78 = scmp.ne.s32.totalorder %s66, %s67
    %p79 = scmp.eq.s32.totalorder %s15, 7
    %p80 = por %p78, %p79
    %p82 = scmp.ne.s32.totalorder %s67, %s81
    %p83 = scmp.eq.s32.totalorder %s15, 0
    %p84 = por %p82, %p83
    %s85 = ssub.s32 %s9, %s16
    %p86 = scmp.eq.s32.totalorder %s85, 0
    %s88 = sadd.s32 %s87, 1
    %s89 = scalar_select %p86, %s87, %s88
    %p92 = pneg %p86
    %p93 = scmp.eq.s32.totalorder %s9, 7
    %p94 = por %p92, %p93
    %p95 = scmp.ne.s32.totalorder %s87, %s90
    %p96 = scmp.eq.s32.totalorder %s9, 0
    %p97 = por %p95, %p96
    %p98 = scmp.ne.s32.totalorder %s87, %s90
    %p99 = scmp.eq.s32.totalorder %s14, 7
    %p100 = por %p98, %p99
    %p101 = scmp.ne.s32.totalorder %s90, %s91
    %p102 = scmp.eq.s32.totalorder %s14, 0
    %p103 = por %p101, %p102
    %p104 = scmp.ne.s32.totalorder %s90, %s91
    %p105 = scmp.eq.s32.totalorder %s15, 7
    %p106 = por %p104, %p105
    %p108 = scmp.ne.s32.totalorder %s91, %s107
    %p109 = scmp.eq.s32.totalorder %s15, 0
    %p110 = por %p108, %p109
    %p111 = scmp.le.s32.totalorder 1, %s9
    %p112 = scmp.lt.s32.totalorder %s9, 9
    %p113 = pnand %p111, %p112
    %p114 = pneg %p113
    // Predicated region
    $region9: #{convgru_forward.5} parent=5 // pred_check
      _
    $region10: #{convgru_forward.5} parent=5 // pred_check_branch
      %116 = sbr.rel (%p113) target = $region12
    $region11: #{convgru_forward.5} parent=5 // pred_region
      %s117 = ssub.s32 %s9, 1
      // Predicated region
      $region13: #{convgru_forward.5} parent=11 // pred_check
        %p118 = pneg %p56
      $region14: #{convgru_forward.5} parent=11 // pred_check_branch
        %120 = sbr.rel (%p118) target = $region16
      $region15: #{convgru_forward.5} parent=11 // pred_region
        _
      $region16: #{convgru_forward.5} parent=11 // pred_fallthru
        _
      // Predicated region
      $region17: #{convgru_forward.5} parent=11 // pred_check
        %p121 = pneg %p77
      $region18: #{convgru_forward.5} parent=11 // pred_check_branch
        %123 = sbr.rel (%p121) target = $region20
      $region19: #{convgru_forward.5} parent=11 // pred_region
        _
      $region20: #{convgru_forward.5} parent=11 // pred_fallthru
        _
    $region12: #{convgru_forward.5} parent=5 // pred_fallthru
      _
    %p124 = scmp.lt.s32.totalorder %s9, 8
    // Predicated region
    $region21: #{convgru_forward.5} parent=5 // pred_check
      %p125 = pneg %p124
    $region22: #{convgru_forward.5} parent=5 // pred_check_branch
      %127 = sbr.rel (%p125) target = $region24
    $region23: #{convgru_forward.5} parent=5 // pred_region
      // Predicated region
      $region25: #{convgru_forward.5} parent=23 // pred_check
        %p128 = pneg %p29
      $region26: #{convgru_forward.5} parent=23 // pred_check_branch
        %130 = sbr.rel (%p128) target = $region28
      $region27: #{convgru_forward.5} parent=23 // pred_region
        %p131 = scmp.lt.s32.totalorder %s9, 7
        %s132 = scalar_select %p131, %s9, 7
        %s133 = smul.addr %s132, 16
        %s134 = smul.addr %s133, 8
        %s135 = scalar_lea.vmem %s0, %s134
      $region28: #{convgru_forward.5} parent=23 // pred_fallthru
        _
    $region24: #{convgru_forward.5} parent=5 // pred_fallthru
      _
    %p136 = scmp.le.s32.totalorder 1, %s9
    %p137 = scmp.lt.s32.totalorder %s9, 9
    %p138 = pnand %p136, %p137
    %p139 = pneg %p138
    // Predicated region
    $region29: #{convgru_forward.5} parent=5 // pred_check
      _
    $region30: #{convgru_forward.5} parent=5 // pred_check_branch
      %141 = sbr.rel (%p138) target = $region32
    $region31: #{convgru_forward.5} parent=5 // pred_region
      %s142 = ssub.s32 %s9, 1
      %p143 = scmp.lt.s32.totalorder %s14, 7
      %s144 = scalar_select %p143, %s14, 7
      %s145 = smul.addr %s144, 16
      %s146 = smul.addr %s145, 8
      %s147 = scalar_lea.vmem %s0, %s146
      %p148 = pneg %p35
      %p149 = pneg %p32
      %p150 = pneg %p56
      %p151 = pneg %p53
      %p152 = pneg %p77
      %p153 = pneg %p74
      %p154 = pneg %p103
      %p155 = pneg %p100
      %p156 = scmp.lt.s32.totalorder %s14, 7
      %s157 = scalar_select %p156, %s14, 7
      %s158 = smul.addr %s157, 16
      %s159 = smul.addr %s158, 8
      %s160 = scalar_lea.vmem %s3, %s159
      %p161 = scmp.lt.s32.totalorder %s14, 7
      %s162 = scalar_select %p161, %s14, 7
      %s163 = smul.addr %s162, 16
      %s164 = smul.addr %s163, 8
      %s165 = scalar_lea.vmem %s0, %s164
      %p166 = scmp.lt.s32.totalorder %s14, 7
      %s167 = scalar_select %p166, %s14, 7
      %s168 = smul.addr %s167, 16
      %s169 = smul.addr %s168, 8
      %s170 = scalar_lea.vmem %s3, %s169
      %p171 = scmp.eq.s32.totalorder %s14, 0
      // Predicated region
      $region33: #{convgru_forward.5} parent=31 // pred_check
        %p172 = pneg %p171
      $region34: #{convgru_forward.5} parent=31 // pred_check_branch
        %174 = sbr.rel (%p172) target = $region36
      $region35: #{convgru_forward.5} parent=31 // pred_region
        %vm175 = vcmask 261120
        %176 = vst.msk [vmem:[#allocation2] sm:$0xff] %vm175, 0.0
        %vm177 = vcmask 254976
        %178 = vst.msk [vmem:[#allocation2 + $0x8] sm:$0x3] %vm177, 0.0
        %179 = vst.msk [vmem:[#allocation2 + $0x10] sm:$0xff] %vm175, 0.0
        %180 = vst.msk [vmem:[#allocation2 + $0x18] sm:$0x3] %vm177, 0.0
        %181 = vst.msk [vmem:[#allocation2 + $0x20] sm:$0xff] %vm175, 0.0
        %182 = vst.msk [vmem:[#allocation2 + $0x28] sm:$0x3] %vm177, 0.0
        %183 = vst.msk [vmem:[#allocation2 + $0x30] sm:$0xff] %vm175, 0.0
        %184 = vst.msk [vmem:[#allocation2 + $0x38] sm:$0x3] %vm177, 0.0
        %185 = vst.msk [vmem:[#allocation2 + $0x40] sm:$0xff] %vm175, 0.0
        %186 = vst.msk [vmem:[#allocation2 + $0x48] sm:$0x3] %vm177, 0.0
        %187 = vst.msk [vmem:[#allocation2 + $0x50] sm:$0xff] %vm175, 0.0
        %188 = vst.msk [vmem:[#allocation2 + $0x58] sm:$0x3] %vm177, 0.0
        %189 = vst.msk [vmem:[#allocation2 + $0x60] sm:$0xff] %vm175, 0.0
        %190 = vst.msk [vmem:[#allocation2 + $0x68] sm:$0x3] %vm177, 0.0
        %191 = vst.msk [vmem:[#allocation2 + $0x70] sm:$0xff] %vm175, 0.0
        %192 = vst.msk [vmem:[#allocation2 + $0x78] sm:$0x3] %vm177, 0.0
        %193 = vst.msk [vmem:[#allocation2 + $0x80] sm:$0xff] %vm175, 0.0
        %194 = vst.msk [vmem:[#allocation2 + $0x88] sm:$0x3] %vm177, 0.0
        %195 = vst.msk [vmem:[#allocation2 + $0x90] sm:$0xff] %vm175, 0.0
        %196 = vst.msk [vmem:[#allocation2 + $0x98] sm:$0x3] %vm177, 0.0
        %197 = vst.msk [vmem:[#allocation2 + $0xa0] sm:$0xff] %vm175, 0.0
        %198 = vst.msk [vmem:[#allocation2 + $0xa8] sm:$0x3] %vm177, 0.0
        %199 = vst.msk [vmem:[#allocation2 + $0xb0] sm:$0xff] %vm175, 0.0
        %200 = vst.msk [vmem:[#allocation2 + $0xb8] sm:$0x3] %vm177, 0.0
        %201 = vst.msk [vmem:[#allocation2 + $0xc0] sm:$0xff] %vm175, 0.0
        %202 = vst.msk [vmem:[#allocation2 + $0xc8] sm:$0x3] %vm177, 0.0
        %203 = vst.msk [vmem:[#allocation2 + $0xd0] sm:$0xff] %vm175, 0.0
        %204 = vst.msk [vmem:[#allocation2 + $0xd8] sm:$0x3] %vm177, 0.0
        %205 = vst.msk [vmem:[#allocation2 + $0xe0] sm:$0xff] %vm175, 0.0
        %206 = vst.msk [vmem:[#allocation2 + $0xe8] sm:$0x3] %vm177, 0.0
        %207 = vst.msk [vmem:[#allocation2 + $0xf0] sm:$0xff] %vm175, 0.0
        %208 = vst.msk [vmem:[#allocation2 + $0xf8] sm:$0x3] %vm177, 0.0
        %209 = vst.msk [vmem:[#allocation2 + $0x100] sm:$0xff] %vm175, 0.0
        %210 = vst.msk [vmem:[#allocation2 + $0x108] sm:$0x3] %vm177, 0.0
        %211 = vst.msk [vmem:[#allocation2 + $0x110] sm:$0xff] %vm175, 0.0
        %212 = vst.msk [vmem:[#allocation2 + $0x118] sm:$0x3] %vm177, 0.0
        %213 = vst.msk [vmem:[#allocation2 + $0x120] sm:$0xff] %vm175, 0.0
        %214 = vst.msk [vmem:[#allocation2 + $0x128] sm:$0x3] %vm177, 0.0
        %215 = vst.msk [vmem:[#allocation2 + $0x130] sm:$0xff] %vm175, 0.0
        %216 = vst.msk [vmem:[#allocation2 + $0x138] sm:$0x3] %vm177, 0.0
      $region36: #{convgru_forward.5} parent=31 // pred_fallthru
        _
      %v217 = vld [vmem:[#allocation2] sm:$0xff]
      %v218 = vld [vmem:[#allocation2 + $0x8] sm:$0x3]
      %v219 = vld [vmem:[#allocation2 + $0x10] sm:$0xff]
      %v220 = vld [vmem:[#allocation2 + $0x18] sm:$0x3]
      %v221 = vld [vmem:[#allocation2 + $0x20] sm:$0xff]
      %v222 = vld [vmem:[#allocation2 + $0x28] sm:$0x3]
      %v223 = vld [vmem:[#allocation2 + $0x30] sm:$0xff]
      %v224 = vld [vmem:[#allocation2 + $0x38] sm:$0x3]
      %v225 = vld [vmem:[#allocation2 + $0x40] sm:$0xff]
      %v226 = vld [vmem:[#allocation2 + $0x48] sm:$0x3]
      %v227 = vld [vmem:[#allocation2 + $0x50] sm:$0xff]
      %v228 = vld [vmem:[#allocation2 + $0x58] sm:$0x3]
      %v229 = vld [vmem:[#allocation2 + $0x60] sm:$0xff]
      %v230 = vld [vmem:[#allocation2 + $0x68] sm:$0x3]
      %v231 = vld [vmem:[#allocation2 + $0x70] sm:$0xff]
      %v232 = vld [vmem:[#allocation2 + $0x78] sm:$0x3]
      %v233 = vld [vmem:[#allocation2 + $0x80] sm:$0xff]
      %v234 = vld [vmem:[#allocation2 + $0x88] sm:$0x3]
      %v235 = vld [vmem:[#allocation2 + $0x90] sm:$0xff]
      %v236 = vld [vmem:[#allocation2 + $0x98] sm:$0x3]
      %v237 = vld [vmem:[#allocation2 + $0xa0] sm:$0xff]
      %v238 = vld [vmem:[#allocation2 + $0xa8] sm:$0x3]
      %v239 = vld [vmem:[#allocation2 + $0xb0] sm:$0xff]
      %v240 = vld [vmem:[#allocation2 + $0xb8] sm:$0x3]
      %v241 = vld [vmem:[#allocation2 + $0xc0] sm:$0xff]
      %v242 = vld [vmem:[#allocation2 + $0xc8] sm:$0x3]
      %v243 = vld [vmem:[#allocation2 + $0xd0] sm:$0xff]
      %v244 = vld [vmem:[#allocation2 + $0xd8] sm:$0x3]
      %v245 = vld [vmem:[#allocation2 + $0xe0] sm:$0xff]
      %v246 = vld [vmem:[#allocation2 + $0xe8] sm:$0x3]
      %v247 = vld [vmem:[#allocation2 + $0xf0] sm:$0xff]
      %v248 = vld [vmem:[#allocation2 + $0xf8] sm:$0x3]
      %v249 = vld [vmem:[#allocation2 + $0x100] sm:$0xff]
      %v250 = vld [vmem:[#allocation2 + $0x108] sm:$0x3]
      %v251 = vld [vmem:[#allocation2 + $0x110] sm:$0xff]
      %v252 = vld [vmem:[#allocation2 + $0x118] sm:$0x3]
      %v253 = vld [vmem:[#allocation2 + $0x120] sm:$0xff]
      %v254 = vld [vmem:[#allocation2 + $0x128] sm:$0x3]
      %v255 = vld [vmem:[#allocation2 + $0x130] sm:$0xff]
      %v256 = vld [vmem:[#allocation2 + $0x138] sm:$0x3]
      %vm289 = vcmask 1046528
      %v290 = vrot.slane %v217, 1
      %v291 = vrot.slane %v218, 1
      %v292 = vsel %vm289, %v290, %v291
      %v293 = vrot.slane %v219, 1
      %v294 = vrot.slane %v220, 1
      %v295 = vsel %vm289, %v293, %v294
      %v296 = vrot.slane %v221, 1
      %v297 = vrot.slane %v222, 1
      %v298 = vsel %vm289, %v296, %v297
      %v299 = vrot.slane %v223, 1
      %v300 = vrot.slane %v224, 1
      %v301 = vsel %vm289, %v299, %v300
      %v302 = vrot.slane %v225, 1
      %v303 = vrot.slane %v226, 1
      %v304 = vsel %vm289, %v302, %v303
      %v305 = vrot.slane %v227, 1
      %v306 = vrot.slane %v228, 1
      %v307 = vsel %vm289, %v305, %v306
      %v308 = vrot.slane %v229, 1
      %v309 = vrot.slane %v230, 1
      %v310 = vsel %vm289, %v308, %v309
      %v311 = vrot.slane %v231, 1
      %v312 = vrot.slane %v232, 1
      %v313 = vsel %vm289, %v311, %v312
      %v314 = vrot.slane %v237, 1
      %v315 = vrot.slane %v238, 1
      %v316 = vsel %vm289, %v314, %v315
      %v317 = vrot.slane %v239, 1
      %v318 = vrot.slane %v240, 1
      %v319 = vsel %vm289, %v317, %v318
      %v320 = vrot.slane %v241, 1
      %v321 = vrot.slane %v242, 1
      %v322 = vsel %vm289, %v320, %v321
      %v323 = vrot.slane %v243, 1
      %v324 = vrot.slane %v244, 1
      %v325 = vsel %vm289, %v323, %v324
      %v326 = vrot.slane %v245, 1
      %v327 = vrot.slane %v246, 1
      %v328 = vsel %vm289, %v326, %v327
      %v329 = vrot.slane %v247, 1
      %v330 = vrot.slane %v248, 1
      %v331 = vsel %vm289, %v329, %v330
      %v332 = vrot.slane %v249, 1
      %v333 = vrot.slane %v250, 1
      %v334 = vsel %vm289, %v332, %v333
      %v335 = vrot.slane %v251, 1
      %v336 = vrot.slane %v252, 1
      %v337 = vsel %vm289, %v335, %v336
      %vm338 = vcmask 1045504
      %v339 = vrot.slane %v217, 2
      %v340 = vrot.slane %v218, 2
      %v341 = vsel %vm338, %v339, %v340
      %v342 = vrot.slane %v219, 2
      %v343 = vrot.slane %v220, 2
      %v344 = vsel %vm338, %v342, %v343
      %v345 = vrot.slane %v221, 2
      %v346 = vrot.slane %v222, 2
      %v347 = vsel %vm338, %v345, %v346
      %v348 = vrot.slane %v223, 2
      %v349 = vrot.slane %v224, 2
      %v350 = vsel %vm338, %v348, %v349
      %v351 = vrot.slane %v225, 2
      %v352 = vrot.slane %v226, 2
      %v353 = vsel %vm338, %v351, %v352
      %v354 = vrot.slane %v227, 2
      %v355 = vrot.slane %v228, 2
      %v356 = vsel %vm338, %v354, %v355
      %v357 = vrot.slane %v229, 2
      %v358 = vrot.slane %v230, 2
      %v359 = vsel %vm338, %v357, %v358
      %v360 = vrot.slane %v231, 2
      %v361 = vrot.slane %v232, 2
      %v362 = vsel %vm338, %v360, %v361
      %v363 = vrot.slane %v237, 2
      %v364 = vrot.slane %v238, 2
      %v365 = vsel %vm338, %v363, %v364
      %v366 = vrot.slane %v239, 2
      %v367 = vrot.slane %v240, 2
      %v368 = vsel %vm338, %v366, %v367
      %v369 = vrot.slane %v241, 2
      %v370 = vrot.slane %v242, 2
      %v371 = vsel %vm338, %v369, %v370
      %v372 = vrot.slane %v243, 2
      %v373 = vrot.slane %v244, 2
      %v374 = vsel %vm338, %v372, %v373
      %v375 = vrot.slane %v245, 2
      %v376 = vrot.slane %v246, 2
      %v377 = vsel %vm338, %v375, %v376
      %v378 = vrot.slane %v247, 2
      %v379 = vrot.slane %v248, 2
      %v380 = vsel %vm338, %v378, %v379
      %v381 = vrot.slane %v249, 2
      %v382 = vrot.slane %v250, 2
      %v383 = vsel %vm338, %v381, %v382
      %v384 = vrot.slane %v251, 2
      %v385 = vrot.slane %v252, 2
      %v386 = vsel %vm338, %v384, %v385
      %v391 = vrot.slane %v233, 1
      %v392 = vrot.slane %v234, 1
      %v393 = vsel %vm289, %v391, %v392
      %v394 = vrot.slane %v253, 1
      %v395 = vrot.slane %v254, 1
      %v396 = vsel %vm289, %v394, %v395
      %v413 = vrot.slane %v233, 2
      %v414 = vrot.slane %v234, 2
      %v415 = vsel %vm338, %v413, %v414
      %v416 = vrot.slane %v253, 2
      %v417 = vrot.slane %v254, 2
      %v418 = vsel %vm338, %v416, %v417
      %v423 = vrot.slane %v235, 1
      %v424 = vrot.slane %v236, 1
      %v425 = vsel %vm289, %v423, %v424
      %v426 = vrot.slane %v255, 1
      %v427 = vrot.slane %v256, 1
      %v428 = vsel %vm289, %v426, %v427
      %v429 = vrot.slane %v235, 2
      %v430 = vrot.slane %v236, 2
      %v431 = vsel %vm338, %v429, %v430
      %v432 = vrot.slane %v255, 2
      %v433 = vrot.slane %v256, 2
      %v434 = vsel %vm338, %v432, %v433
      %435 = vrot.lane.b32.xlu0 %v292, 32
      %v436 = vpop.permute.xlu0 %435
      %437 = vrot.lane.b32.xlu0 %v295, 32
      %v438 = vpop.permute.xlu0 %437
      %439 = vrot.lane.b32.xlu0 %v298, 32
      %v440 = vpop.permute.xlu0 %439
      %441 = vrot.lane.b32.xlu0 %v301, 32
      %v442 = vpop.permute.xlu0 %441
      %443 = vrot.lane.b32.xlu0 %v304, 32
      %v444 = vpop.permute.xlu0 %443
      %445 = vrot.lane.b32.xlu0 %v307, 32
      %v446 = vpop.permute.xlu0 %445
      %447 = vrot.lane.b32.xlu0 %v310, 32
      %v448 = vpop.permute.xlu0 %447
      %449 = vrot.lane.b32.xlu0 %v313, 32
      %v450 = vpop.permute.xlu0 %449
      %451 = vrot.lane.b32.xlu0 %v316, 32
      %v452 = vpop.permute.xlu0 %451
      %453 = vrot.lane.b32.xlu0 %v319, 32
      %v454 = vpop.permute.xlu0 %453
      %455 = vrot.lane.b32.xlu0 %v322, 32
      %v456 = vpop.permute.xlu0 %455
      %457 = vrot.lane.b32.xlu0 %v325, 32
      %v458 = vpop.permute.xlu0 %457
      %459 = vrot.lane.b32.xlu0 %v328, 32
      %v460 = vpop.permute.xlu0 %459
      %461 = vrot.lane.b32.xlu0 %v331, 32
      %v462 = vpop.permute.xlu0 %461
      %463 = vrot.lane.b32.xlu0 %v334, 32
      %v464 = vpop.permute.xlu0 %463
      %465 = vrot.lane.b32.xlu0 %v337, 32
      %v466 = vpop.permute.xlu0 %465
      %483 = vrot.lane.b32.xlu0 %v341, 64
      %v484 = vpop.permute.xlu0 %483
      %485 = vrot.lane.b32.xlu0 %v344, 64
      %v486 = vpop.permute.xlu0 %485
      %487 = vrot.lane.b32.xlu0 %v347, 64
      %v488 = vpop.permute.xlu0 %487
      %489 = vrot.lane.b32.xlu0 %v350, 64
      %v490 = vpop.permute.xlu0 %489
      %491 = vrot.lane.b32.xlu0 %v353, 64
      %v492 = vpop.permute.xlu0 %491
      %493 = vrot.lane.b32.xlu0 %v356, 64
      %v494 = vpop.permute.xlu0 %493
      %495 = vrot.lane.b32.xlu0 %v359, 64
      %v496 = vpop.permute.xlu0 %495
      %497 = vrot.lane.b32.xlu0 %v362, 64
      %v498 = vpop.permute.xlu0 %497
      %499 = vrot.lane.b32.xlu0 %v365, 64
      %v500 = vpop.permute.xlu0 %499
      %501 = vrot.lane.b32.xlu0 %v368, 64
      %v502 = vpop.permute.xlu0 %501
      %503 = vrot.lane.b32.xlu0 %v371, 64
      %v504 = vpop.permute.xlu0 %503
      %505 = vrot.lane.b32.xlu0 %v374, 64
      %v506 = vpop.permute.xlu0 %505
      %507 = vrot.lane.b32.xlu0 %v377, 64
      %v508 = vpop.permute.xlu0 %507
      %509 = vrot.lane.b32.xlu0 %v380, 64
      %v510 = vpop.permute.xlu0 %509
      %511 = vrot.lane.b32.xlu0 %v383, 64
      %v512 = vpop.permute.xlu0 %511
      %513 = vrot.lane.b32.xlu0 %v386, 64
      %v514 = vpop.permute.xlu0 %513
      %531 = vrot.lane.b32.xlu0 %v219, 96
      %v532 = vpop.permute.xlu0 %531
      %533 = vrot.lane.b32.xlu0 %v221, 96
      %v534 = vpop.permute.xlu0 %533
      %535 = vrot.lane.b32.xlu0 %v223, 96
      %v536 = vpop.permute.xlu0 %535
      %537 = vrot.lane.b32.xlu0 %v225, 96
      %v538 = vpop.permute.xlu0 %537
      %539 = vrot.lane.b32.xlu0 %v227, 96
      %v540 = vpop.permute.xlu0 %539
      %541 = vrot.lane.b32.xlu0 %v229, 96
      %v542 = vpop.permute.xlu0 %541
      %543 = vrot.lane.b32.xlu0 %v231, 96
      %v544 = vpop.permute.xlu0 %543
      %545 = vrot.lane.b32.xlu0 %v233, 96
      %v546 = vpop.permute.xlu0 %545
      %547 = vrot.lane.b32.xlu0 %v239, 96
      %v548 = vpop.permute.xlu0 %547
      %549 = vrot.lane.b32.xlu0 %v241, 96
      %v550 = vpop.permute.xlu0 %549
      %551 = vrot.lane.b32.xlu0 %v243, 96
      %v552 = vpop.permute.xlu0 %551
      %553 = vrot.lane.b32.xlu0 %v245, 96
      %v554 = vpop.permute.xlu0 %553
      %555 = vrot.lane.b32.xlu0 %v247, 96
      %v556 = vpop.permute.xlu0 %555
      %557 = vrot.lane.b32.xlu0 %v249, 96
      %v558 = vpop.permute.xlu0 %557
      %559 = vrot.lane.b32.xlu0 %v251, 96
      %v560 = vpop.permute.xlu0 %559
      %561 = vrot.lane.b32.xlu0 %v253, 96
      %v562 = vpop.permute.xlu0 %561
      %579 = vrot.lane.b32.xlu0 %v344, 32
      %v580 = vpop.permute.xlu0 %579
      %581 = vrot.lane.b32.xlu0 %v347, 32
      %v582 = vpop.permute.xlu0 %581
      %583 = vrot.lane.b32.xlu0 %v350, 32
      %v584 = vpop.permute.xlu0 %583
      %585 = vrot.lane.b32.xlu0 %v353, 32
      %v586 = vpop.permute.xlu0 %585
      %587 = vrot.lane.b32.xlu0 %v356, 32
      %v588 = vpop.permute.xlu0 %587
      %589 = vrot.lane.b32.xlu0 %v359, 32
      %v590 = vpop.permute.xlu0 %589
      %591 = vrot.lane.b32.xlu0 %v362, 32
      %v592 = vpop.permute.xlu0 %591
      %593 = vrot.lane.b32.xlu0 %v415, 32
      %v594 = vpop.permute.xlu0 %593
      %595 = vrot.lane.b32.xlu0 %v368, 32
      %v596 = vpop.permute.xlu0 %595
      %597 = vrot.lane.b32.xlu0 %v371, 32
      %v598 = vpop.permute.xlu0 %597
      %599 = vrot.lane.b32.xlu0 %v374, 32
      %v600 = vpop.permute.xlu0 %599
      %601 = vrot.lane.b32.xlu0 %v377, 32
      %v602 = vpop.permute.xlu0 %601
      %603 = vrot.lane.b32.xlu0 %v380, 32
      %v604 = vpop.permute.xlu0 %603
      %605 = vrot.lane.b32.xlu0 %v383, 32
      %v606 = vpop.permute.xlu0 %605
      %607 = vrot.lane.b32.xlu0 %v386, 32
      %v608 = vpop.permute.xlu0 %607
      %609 = vrot.lane.b32.xlu0 %v418, 32
      %v610 = vpop.permute.xlu0 %609
      %627 = vrot.lane.b32.xlu0 %v221, 64
      %v628 = vpop.permute.xlu0 %627
      %629 = vrot.lane.b32.xlu0 %v223, 64
      %v630 = vpop.permute.xlu0 %629
      %631 = vrot.lane.b32.xlu0 %v225, 64
      %v632 = vpop.permute.xlu0 %631
      %633 = vrot.lane.b32.xlu0 %v227, 64
      %v634 = vpop.permute.xlu0 %633
      %635 = vrot.lane.b32.xlu0 %v229, 64
      %v636 = vpop.permute.xlu0 %635
      %637 = vrot.lane.b32.xlu0 %v231, 64
      %v638 = vpop.permute.xlu0 %637
      %639 = vrot.lane.b32.xlu0 %v233, 64
      %v640 = vpop.permute.xlu0 %639
      %641 = vrot.lane.b32.xlu0 %v235, 64
      %v642 = vpop.permute.xlu0 %641
      %643 = vrot.lane.b32.xlu0 %v241, 64
      %v644 = vpop.permute.xlu0 %643
      %645 = vrot.lane.b32.xlu0 %v243, 64
      %v646 = vpop.permute.xlu0 %645
      %647 = vrot.lane.b32.xlu0 %v245, 64
      %v648 = vpop.permute.xlu0 %647
      %649 = vrot.lane.b32.xlu0 %v247, 64
      %v650 = vpop.permute.xlu0 %649
      %651 = vrot.lane.b32.xlu0 %v249, 64
      %v652 = vpop.permute.xlu0 %651
      %653 = vrot.lane.b32.xlu0 %v251, 64
      %v654 = vpop.permute.xlu0 %653
      %655 = vrot.lane.b32.xlu0 %v253, 64
      %v656 = vpop.permute.xlu0 %655
      %657 = vrot.lane.b32.xlu0 %v255, 64
      %v658 = vpop.permute.xlu0 %657
      %675 = vrot.lane.b32.xlu0 %v298, 96
      %v676 = vpop.permute.xlu0 %675
      %677 = vrot.lane.b32.xlu0 %v301, 96
      %v678 = vpop.permute.xlu0 %677
      %679 = vrot.lane.b32.xlu0 %v304, 96
      %v680 = vpop.permute.xlu0 %679
      %681 = vrot.lane.b32.xlu0 %v307, 96
      %v682 = vpop.permute.xlu0 %681
      %683 = vrot.lane.b32.xlu0 %v310, 96
      %v684 = vpop.permute.xlu0 %683
      %685 = vrot.lane.b32.xlu0 %v313, 96
      %v686 = vpop.permute.xlu0 %685
      %687 = vrot.lane.b32.xlu0 %v393, 96
      %v688 = vpop.permute.xlu0 %687
      %689 = vrot.lane.b32.xlu0 %v425, 96
      %v690 = vpop.permute.xlu0 %689
      %691 = vrot.lane.b32.xlu0 %v322, 96
      %v692 = vpop.permute.xlu0 %691
      %693 = vrot.lane.b32.xlu0 %v325, 96
      %v694 = vpop.permute.xlu0 %693
      %695 = vrot.lane.b32.xlu0 %v328, 96
      %v696 = vpop.permute.xlu0 %695
      %697 = vrot.lane.b32.xlu0 %v331, 96
      %v698 = vpop.permute.xlu0 %697
      %699 = vrot.lane.b32.xlu0 %v334, 96
      %v700 = vpop.permute.xlu0 %699
      %701 = vrot.lane.b32.xlu0 %v337, 96
      %v702 = vpop.permute.xlu0 %701
      %703 = vrot.lane.b32.xlu0 %v396, 96
      %v704 = vpop.permute.xlu0 %703
      %705 = vrot.lane.b32.xlu0 %v428, 96
      %v706 = vpop.permute.xlu0 %705
      %vm723 = vcmask 261120
      %v724 = vsel %vm723, %v217, %v436
      %v725 = vsel %vm723, %v219, %v438
      %v726 = vsel %vm723, %v221, %v440
      %v727 = vsel %vm723, %v223, %v442
      %v728 = vsel %vm723, %v225, %v444
      %v729 = vsel %vm723, %v227, %v446
      %v730 = vsel %vm723, %v229, %v448
      %v731 = vsel %vm723, %v231, %v450
      %v732 = vsel %vm723, %v237, %v452
      %v733 = vsel %vm723, %v239, %v454
      %v734 = vsel %vm723, %v241, %v456
      %v735 = vsel %vm723, %v243, %v458
      %v736 = vsel %vm723, %v245, %v460
      %v737 = vsel %vm723, %v247, %v462
      %v738 = vsel %vm723, %v249, %v464
      %v739 = vsel %vm723, %v251, %v466
      %vm740 = vcmask 523264
      %v741 = vsel %vm740, %v724, %v484
      %v742 = vsel %vm740, %v725, %v486
      %v743 = vsel %vm740, %v726, %v488
      %v744 = vsel %vm740, %v727, %v490
      %v745 = vsel %vm740, %v728, %v492
      %v746 = vsel %vm740, %v729, %v494
      %v747 = vsel %vm740, %v730, %v496
      %v748 = vsel %vm740, %v731, %v498
      %v749 = vsel %vm740, %v732, %v500
      %v750 = vsel %vm740, %v733, %v502
      %v751 = vsel %vm740, %v734, %v504
      %v752 = vsel %vm740, %v735, %v506
      %v753 = vsel %vm740, %v736, %v508
      %v754 = vsel %vm740, %v737, %v510
      %v755 = vsel %vm740, %v738, %v512
      %v756 = vsel %vm740, %v739, %v514
      %vm757 = vcmask 785408
      %v758 = vsel %vm757, %v741, %v532
      %v759 = vsel %vm757, %v742, %v534
      %v760 = vsel %vm757, %v743, %v536
      %v761 = vsel %vm757, %v744, %v538
      %v762 = vsel %vm757, %v745, %v540
      %v763 = vsel %vm757, %v746, %v542
      %v764 = vsel %vm757, %v747, %v544
      %v765 = vsel %vm757, %v748, %v546
      %v766 = vsel %vm757, %v749, %v548
      %v767 = vsel %vm757, %v750, %v550
      %v768 = vsel %vm757, %v751, %v552
      %v769 = vsel %vm757, %v752, %v554
      %v770 = vsel %vm757, %v753, %v556
      %v771 = vsel %vm757, %v754, %v558
      %v772 = vsel %vm757, %v755, %v560
      %v773 = vsel %vm757, %v756, %v562
      %v774 = vsel %vm723, %v295, %v580
      %v775 = vsel %vm723, %v298, %v582
      %v776 = vsel %vm723, %v301, %v584
      %v777 = vsel %vm723, %v304, %v586
      %v778 = vsel %vm723, %v307, %v588
      %v779 = vsel %vm723, %v310, %v590
      %v780 = vsel %vm723, %v313, %v592
      %v781 = vsel %vm723, %v393, %v594
      %v782 = vsel %vm723, %v319, %v596
      %v783 = vsel %vm723, %v322, %v598
      %v784 = vsel %vm723, %v325, %v600
      %v785 = vsel %vm723, %v328, %v602
      %v786 = vsel %vm723, %v331, %v604
      %v787 = vsel %vm723, %v334, %v606
      %v788 = vsel %vm723, %v337, %v608
      %v789 = vsel %vm723, %v396, %v610
      %v790 = vsel %vm740, %v774, %v628
      %v791 = vsel %vm740, %v775, %v630
      %v792 = vsel %vm740, %v776, %v632
      %v793 = vsel %vm740, %v777, %v634
      %v794 = vsel %vm740, %v778, %v636
      %v795 = vsel %vm740, %v779, %v638
      %v796 = vsel %vm740, %v780, %v640
      %v797 = vsel %vm740, %v781, %v642
      %v798 = vsel %vm740, %v782, %v644
      %v799 = vsel %vm740, %v783, %v646
      %v800 = vsel %vm740, %v784, %v648
      %v801 = vsel %vm740, %v785, %v650
      %v802 = vsel %vm740, %v786, %v652
      %v803 = vsel %vm740, %v787, %v654
      %v804 = vsel %vm740, %v788, %v656
      %v805 = vsel %vm740, %v789, %v658
      %v806 = vsel %vm757, %v790, %v676
      %v807 = vsel %vm757, %v791, %v678
      %v808 = vsel %vm757, %v792, %v680
      %v809 = vsel %vm757, %v793, %v682
      %v810 = vsel %vm757, %v794, %v684
      %v811 = vsel %vm757, %v795, %v686
      %v812 = vsel %vm757, %v796, %v688
      %v813 = vsel %vm757, %v797, %v690
      %v814 = vsel %vm757, %v798, %v692
      %v815 = vsel %vm757, %v799, %v694
      %v816 = vsel %vm757, %v800, %v696
      %v817 = vsel %vm757, %v801, %v698
      %v818 = vsel %vm757, %v802, %v700
      %v819 = vsel %vm757, %v803, %v702
      %v820 = vsel %vm757, %v804, %v704
      %v821 = vsel %vm757, %v805, %v706
      %v822 = vld [vmem:[%s1] sm:$0xff]
      %v823 = vld [vmem:[%s1 + $0x8] sm:$0xff]
      %v824 = vld [vmem:[%s1 + $0x10] sm:$0xff]
      %v825 = vld [vmem:[%s1 + $0x18] sm:$0xff]
      %v826 = vld [vmem:[%s1 + $0x20] sm:$0xff]
      %v827 = vld [vmem:[%s1 + $0x28] sm:$0xff]
      %v828 = vld [vmem:[%s1 + $0x30] sm:$0xff]
      %v829 = vld [vmem:[%s1 + $0x38] sm:$0xff]
      %v830 = vld [vmem:[%s1 + $0x40] sm:$0xff]
      %v831 = vld [vmem:[%s1 + $0x48] sm:$0xff]
      %v832 = vld [vmem:[%s1 + $0x50] sm:$0xff]
      %v833 = vld [vmem:[%s1 + $0x58] sm:$0xff]
      %v834 = vld [vmem:[%s1 + $0x60] sm:$0xff]
      %v835 = vld [vmem:[%s1 + $0x68] sm:$0xff]
      %v836 = vld [vmem:[%s1 + $0x70] sm:$0xff]
      %v837 = vld [vmem:[%s1 + $0x78] sm:$0xff]
      %v838 = vld [vmem:[%s1 + $0x80] sm:$0xff]
      %v839 = vld [vmem:[%s1 + $0x88] sm:$0xff]
      %v840 = vld [vmem:[%s1 + $0x90] sm:$0xff]
      %v841 = vld [vmem:[%s1 + $0x98] sm:$0xff]
      %v842 = vld [vmem:[%s1 + $0xa0] sm:$0xff]
      %v843 = vld [vmem:[%s1 + $0xa8] sm:$0xff]
      %v844 = vld [vmem:[%s1 + $0xb0] sm:$0xff]
      %v845 = vld [vmem:[%s1 + $0xb8] sm:$0xff]
      %v846 = vld [vmem:[%s1 + $0xc0] sm:$0xff]
      %v847 = vld [vmem:[%s1 + $0xc8] sm:$0xff]
      %v848 = vld [vmem:[%s1 + $0xd0] sm:$0xff]
      %v849 = vld [vmem:[%s1 + $0xd8] sm:$0xff]
      %v850 = vld [vmem:[%s1 + $0xe0] sm:$0xff]
      %v851 = vld [vmem:[%s1 + $0xe8] sm:$0xff]
      %v852 = vld [vmem:[%s1 + $0xf0] sm:$0xff]
      %v853 = vld [vmem:[%s1 + $0xf8] sm:$0xff]
      %v854 = vld [vmem:[%s1 + $0x100] sm:$0xff]
      %v855 = vld [vmem:[%s1 + $0x108] sm:$0xff]
      %v856 = vld [vmem:[%s1 + $0x110] sm:$0xff]
      %v857 = vld [vmem:[%s1 + $0x118] sm:$0xff]
      %v858 = vsel %vm723, %v347, 0
      %v860 = vsel %vm723, %v350, 0
      %v862 = vsel %vm723, %v353, 0
      %v864 = vsel %vm723, %v356, 0
      %v866 = vsel %vm723, %v359, 0
      %v868 = vsel %vm723, %v362, 0
      %v870 = vsel %vm723, %v415, 0
      %v872 = vsel %vm723, %v431, 0
      %v874 = vsel %vm723, %v371, 0
      %v876 = vsel %vm723, %v374, 0
      %v878 = vsel %vm723, %v377, 0
      %v880 = vsel %vm723, %v380, 0
      %v882 = vsel %vm723, %v383, 0
      %v884 = vsel %vm723, %v386, 0
      %v886 = vsel %vm723, %v418, 0
      %v888 = vsel %vm723, %v434, 0
      %890 = vmatpush.msra.mxu0 %v837
      %891 = vmatpush.msra.mxu0 %v836
      %892 = vmatpush.msra.mxu0 %v835
      %893 = vmatpush.msra.mxu0 %v834
      %894 = vmatpush.msra.mxu0 %v833
      %895 = vmatpush.msra.mxu0 %v832
      %896 = vmatpush.msra.mxu0 %v831
      %897 = vmatpush.msra.mxu0 %v830
      %898 = vmatpush.msra.mxu0 %v829
      %899 = vmatpush.msra.mxu0 %v828
      %900 = vmatpush.msra.mxu0 %v827
      %901 = vmatpush.msra.mxu0 %v826
      %902 = vmatpush.msra.mxu0 %v825
      %903 = vmatpush.msra.mxu0 %v824
      %904 = vmatpush.msra.mxu0 %v823
      %905 = vmatpush.msra.mxu0 %v822
      %906 = vmatmul.f32.gmra.mxu0 %v758
      %v907 = vpop.f32.mrf.mxu0
      %v908 = vadd.f32 0.0, %v907
      %909 = vmatmul.f32.gmra.mxu0 %v759
      %v910 = vpop.f32.mrf.mxu0
      %v911 = vadd.f32 0.0, %v910
      %912 = vmatmul.f32.gmra.mxu0 %v760
      %v913 = vpop.f32.mrf.mxu0
      %v914 = vadd.f32 0.0, %v913
      %915 = vmatmul.f32.gmra.mxu0 %v761
      %v916 = vpop.f32.mrf.mxu0
      %v917 = vadd.f32 0.0, %v916
      %918 = vmatmul.f32.gmra.mxu0 %v762
      %v919 = vpop.f32.mrf.mxu0
      %v920 = vadd.f32 0.0, %v919
      %921 = vmatmul.f32.gmra.mxu0 %v763
      %v922 = vpop.f32.mrf.mxu0
      %v923 = vadd.f32 0.0, %v922
      %924 = vmatmul.f32.gmra.mxu0 %v764
      %v925 = vpop.f32.mrf.mxu0
      %v926 = vadd.f32 0.0, %v925
      %927 = vmatmul.f32.gmra.mxu0 %v765
      %v928 = vpop.f32.mrf.mxu0
      %v929 = vadd.f32 0.0, %v928
      %930 = vmatmul.f32.gmra.mxu0 %v766
      %v931 = vpop.f32.mrf.mxu0
      %v932 = vadd.f32 0.0, %v931
      %933 = vmatmul.f32.gmra.mxu0 %v767
      %v934 = vpop.f32.mrf.mxu0
      %v935 = vadd.f32 0.0, %v934
      %936 = vmatmul.f32.gmra.mxu0 %v768
      %v937 = vpop.f32.mrf.mxu0
      %v938 = vadd.f32 0.0, %v937
      %939 = vmatmul.f32.gmra.mxu0 %v769
      %v940 = vpop.f32.mrf.mxu0
      %v941 = vadd.f32 0.0, %v940
      %942 = vmatmul.f32.gmra.mxu0 %v770
      %v943 = vpop.f32.mrf.mxu0
      %v944 = vadd.f32 0.0, %v943
      %945 = vmatmul.f32.gmra.mxu0 %v771
      %v946 = vpop.f32.mrf.mxu0
      %v947 = vadd.f32 0.0, %v946
      %948 = vmatmul.f32.gmra.mxu0 %v772
      %v949 = vpop.f32.mrf.mxu0
      %v950 = vadd.f32 0.0, %v949
      %951 = vmatmul.f32.gmra.mxu0 %v773
      %v952 = vpop.f32.mrf.mxu0
      %v953 = vadd.f32 0.0, %v952
      %954 = vdwg.mxu0
      %955 = vmatpush.msra.mxu0 %v853
      %956 = vmatpush.msra.mxu0 %v852
      %957 = vmatpush.msra.mxu0 %v851
      %958 = vmatpush.msra.mxu0 %v850
      %959 = vmatpush.msra.mxu0 %v849
      %960 = vmatpush.msra.mxu0 %v848
      %961 = vmatpush.msra.mxu0 %v847
      %962 = vmatpush.msra.mxu0 %v846
      %963 = vmatpush.msra.mxu0 %v845
      %964 = vmatpush.msra.mxu0 %v844
      %965 = vmatpush.msra.mxu0 %v843
      %966 = vmatpush.msra.mxu0 %v842
      %967 = vmatpush.msra.mxu0 %v841
      %968 = vmatpush.msra.mxu0 %v840
      %969 = vmatpush.msra.mxu0 %v839
      %970 = vmatpush.msra.mxu0 %v838
      %971 = vmatmul.f32.gmra.mxu0 %v806
      %v972 = vpop.f32.mrf.mxu0
      %v973 = vadd.f32 %v908, %v972
      %974 = vmatmul.f32.gmra.mxu0 %v807
      %v975 = vpop.f32.mrf.mxu0
      %v976 = vadd.f32 %v911, %v975
      %977 = vmatmul.f32.gmra.mxu0 %v808
      %v978 = vpop.f32.mrf.mxu0
      %v979 = vadd.f32 %v914, %v978
      %980 = vmatmul.f32.gmra.mxu0 %v809
      %v981 = vpop.f32.mrf.mxu0
      %v982 = vadd.f32 %v917, %v981
      %983 = vmatmul.f32.gmra.mxu0 %v810
      %v984 = vpop.f32.mrf.mxu0
      %v985 = vadd.f32 %v920, %v984
      %986 = vmatmul.f32.gmra.mxu0 %v811
      %v987 = vpop.f32.mrf.mxu0
      %v988 = vadd.f32 %v923, %v987
      %989 = vmatmul.f32.gmra.mxu0 %v812
      %v990 = vpop.f32.mrf.mxu0
      %v991 = vadd.f32 %v926, %v990
      %992 = vmatmul.f32.gmra.mxu0 %v813
      %v993 = vpop.f32.mrf.mxu0
      %v994 = vadd.f32 %v929, %v993
      %995 = vmatmul.f32.gmra.mxu0 %v814
      %v996 = vpop.f32.mrf.mxu0
      %v997 = vadd.f32 %v932, %v996
      %998 = vmatmul.f32.gmra.mxu0 %v815
      %v999 = vpop.f32.mrf.mxu0
      %v1000 = vadd.f32 %v935, %v999
      %1001 = vmatmul.f32.gmra.mxu0 %v816
      %v1002 = vpop.f32.mrf.mxu0
      %v1003 = vadd.f32 %v938, %v1002
      %1004 = vmatmul.f32.gmra.mxu0 %v817
      %v1005 = vpop.f32.mrf.mxu0
      %v1006 = vadd.f32 %v941, %v1005
      %1007 = vmatmul.f32.gmra.mxu0 %v818
      %v1008 = vpop.f32.mrf.mxu0
      %v1009 = vadd.f32 %v944, %v1008
      %1010 = vmatmul.f32.gmra.mxu0 %v819
      %v1011 = vpop.f32.mrf.mxu0
      %v1012 = vadd.f32 %v947, %v1011
      %1013 = vmatmul.f32.gmra.mxu0 %v820
      %v1014 = vpop.f32.mrf.mxu0
      %v1015 = vadd.f32 %v950, %v1014
      %1016 = vmatmul.f32.gmra.mxu0 %v821
      %v1017 = vpop.f32.mrf.mxu0
      %v1018 = vadd.f32 %v953, %v1017
      %1019 = vdwg.mxu0
      %1020 = vmatpush.msra.mxu0 0.0
      %1021 = vmatpush.msra.mxu0 0.0
      %1022 = vmatpush.msra.mxu0 0.0
      %1023 = vmatpush.msra.mxu0 0.0
      %1024 = vmatpush.msra.mxu0 0.0
      %1025 = vmatpush.msra.mxu0 0.0
      %1026 = vmatpush.msra.mxu0 0.0
      %1027 = vmatpush.msra.mxu0 0.0
      %1028 = vmatpush.msra.mxu0 0.0
      %1029 = vmatpush.msra.mxu0 0.0
      %1030 = vmatpush.msra.mxu0 0.0
      %1031 = vmatpush.msra.mxu0 0.0
      %1032 = vmatpush.msra.mxu0 %v857
      %1033 = vmatpush.msra.mxu0 %v856
      %1034 = vmatpush.msra.mxu0 %v855
      %1035 = vmatpush.msra.mxu0 %v854
      %1036 = vmatmul.f32.gmra.mxu0 %v858
      %v1037 = vpop.f32.mrf.mxu0
      %v1038 = vadd.f32 %v973, %v1037
      %1039 = vmatmul.f32.gmra.mxu0 %v860
      %v1040 = vpop.f32.mrf.mxu0
      %v1041 = vadd.f32 %v976, %v1040
      %1042 = vmatmul.f32.gmra.mxu0 %v862
      %v1043 = vpop.f32.mrf.mxu0
      %v1044 = vadd.f32 %v979, %v1043
      %1045 = vmatmul.f32.gmra.mxu0 %v864
      %v1046 = vpop.f32.mrf.mxu0
      %v1047 = vadd.f32 %v982, %v1046
      %1048 = vmatmul.f32.gmra.mxu0 %v866
      %v1049 = vpop.f32.mrf.mxu0
      %v1050 = vadd.f32 %v985, %v1049
      %1051 = vmatmul.f32.gmra.mxu0 %v868
      %v1052 = vpop.f32.mrf.mxu0
      %v1053 = vadd.f32 %v988, %v1052
      %1054 = vmatmul.f32.gmra.mxu0 %v870
      %v1055 = vpop.f32.mrf.mxu0
      %v1056 = vadd.f32 %v991, %v1055
      %1057 = vmatmul.f32.gmra.mxu0 %v872
      %v1058 = vpop.f32.mrf.mxu0
      %v1059 = vadd.f32 %v994, %v1058
      %1060 = vmatmul.f32.gmra.mxu0 %v874
      %v1061 = vpop.f32.mrf.mxu0
      %v1062 = vadd.f32 %v997, %v1061
      %1063 = vmatmul.f32.gmra.mxu0 %v876
      %v1064 = vpop.f32.mrf.mxu0
      %v1065 = vadd.f32 %v1000, %v1064
      %1066 = vmatmul.f32.gmra.mxu0 %v878
      %v1067 = vpop.f32.mrf.mxu0
      %v1068 = vadd.f32 %v1003, %v1067
      %1069 = vmatmul.f32.gmra.mxu0 %v880
      %v1070 = vpop.f32.mrf.mxu0
      %v1071 = vadd.f32 %v1006, %v1070
      %1072 = vmatmul.f32.gmra.mxu0 %v882
      %v1073 = vpop.f32.mrf.mxu0
      %v1074 = vadd.f32 %v1009, %v1073
      %1075 = vmatmul.f32.gmra.mxu0 %v884
      %v1076 = vpop.f32.mrf.mxu0
      %v1077 = vadd.f32 %v1012, %v1076
      %1078 = vmatmul.f32.gmra.mxu0 %v886
      %v1079 = vpop.f32.mrf.mxu0
      %v1080 = vadd.f32 %v1015, %v1079
      %1081 = vmatmul.f32.gmra.mxu0 %v888
      %v1082 = vpop.f32.mrf.mxu0
      %v1083 = vadd.f32 %v1018, %v1082
      %1084 = vdwg.mxu0
      %v1085 = vld [vmem:[%s165] sm:$0xff]
      %v1086 = vld [vmem:[%s165 + $0x8] sm:$0xff]
      %v1087 = vld [vmem:[%s165 + $0x10] sm:$0xff]
      %v1088 = vld [vmem:[%s165 + $0x18] sm:$0xff]
      %v1089 = vld [vmem:[%s165 + $0x20] sm:$0xff]
      %v1090 = vld [vmem:[%s165 + $0x28] sm:$0xff]
      %v1091 = vld [vmem:[%s165 + $0x30] sm:$0xff]
      %v1092 = vld [vmem:[%s165 + $0x38] sm:$0xff]
      %v1093 = vld [vmem:[%s165 + $0x40] sm:$0xff]
      %v1094 = vld [vmem:[%s165 + $0x48] sm:$0xff]
      %v1095 = vld [vmem:[%s165 + $0x50] sm:$0xff]
      %v1096 = vld [vmem:[%s165 + $0x58] sm:$0xff]
      %v1097 = vld [vmem:[%s165 + $0x60] sm:$0xff]
      %v1098 = vld [vmem:[%s165 + $0x68] sm:$0xff]
      %v1099 = vld [vmem:[%s165 + $0x70] sm:$0xff]
      %v1100 = vld [vmem:[%s165 + $0x78] sm:$0xff]
      %v1101 = vadd.f32 %v1085, %v1038
      %v1102 = vadd.f32 %v1086, %v1041
      %v1103 = vadd.f32 %v1087, %v1044
      %v1104 = vadd.f32 %v1088, %v1047
      %v1105 = vadd.f32 %v1089, %v1050
      %v1106 = vadd.f32 %v1090, %v1053
      %v1107 = vadd.f32 %v1091, %v1056
      %v1108 = vadd.f32 %v1092, %v1059
      %v1109 = vadd.f32 %v1093, %v1062
      %v1110 = vadd.f32 %v1094, %v1065
      %v1111 = vadd.f32 %v1095, %v1068
      %v1112 = vadd.f32 %v1096, %v1071
      %v1113 = vadd.f32 %v1097, %v1074
      %v1114 = vadd.f32 %v1098, %v1077
      %v1115 = vadd.f32 %v1099, %v1080
      %v1116 = vadd.f32 %v1100, %v1083
      %v1117 = vxor.u32 %v1101, 2147483648
      %v1118 = vxor.u32 %v1102, 2147483648
      %v1119 = vxor.u32 %v1103, 2147483648
      %v1120 = vxor.u32 %v1104, 2147483648
      %v1121 = vxor.u32 %v1105, 2147483648
      %v1122 = vxor.u32 %v1106, 2147483648
      %v1123 = vxor.u32 %v1107, 2147483648
      %v1124 = vxor.u32 %v1108, 2147483648
      %v1125 = vxor.u32 %v1109, 2147483648
      %v1126 = vxor.u32 %v1110, 2147483648
      %v1127 = vxor.u32 %v1111, 2147483648
      %v1128 = vxor.u32 %v1112, 2147483648
      %v1129 = vxor.u32 %v1113, 2147483648
      %v1130 = vxor.u32 %v1114, 2147483648
      %v1131 = vxor.u32 %v1115, 2147483648
      %v1132 = vxor.u32 %v1116, 2147483648
      %v1133 = vmul.f32 %v1117, 1.442695
      %v1134 = vpow.pop %v1133
      %v1135 = vmul.f32 %v1118, 1.442695
      %v1136 = vpow.pop %v1135
      %v1137 = vmul.f32 %v1119, 1.442695
      %v1138 = vpow.pop %v1137
      %v1139 = vmul.f32 %v1120, 1.442695
      %v1140 = vpow.pop %v1139
      %v1141 = vmul.f32 %v1121, 1.442695
      %v1142 = vpow.pop %v1141
      %v1143 = vmul.f32 %v1122, 1.442695
      %v1144 = vpow.pop %v1143
      %v1145 = vmul.f32 %v1123, 1.442695
      %v1146 = vpow.pop %v1145
      %v1147 = vmul.f32 %v1124, 1.442695
      %v1148 = vpow.pop %v1147
      %v1149 = vmul.f32 %v1125, 1.442695
      %v1150 = vpow.pop %v1149
      %v1151 = vmul.f32 %v1126, 1.442695
      %v1152 = vpow.pop %v1151
      %v1153 = vmul.f32 %v1127, 1.442695
      %v1154 = vpow.pop %v1153
      %v1155 = vmul.f32 %v1128, 1.442695
      %v1156 = vpow.pop %v1155
      %v1157 = vmul.f32 %v1129, 1.442695
      %v1158 = vpow.pop %v1157
      %v1159 = vmul.f32 %v1130, 1.442695
      %v1160 = vpow.pop %v1159
      %v1161 = vmul.f32 %v1131, 1.442695
      %v1162 = vpow.pop %v1161
      %v1163 = vmul.f32 %v1132, 1.442695
      %v1164 = vpow.pop %v1163
      %v1165 = vadd.f32 %v1134, 1.0
      %v1166 = vadd.f32 %v1136, 1.0
      %v1167 = vadd.f32 %v1138, 1.0
      %v1168 = vadd.f32 %v1140, 1.0
      %v1169 = vadd.f32 %v1142, 1.0
      %v1170 = vadd.f32 %v1144, 1.0
      %v1171 = vadd.f32 %v1146, 1.0
      %v1172 = vadd.f32 %v1148, 1.0
      %v1173 = vadd.f32 %v1150, 1.0
      %v1174 = vadd.f32 %v1152, 1.0
      %v1175 = vadd.f32 %v1154, 1.0
      %v1176 = vadd.f32 %v1156, 1.0
      %v1177 = vadd.f32 %v1158, 1.0
      %v1178 = vadd.f32 %v1160, 1.0
      %v1179 = vadd.f32 %v1162, 1.0
      %v1180 = vadd.f32 %v1164, 1.0
      %v1181 = vrcp.pop %v1165
      %v1182 = vmul.f32 %v1165, %v1181
      %v1183 = vsub.f32 1.0, %v1182
      %v1184 = vmul.f32 %v1181, %v1183
      %v1185 = vadd.f32 %v1181, %v1184
      %vm1186 = vweird.f32 %v1165
      %vm1187 = vweird.f32 %v1181
      %vm1188 = vmor %vm1186, %vm1187
      %v1189 = vsel %vm1188, %v1181, %v1185
      %v1190 = vand.u32 2147483647, %v1165
      %vm1191 = vcmp.eq.f32.partialorder %v1190, 8.507059e+37
      %v1192 = vand.u32 %v1165, 2147483648
      %v1193 = vor.u32 1.1754944e-38, %v1192
      %v1194 = vsel %vm1191, %v1193, %v1189
      %v1195 = vmul.f32 1.0, %v1194
      %v1196 = vrcp.pop %v1166
      %v1197 = vmul.f32 %v1166, %v1196
      %v1198 = vsub.f32 1.0, %v1197
      %v1199 = vmul.f32 %v1196, %v1198
      %v1200 = vadd.f32 %v1196, %v1199
      %vm1201 = vweird.f32 %v1166
      %vm1202 = vweird.f32 %v1196
      %vm1203 = vmor %vm1201, %vm1202
      %v1204 = vsel %vm1203, %v1196, %v1200
      %v1205 = vand.u32 2147483647, %v1166
      %vm1206 = vcmp.eq.f32.partialorder %v1205, 8.507059e+37
      %v1207 = vand.u32 %v1166, 2147483648
      %v1208 = vor.u32 1.1754944e-38, %v1207
      %v1209 = vsel %vm1206, %v1208, %v1204
      %v1210 = vmul.f32 1.0, %v1209
      %v1211 = vrcp.pop %v1167
      %v1212 = vmul.f32 %v1167, %v1211
      %v1213 = vsub.f32 1.0, %v1212
      %v1214 = vmul.f32 %v1211, %v1213
      %v1215 = vadd.f32 %v1211, %v1214
      %vm1216 = vweird.f32 %v1167
      %vm1217 = vweird.f32 %v1211
      %vm1218 = vmor %vm1216, %vm1217
      %v1219 = vsel %vm1218, %v1211, %v1215
      %v1220 = vand.u32 2147483647, %v1167
      %vm1221 = vcmp.eq.f32.partialorder %v1220, 8.507059e+37
      %v1222 = vand.u32 %v1167, 2147483648
      %v1223 = vor.u32 1.1754944e-38, %v1222
      %v1224 = vsel %vm1221, %v1223, %v1219
      %v1225 = vmul.f32 1.0, %v1224
      %v1226 = vrcp.pop %v1168
      %v1227 = vmul.f32 %v1168, %v1226
      %v1228 = vsub.f32 1.0, %v1227
      %v1229 = vmul.f32 %v1226, %v1228
      %v1230 = vadd.f32 %v1226, %v1229
      %vm1231 = vweird.f32 %v1168
      %vm1232 = vweird.f32 %v1226
      %vm1233 = vmor %vm1231, %vm1232
      %v1234 = vsel %vm1233, %v1226, %v1230
      %v1235 = vand.u32 2147483647, %v1168
      %vm1236 = vcmp.eq.f32.partialorder %v1235, 8.507059e+37
      %v1237 = vand.u32 %v1168, 2147483648
      %v1238 = vor.u32 1.1754944e-38, %v1237
      %v1239 = vsel %vm1236, %v1238, %v1234
      %v1240 = vmul.f32 1.0, %v1239
      %v1241 = vrcp.pop %v1169
      %v1242 = vmul.f32 %v1169, %v1241
      %v1243 = vsub.f32 1.0, %v1242
      %v1244 = vmul.f32 %v1241, %v1243
      %v1245 = vadd.f32 %v1241, %v1244
      %vm1246 = vweird.f32 %v1169
      %vm1247 = vweird.f32 %v1241
      %vm1248 = vmor %vm1246, %vm1247
      %v1249 = vsel %vm1248, %v1241, %v1245
      %v1250 = vand.u32 2147483647, %v1169
      %vm1251 = vcmp.eq.f32.partialorder %v1250, 8.507059e+37
      %v1252 = vand.u32 %v1169, 2147483648
      %v1253 = vor.u32 1.1754944e-38, %v1252
      %v1254 = vsel %vm1251, %v1253, %v1249
      %v1255 = vmul.f32 1.0, %v1254
      %v1256 = vrcp.pop %v1170
      %v1257 = vmul.f32 %v1170, %v1256
      %v1258 = vsub.f32 1.0, %v1257
      %v1259 = vmul.f32 %v1256, %v1258
      %v1260 = vadd.f32 %v1256, %v1259
      %vm1261 = vweird.f32 %v1170
      %vm1262 = vweird.f32 %v1256
      %vm1263 = vmor %vm1261, %vm1262
      %v1264 = vsel %vm1263, %v1256, %v1260
      %v1265 = vand.u32 2147483647, %v1170
      %vm1266 = vcmp.eq.f32.partialorder %v1265, 8.507059e+37
      %v1267 = vand.u32 %v1170, 2147483648
      %v1268 = vor.u32 1.1754944e-38, %v1267
      %v1269 = vsel %vm1266, %v1268, %v1264
      %v1270 = vmul.f32 1.0, %v1269
      %v1271 = vrcp.pop %v1171
      %v1272 = vmul.f32 %v1171, %v1271
      %v1273 = vsub.f32 1.0, %v1272
      %v1274 = vmul.f32 %v1271, %v1273
      %v1275 = vadd.f32 %v1271, %v1274
      %vm1276 = vweird.f32 %v1171
      %vm1277 = vweird.f32 %v1271
      %vm1278 = vmor %vm1276, %vm1277
      %v1279 = vsel %vm1278, %v1271, %v1275
      %v1280 = vand.u32 2147483647, %v1171
      %vm1281 = vcmp.eq.f32.partialorder %v1280, 8.507059e+37
      %v1282 = vand.u32 %v1171, 2147483648
      %v1283 = vor.u32 1.1754944e-38, %v1282
      %v1284 = vsel %vm1281, %v1283, %v1279
      %v1285 = vmul.f32 1.0, %v1284
      %v1286 = vrcp.pop %v1172
      %v1287 = vmul.f32 %v1172, %v1286
      %v1288 = vsub.f32 1.0, %v1287
      %v1289 = vmul.f32 %v1286, %v1288
      %v1290 = vadd.f32 %v1286, %v1289
      %vm1291 = vweird.f32 %v1172
      %vm1292 = vweird.f32 %v1286
      %vm1293 = vmor %vm1291, %vm1292
      %v1294 = vsel %vm1293, %v1286, %v1290
      %v1295 = vand.u32 2147483647, %v1172
      %vm1296 = vcmp.eq.f32.partialorder %v1295, 8.507059e+37
      %v1297 = vand.u32 %v1172, 2147483648
      %v1298 = vor.u32 1.1754944e-38, %v1297
      %v1299 = vsel %vm1296, %v1298, %v1294
      %v1300 = vmul.f32 1.0, %v1299
      %v1301 = vrcp.pop %v1173
      %v1302 = vmul.f32 %v1173, %v1301
      %v1303 = vsub.f32 1.0, %v1302
      %v1304 = vmul.f32 %v1301, %v1303
      %v1305 = vadd.f32 %v1301, %v1304
      %vm1306 = vweird.f32 %v1173
      %vm1307 = vweird.f32 %v1301
      %vm1308 = vmor %vm1306, %vm1307
      %v1309 = vsel %vm1308, %v1301, %v1305
      %v1310 = vand.u32 2147483647, %v1173
      %vm1311 = vcmp.eq.f32.partialorder %v1310, 8.507059e+37
      %v1312 = vand.u32 %v1173, 2147483648
      %v1313 = vor.u32 1.1754944e-38, %v1312
      %v1314 = vsel %vm1311, %v1313, %v1309
      %v1315 = vmul.f32 1.0, %v1314
      %v1316 = vrcp.pop %v1174
      %v1317 = vmul.f32 %v1174, %v1316
      %v1318 = vsub.f32 1.0, %v1317
      %v1319 = vmul.f32 %v1316, %v1318
      %v1320 = vadd.f32 %v1316, %v1319
      %vm1321 = vweird.f32 %v1174
      %vm1322 = vweird.f32 %v1316
      %vm1323 = vmor %vm1321, %vm1322
      %v1324 = vsel %vm1323, %v1316, %v1320
      %v1325 = vand.u32 2147483647, %v1174
      %vm1326 = vcmp.eq.f32.partialorder %v1325, 8.507059e+37
      %v1327 = vand.u32 %v1174, 2147483648
      %v1328 = vor.u32 1.1754944e-38, %v1327
      %v1329 = vsel %vm1326, %v1328, %v1324
      %v1330 = vmul.f32 1.0, %v1329
      %v1331 = vrcp.pop %v1175
      %v1332 = vmul.f32 %v1175, %v1331
      %v1333 = vsub.f32 1.0, %v1332
      %v1334 = vmul.f32 %v1331, %v1333
      %v1335 = vadd.f32 %v1331, %v1334
      %vm1336 = vweird.f32 %v1175
      %vm1337 = vweird.f32 %v1331
      %vm1338 = vmor %vm1336, %vm1337
      %v1339 = vsel %vm1338, %v1331, %v1335
      %v1340 = vand.u32 2147483647, %v1175
      %vm1341 = vcmp.eq.f32.partialorder %v1340, 8.507059e+37
      %v1342 = vand.u32 %v1175, 2147483648
      %v1343 = vor.u32 1.1754944e-38, %v1342
      %v1344 = vsel %vm1341, %v1343, %v1339
      %v1345 = vmul.f32 1.0, %v1344
      %v1346 = vrcp.pop %v1176
      %v1347 = vmul.f32 %v1176, %v1346
      %v1348 = vsub.f32 1.0, %v1347
      %v1349 = vmul.f32 %v1346, %v1348
      %v1350 = vadd.f32 %v1346, %v1349
      %vm1351 = vweird.f32 %v1176
      %vm1352 = vweird.f32 %v1346
      %vm1353 = vmor %vm1351, %vm1352
      %v1354 = vsel %vm1353, %v1346, %v1350
      %v1355 = vand.u32 2147483647, %v1176
      %vm1356 = vcmp.eq.f32.partialorder %v1355, 8.507059e+37
      %v1357 = vand.u32 %v1176, 2147483648
      %v1358 = vor.u32 1.1754944e-38, %v1357
      %v1359 = vsel %vm1356, %v1358, %v1354
      %v1360 = vmul.f32 1.0, %v1359
      %v1361 = vrcp.pop %v1177
      %v1362 = vmul.f32 %v1177, %v1361
      %v1363 = vsub.f32 1.0, %v1362
      %v1364 = vmul.f32 %v1361, %v1363
      %v1365 = vadd.f32 %v1361, %v1364
      %vm1366 = vweird.f32 %v1177
      %vm1367 = vweird.f32 %v1361
      %vm1368 = vmor %vm1366, %vm1367
      %v1369 = vsel %vm1368, %v1361, %v1365
      %v1370 = vand.u32 2147483647, %v1177
      %vm1371 = vcmp.eq.f32.partialorder %v1370, 8.507059e+37
      %v1372 = vand.u32 %v1177, 2147483648
      %v1373 = vor.u32 1.1754944e-38, %v1372
      %v1374 = vsel %vm1371, %v1373, %v1369
      %v1375 = vmul.f32 1.0, %v1374
      %v1376 = vrcp.pop %v1178
      %v1377 = vmul.f32 %v1178, %v1376
      %v1378 = vsub.f32 1.0, %v1377
      %v1379 = vmul.f32 %v1376, %v1378
      %v1380 = vadd.f32 %v1376, %v1379
      %vm1381 = vweird.f32 %v1178
      %vm1382 = vweird.f32 %v1376
      %vm1383 = vmor %vm1381, %vm1382
      %v1384 = vsel %vm1383, %v1376, %v1380
      %v1385 = vand.u32 2147483647, %v1178
      %vm1386 = vcmp.eq.f32.partialorder %v1385, 8.507059e+37
      %v1387 = vand.u32 %v1178, 2147483648
      %v1388 = vor.u32 1.1754944e-38, %v1387
      %v1389 = vsel %vm1386, %v1388, %v1384
      %v1390 = vmul.f32 1.0, %v1389
      %v1391 = vrcp.pop %v1179
      %v1392 = vmul.f32 %v1179, %v1391
      %v1393 = vsub.f32 1.0, %v1392
      %v1394 = vmul.f32 %v1391, %v1393
      %v1395 = vadd.f32 %v1391, %v1394
      %vm1396 = vweird.f32 %v1179
      %vm1397 = vweird.f32 %v1391
      %vm1398 = vmor %vm1396, %vm1397
      %v1399 = vsel %vm1398, %v1391, %v1395
      %v1400 = vand.u32 2147483647, %v1179
      %vm1401 = vcmp.eq.f32.partialorder %v1400, 8.507059e+37
      %v1402 = vand.u32 %v1179, 2147483648
      %v1403 = vor.u32 1.1754944e-38, %v1402
      %v1404 = vsel %vm1401, %v1403, %v1399
      %v1405 = vmul.f32 1.0, %v1404
      %v1406 = vrcp.pop %v1180
      %v1407 = vmul.f32 %v1180, %v1406
      %v1408 = vsub.f32 1.0, %v1407
      %v1409 = vmul.f32 %v1406, %v1408
      %v1410 = vadd.f32 %v1406, %v1409
      %vm1411 = vweird.f32 %v1180
      %vm1412 = vweird.f32 %v1406
      %vm1413 = vmor %vm1411, %vm1412
      %v1414 = vsel %vm1413, %v1406, %v1410
      %v1415 = vand.u32 2147483647, %v1180
      %vm1416 = vcmp.eq.f32.partialorder %v1415, 8.507059e+37
      %v1417 = vand.u32 %v1180, 2147483648
      %v1418 = vor.u32 1.1754944e-38, %v1417
      %v1419 = vsel %vm1416, %v1418, %v1414
      %v1420 = vmul.f32 1.0, %v1419
      %v1421 = vld [vmem:[%s2] sm:$0x1]
      %v1423 = vperm.slane %v1421, 0
      %1424 = vrot.lane.b32.xlu0 %v1423, 64
      %v1425 = vpop.permute.xlu0 %1424
      %v1427 = vadd.f32 %v1038, %v1425
      %v1428 = vadd.f32 %v1041, %v1425
      %v1429 = vadd.f32 %v1044, %v1425
      %v1430 = vadd.f32 %v1047, %v1425
      %v1431 = vadd.f32 %v1050, %v1425
      %v1432 = vadd.f32 %v1053, %v1425
      %v1433 = vadd.f32 %v1056, %v1425
      %v1434 = vadd.f32 %v1059, %v1425
      %v1435 = vadd.f32 %v1062, %v1425
      %v1436 = vadd.f32 %v1065, %v1425
      %v1437 = vadd.f32 %v1068, %v1425
      %v1438 = vadd.f32 %v1071, %v1425
      %v1439 = vadd.f32 %v1074, %v1425
      %v1440 = vadd.f32 %v1077, %v1425
      %v1441 = vadd.f32 %v1080, %v1425
      %v1442 = vadd.f32 %v1083, %v1425
      %1459 = vrot.lane.b32.xlu0 %v1427, 96
      %v1460 = vpop.permute.xlu0 %1459
      %1461 = vrot.lane.b32.xlu0 %v1428, 96
      %v1462 = vpop.permute.xlu0 %1461
      %1463 = vrot.lane.b32.xlu0 %v1429, 96
      %v1464 = vpop.permute.xlu0 %1463
      %1465 = vrot.lane.b32.xlu0 %v1430, 96
      %v1466 = vpop.permute.xlu0 %1465
      %1467 = vrot.lane.b32.xlu0 %v1431, 96
      %v1468 = vpop.permute.xlu0 %1467
      %1469 = vrot.lane.b32.xlu0 %v1432, 96
      %v1470 = vpop.permute.xlu0 %1469
      %1471 = vrot.lane.b32.xlu0 %v1433, 96
      %v1472 = vpop.permute.xlu0 %1471
      %1473 = vrot.lane.b32.xlu0 %v1434, 96
      %v1474 = vpop.permute.xlu0 %1473
      %1475 = vrot.lane.b32.xlu0 %v1435, 96
      %v1476 = vpop.permute.xlu0 %1475
      %1477 = vrot.lane.b32.xlu0 %v1436, 96
      %v1478 = vpop.permute.xlu0 %1477
      %1479 = vrot.lane.b32.xlu0 %v1437, 96
      %v1480 = vpop.permute.xlu0 %1479
      %1481 = vrot.lane.b32.xlu0 %v1438, 96
      %v1482 = vpop.permute.xlu0 %1481
      %1483 = vrot.lane.b32.xlu0 %v1439, 96
      %v1484 = vpop.permute.xlu0 %1483
      %1485 = vrot.lane.b32.xlu0 %v1440, 96
      %v1486 = vpop.permute.xlu0 %1485
      %1487 = vrot.lane.b32.xlu0 %v1441, 96
      %v1488 = vpop.permute.xlu0 %1487
      %1489 = vrot.lane.b32.xlu0 %v1442, 96
      %v1490 = vpop.permute.xlu0 %1489
      %v1507 = vmul.f32 %v1195, %v1460
      %v1508 = vmul.f32 %v1210, %v1462
      %v1509 = vmul.f32 %v1225, %v1464
      %v1510 = vmul.f32 %v1240, %v1466
      %v1511 = vmul.f32 %v1255, %v1468
      %v1512 = vmul.f32 %v1270, %v1470
      %v1513 = vmul.f32 %v1285, %v1472
      %v1514 = vmul.f32 %v1300, %v1474
      %v1515 = vmul.f32 %v1315, %v1476
      %v1516 = vmul.f32 %v1330, %v1478
      %v1517 = vmul.f32 %v1345, %v1480
      %v1518 = vmul.f32 %v1360, %v1482
      %v1519 = vmul.f32 %v1375, %v1484
      %v1520 = vmul.f32 %v1390, %v1486
      %v1521 = vmul.f32 %v1405, %v1488
      %v1522 = vmul.f32 %v1420, %v1490
      %1539 = vrot.lane.b32.xlu0 %v1507, 32
      %v1540 = vpop.permute.xlu0 %1539
      %1541 = vrot.lane.b32.xlu0 %v1508, 32
      %v1542 = vpop.permute.xlu0 %1541
      %1543 = vrot.lane.b32.xlu0 %v1509, 32
      %v1544 = vpop.permute.xlu0 %1543
      %1545 = vrot.lane.b32.xlu0 %v1510, 32
      %v1546 = vpop.permute.xlu0 %1545
      %1547 = vrot.lane.b32.xlu0 %v1511, 32
      %v1548 = vpop.permute.xlu0 %1547
      %1549 = vrot.lane.b32.xlu0 %v1512, 32
      %v1550 = vpop.permute.xlu0 %1549
      %1551 = vrot.lane.b32.xlu0 %v1513, 32
      %v1552 = vpop.permute.xlu0 %1551
      %1553 = vrot.lane.b32.xlu0 %v1514, 32
      %v1554 = vpop.permute.xlu0 %1553
      %1555 = vrot.lane.b32.xlu0 %v1515, 32
      %v1556 = vpop.permute.xlu0 %1555
      %1557 = vrot.lane.b32.xlu0 %v1516, 32
      %v1558 = vpop.permute.xlu0 %1557
      %1559 = vrot.lane.b32.xlu0 %v1517, 32
      %v1560 = vpop.permute.xlu0 %1559
      %1561 = vrot.lane.b32.xlu0 %v1518, 32
      %v1562 = vpop.permute.xlu0 %1561
      %1563 = vrot.lane.b32.xlu0 %v1519, 32
      %v1564 = vpop.permute.xlu0 %1563
      %1565 = vrot.lane.b32.xlu0 %v1520, 32
      %v1566 = vpop.permute.xlu0 %1565
      %1567 = vrot.lane.b32.xlu0 %v1521, 32
      %v1568 = vpop.permute.xlu0 %1567
      %1569 = vrot.lane.b32.xlu0 %v1522, 32
      %v1570 = vpop.permute.xlu0 %1569
      %v1587 = vadd.f32 %v1085, %v1540
      %v1588 = vadd.f32 %v1086, %v1542
      %v1589 = vadd.f32 %v1087, %v1544
      %v1590 = vadd.f32 %v1088, %v1546
      %v1591 = vadd.f32 %v1089, %v1548
      %v1592 = vadd.f32 %v1090, %v1550
      %v1593 = vadd.f32 %v1091, %v1552
      %v1594 = vadd.f32 %v1092, %v1554
      %v1595 = vadd.f32 %v1093, %v1556
      %v1596 = vadd.f32 %v1094, %v1558
      %v1597 = vadd.f32 %v1095, %v1560
      %v1598 = vadd.f32 %v1096, %v1562
      %v1599 = vadd.f32 %v1097, %v1564
      %v1600 = vadd.f32 %v1098, %v1566
      %v1601 = vadd.f32 %v1099, %v1568
      %v1602 = vadd.f32 %v1100, %v1570
      %v1603 = vtanh.pop %v1587
      %v1604 = vtanh.pop %v1588
      %v1605 = vtanh.pop %v1589
      %v1606 = vtanh.pop %v1590
      %v1607 = vtanh.pop %v1591
      %v1608 = vtanh.pop %v1592
      %v1609 = vtanh.pop %v1593
      %v1610 = vtanh.pop %v1594
      %v1611 = vtanh.pop %v1595
      %v1612 = vtanh.pop %v1596
      %v1613 = vtanh.pop %v1597
      %v1614 = vtanh.pop %v1598
      %v1615 = vtanh.pop %v1599
      %v1616 = vtanh.pop %v1600
      %v1617 = vtanh.pop %v1601
      %v1618 = vtanh.pop %v1602
      %v1619 = vsub.f32 1.0, %v1195
      %v1620 = vsub.f32 1.0, %v1210
      %v1621 = vsub.f32 1.0, %v1225
      %v1622 = vsub.f32 1.0, %v1240
      %v1623 = vsub.f32 1.0, %v1255
      %v1624 = vsub.f32 1.0, %v1270
      %v1625 = vsub.f32 1.0, %v1285
      %v1626 = vsub.f32 1.0, %v1300
      %v1627 = vsub.f32 1.0, %v1315
      %v1628 = vsub.f32 1.0, %v1330
      %v1629 = vsub.f32 1.0, %v1345
      %v1630 = vsub.f32 1.0, %v1360
      %v1631 = vsub.f32 1.0, %v1375
      %v1632 = vsub.f32 1.0, %v1390
      %v1633 = vsub.f32 1.0, %v1405
      %v1634 = vsub.f32 1.0, %v1420
      %1651 = vrot.lane.b32.xlu0 %v1603, 64
      %v1652 = vpop.permute.xlu0 %1651
      %1653 = vrot.lane.b32.xlu0 %v1604, 64
      %v1654 = vpop.permute.xlu0 %1653
      %1655 = vrot.lane.b32.xlu0 %v1605, 64
      %v1656 = vpop.permute.xlu0 %1655
      %1657 = vrot.lane.b32.xlu0 %v1606, 64
      %v1658 = vpop.permute.xlu0 %1657
      %1659 = vrot.lane.b32.xlu0 %v1607, 64
      %v1660 = vpop.permute.xlu0 %1659
      %1661 = vrot.lane.b32.xlu0 %v1608, 64
      %v1662 = vpop.permute.xlu0 %1661
      %1663 = vrot.lane.b32.xlu0 %v1609, 64
      %v1664 = vpop.permute.xlu0 %1663
      %1665 = vrot.lane.b32.xlu0 %v1610, 64
      %v1666 = vpop.permute.xlu0 %1665
      %1667 = vrot.lane.b32.xlu0 %v1611, 64
      %v1668 = vpop.permute.xlu0 %1667
      %1669 = vrot.lane.b32.xlu0 %v1612, 64
      %v1670 = vpop.permute.xlu0 %1669
      %1671 = vrot.lane.b32.xlu0 %v1613, 64
      %v1672 = vpop.permute.xlu0 %1671
      %1673 = vrot.lane.b32.xlu0 %v1614, 64
      %v1674 = vpop.permute.xlu0 %1673
      %1675 = vrot.lane.b32.xlu0 %v1615, 64
      %v1676 = vpop.permute.xlu0 %1675
      %1677 = vrot.lane.b32.xlu0 %v1616, 64
      %v1678 = vpop.permute.xlu0 %1677
      %1679 = vrot.lane.b32.xlu0 %v1617, 64
      %v1680 = vpop.permute.xlu0 %1679
      %1681 = vrot.lane.b32.xlu0 %v1618, 64
      %v1682 = vpop.permute.xlu0 %1681
      %v1699 = vmul.f32 %v1619, %v1652
      %v1700 = vmul.f32 %v1620, %v1654
      %v1701 = vmul.f32 %v1621, %v1656
      %v1702 = vmul.f32 %v1622, %v1658
      %v1703 = vmul.f32 %v1623, %v1660
      %v1704 = vmul.f32 %v1624, %v1662
      %v1705 = vmul.f32 %v1625, %v1664
      %v1706 = vmul.f32 %v1626, %v1666
      %v1707 = vmul.f32 %v1627, %v1668
      %v1708 = vmul.f32 %v1628, %v1670
      %v1709 = vmul.f32 %v1629, %v1672
      %v1710 = vmul.f32 %v1630, %v1674
      %v1711 = vmul.f32 %v1631, %v1676
      %v1712 = vmul.f32 %v1632, %v1678
      %v1713 = vmul.f32 %v1633, %v1680
      %v1714 = vmul.f32 %v1634, %v1682
      %v1715 = vmul.f32 %v1195, %v295
      %v1716 = vmul.f32 %v1210, %v298
      %v1717 = vmul.f32 %v1225, %v301
      %v1718 = vmul.f32 %v1240, %v304
      %v1719 = vmul.f32 %v1255, %v307
      %v1720 = vmul.f32 %v1270, %v310
      %v1721 = vmul.f32 %v1285, %v313
      %v1722 = vmul.f32 %v1300, %v393
      %v1723 = vmul.f32 %v1315, %v319
      %v1724 = vmul.f32 %v1330, %v322
      %v1725 = vmul.f32 %v1345, %v325
      %v1726 = vmul.f32 %v1360, %v328
      %v1727 = vmul.f32 %v1375, %v331
      %v1728 = vmul.f32 %v1390, %v334
      %v1729 = vmul.f32 %v1405, %v337
      %v1730 = vmul.f32 %v1420, %v396
      %v1731 = vadd.f32 %v1699, %v1715
      %v1732 = vadd.f32 %v1700, %v1716
      %v1733 = vadd.f32 %v1701, %v1717
      %v1734 = vadd.f32 %v1702, %v1718
      %v1735 = vadd.f32 %v1703, %v1719
      %v1736 = vadd.f32 %v1704, %v1720
      %v1737 = vadd.f32 %v1705, %v1721
      %v1738 = vadd.f32 %v1706, %v1722
      %v1739 = vadd.f32 %v1707, %v1723
      %v1740 = vadd.f32 %v1708, %v1724
      %v1741 = vadd.f32 %v1709, %v1725
      %v1742 = vadd.f32 %v1710, %v1726
      %v1743 = vadd.f32 %v1711, %v1727
      %v1744 = vadd.f32 %v1712, %v1728
      %v1745 = vadd.f32 %v1713, %v1729
      %v1746 = vadd.f32 %v1714, %v1730
      %s1747 = scalar_lea.vmem [#allocation2], 16
      %1748 = vst.msk [vmem:[%s1747 + $0x1] sm:$0xff] %vm723, %v1731
      %1749 = vst.msk [vmem:[%s1747 + $0x11] sm:$0xff] %vm723, %v1732
      %1750 = vst.msk [vmem:[%s1747 + $0x21] sm:$0xff] %vm723, %v1733
      %1751 = vst.msk [vmem:[%s1747 + $0x31] sm:$0xff] %vm723, %v1734
      %1752 = vst.msk [vmem:[%s1747 + $0x41] sm:$0xff] %vm723, %v1735
      %1753 = vst.msk [vmem:[%s1747 + $0x51] sm:$0xff] %vm723, %v1736
      %1754 = vst.msk [vmem:[%s1747 + $0x61] sm:$0xff] %vm723, %v1737
      %1755 = vst.msk [vmem:[%s1747 + $0x71] sm:$0xff] %vm723, %v1738
      %1756 = vst.msk [vmem:[%s1747 + $0xa1] sm:$0xff] %vm723, %v1739
      %1757 = vst.msk [vmem:[%s1747 + $0xb1] sm:$0xff] %vm723, %v1740
      %1758 = vst.msk [vmem:[%s1747 + $0xc1] sm:$0xff] %vm723, %v1741
      %1759 = vst.msk [vmem:[%s1747 + $0xd1] sm:$0xff] %vm723, %v1742
      %1760 = vst.msk [vmem:[%s1747 + $0xe1] sm:$0xff] %vm723, %v1743
      %1761 = vst.msk [vmem:[%s1747 + $0xf1] sm:$0xff] %vm723, %v1744
      %1762 = vst.msk [vmem:[%s1747 + $0x101] sm:$0xff] %vm723, %v1745
      %1763 = vst.msk [vmem:[%s1747 + $0x111] sm:$0xff] %vm723, %v1746
      %1764 = vst.msk [vmem:[%s170] sm:$0xff] %vm723, %v1731
      %1765 = vst.msk [vmem:[%s170 + $0x8] sm:$0xff] %vm723, %v1732
      %1766 = vst.msk [vmem:[%s170 + $0x10] sm:$0xff] %vm723, %v1733
      %1767 = vst.msk [vmem:[%s170 + $0x18] sm:$0xff] %vm723, %v1734
      %1768 = vst.msk [vmem:[%s170 + $0x20] sm:$0xff] %vm723, %v1735
      %1769 = vst.msk [vmem:[%s170 + $0x28] sm:$0xff] %vm723, %v1736
      %1770 = vst.msk [vmem:[%s170 + $0x30] sm:$0xff] %vm723, %v1737
      %1771 = vst.msk [vmem:[%s170 + $0x38] sm:$0xff] %vm723, %v1738
      %1772 = vst.msk [vmem:[%s170 + $0x40] sm:$0xff] %vm723, %v1739
      %1773 = vst.msk [vmem:[%s170 + $0x48] sm:$0xff] %vm723, %v1740
      %1774 = vst.msk [vmem:[%s170 + $0x50] sm:$0xff] %vm723, %v1741
      %1775 = vst.msk [vmem:[%s170 + $0x58] sm:$0xff] %vm723, %v1742
      %1776 = vst.msk [vmem:[%s170 + $0x60] sm:$0xff] %vm723, %v1743
      %1777 = vst.msk [vmem:[%s170 + $0x68] sm:$0xff] %vm723, %v1744
      %1778 = vst.msk [vmem:[%s170 + $0x70] sm:$0xff] %vm723, %v1745
      %1779 = vst.msk [vmem:[%s170 + $0x78] sm:$0xff] %vm723, %v1746
      %p1780 = scmp.lt.s32.totalorder %s14, 7
      %s1781 = scalar_select %p1780, %s14, 7
      %s1782 = smul.addr %s1781, 16
      %s1783 = smul.addr %s1782, 8
      %s1784 = scalar_lea.vmem %s3, %s1783
      // Predicated region
      $region37: #{convgru_forward.5} parent=31 // pred_check
        %p1785 = pneg %p100
      $region38: #{convgru_forward.5} parent=31 // pred_check_branch
        %1787 = sbr.rel (%p1785) target = $region40
      $region39: #{convgru_forward.5} parent=31 // pred_region
        _
      $region40: #{convgru_forward.5} parent=31 // pred_fallthru
        _
    $region32: #{convgru_forward.5} parent=5 // pred_fallthru
      _
    %p1788 = scmp.le.s32.totalorder 2, %s9
    // Predicated region
    $region41: #{convgru_forward.5} parent=5 // pred_check
      %p1789 = pneg %p1788
    $region42: #{convgru_forward.5} parent=5 // pred_check_branch
      %1791 = sbr.rel (%p1789) target = $region44
    $region43: #{convgru_forward.5} parent=5 // pred_region
      %s1792 = ssub.s32 %s9, 2
      // Predicated region
      $region45: #{convgru_forward.5} parent=43 // pred_check
        %p1793 = pneg %p106
      $region46: #{convgru_forward.5} parent=43 // pred_check_branch
        %1795 = sbr.rel (%p1793) target = $region48
      $region47: #{convgru_forward.5} parent=43 // pred_region
        %p1796 = scmp.lt.s32.totalorder %s15, 7
        %s1797 = scalar_select %p1796, %s15, 7
        %s1798 = smul.addr %s1797, 16
        %s1799 = smul.addr %s1798, 8
        %s1800 = scalar_lea.vmem %s3, %s1799
      $region48: #{convgru_forward.5} parent=43 // pred_fallthru
        _
    $region44: #{convgru_forward.5} parent=5 // pred_fallthru
      _
  $region6: #{convgru_forward.5} parent=0 // loop_footer
    %s13 = sadd.s32 1, %s9
  $region7: #{convgru_forward.5} parent=0 // loop_footer_branch
    %8 = sbr.rel target = $region3
  $region8: #{convgru_forward.5} parent=0 // loop_exit
    _

// kernel: convgru_forward.4
$region0: #{convgru_forward.4}
  #allocation0 [shape = 'u32[]', space=smem, size = 0x4, offset = 0x4, fixed_abs, tag = 'smem constant byte address 0x4 - core index']
  #allocation1 [shape = 'u32[72,128]{1,0:T(1,128)}', space=vmem, size = 0x9000, scoped, tag = 'internal scratch']
  #allocation2 [shape = 'f32[2,10,10,4]{3,2,1,0:T(8,128)}', space=vmem, size = 0x28000, scoped, tag = 'scratch operand']
  %s0 = inlined_call_operand.vmem [shape: f32[8,2,8,8,4], index: 0, kind: input, shape index: {}]
  %s1 = inlined_call_operand.vmem [shape: f32[36,128], index: 1, kind: input, shape index: {}]
  %s2 = inlined_call_operand.vmem [shape: f32[1,128], index: 2, kind: input, shape index: {}]
  %s3 = inlined_call_operand.vmem [shape: f32[8,128,128], index: 3, kind: output, shape index: {}]
  %s4 = sld [smem:[#allocation0]]
  $region45: #{convgru_forward.4} parent=0
    _
  %s6 = ssub.s32 1, %s4
  %s7 = scalar_select 0, %s6, %s4
  loop: start=0, step=1, limit=10
  $region2: #{convgru_forward.4} parent=0 // loop_pre_header
    _
  $region3: #{convgru_forward.4} parent=0 // loop_header
    %s9 = sphi 0, %s13
    %p10 = scmp.ge.s32.totalorder %s9, 10
    %s19 = sphi 0, %s21
    %s22 = sphi 0, %s19
    %s23 = sphi 0, %s22
    %s39 = sphi 0, %s23
    %s43 = sphi 0, %s43
    %s45 = sphi 0, %s43
    %s46 = sphi 0, %s45
    %s60 = sphi 0, %s46
    %s64 = sphi 0, %s64
    %s66 = sphi 0, %s64
    %s67 = sphi 0, %s66
    %s81 = sphi 0, %s67
    %s87 = sphi 0, %s89
    %s90 = sphi 0, %s87
    %s91 = sphi 0, %s90
    %s107 = sphi 0, %s91
  $region4: #{convgru_forward.4} parent=0 // loop_header_branch
    %12 = sbr.rel (%p10) target = $region8
  $region5: #{convgru_forward.4} parent=0 // loop_body
    %s14 = ssub.s32 %s9, 1
    %s15 = ssub.s32 %s9, 2
    %s16 = sadd.s32 %s9, 1
    %s17 = ssub.s32 %s9, %s16
    %p18 = scmp.eq.s32.totalorder %s17, 0
    %s20 = sadd.s32 %s19, 1
    %s21 = scalar_select %p18, %s19, %s20
    %p24 = pneg %p18
    %p25 = scmp.eq.s32.totalorder %s9, 7
    %p26 = por %p24, %p25
    %p27 = scmp.ne.s32.totalorder %s19, %s22
    %p28 = scmp.eq.s32.totalorder %s9, 0
    %p29 = por %p27, %p28
    %p30 = scmp.ne.s32.totalorder %s19, %s22
    %p31 = scmp.eq.s32.totalorder %s14, 7
    %p32 = por %p30, %p31
    %p33 = scmp.ne.s32.totalorder %s22, %s23
    %p34 = scmp.eq.s32.totalorder %s14, 0
    %p35 = por %p33, %p34
    %p36 = scmp.ne.s32.totalorder %s22, %s23
    %p37 = scmp.eq.s32.totalorder %s15, 7
    %p38 = por %p36, %p37
    %p40 = scmp.ne.s32.totalorder %s23, %s39
    %p41 = scmp.eq.s32.totalorder %s15, 0
    %p42 = por %p40, %p41
    %s44 = sadd.s32 %s43, 1
    %p47 = scmp.eq.s32.totalorder %s9, 7
    %p48 = scmp.ne.s32.totalorder %s43, %s45
    %p49 = scmp.eq.s32.totalorder %s9, 0
    %p50 = por %p48, %p49
    %p51 = scmp.ne.s32.totalorder %s43, %s45
    %p52 = scmp.eq.s32.totalorder %s14, 7
    %p53 = por %p51, %p52
    %p54 = scmp.ne.s32.totalorder %s45, %s46
    %p55 = scmp.eq.s32.totalorder %s14, 0
    %p56 = por %p54, %p55
    %p57 = scmp.ne.s32.totalorder %s45, %s46
    %p58 = scmp.eq.s32.totalorder %s15, 7
    %p59 = por %p57, %p58
    %p61 = scmp.ne.s32.totalorder %s46, %s60
    %p62 = scmp.eq.s32.totalorder %s15, 0
    %p63 = por %p61, %p62
    %s65 = sadd.s32 %s64, 1
    %p68 = scmp.eq.s32.totalorder %s9, 7
    %p69 = scmp.ne.s32.totalorder %s64, %s66
    %p70 = scmp.eq.s32.totalorder %s9, 0
    %p71 = por %p69, %p70
    %p72 = scmp.ne.s32.totalorder %s64, %s66
    %p73 = scmp.eq.s32.totalorder %s14, 7
    %p74 = por %p72, %p73
    %p75 = scmp.ne.s32.totalorder %s66, %s67
    %p76 = scmp.eq.s32.totalorder %s14, 0
    %p77 = por %p75, %p76
    %p78 = scmp.ne.s32.totalorder %s66, %s67
    %p79 = scmp.eq.s32.totalorder %s15, 7
    %p80 = por %p78, %p79
    %p82 = scmp.ne.s32.totalorder %s67, %s81
    %p83 = scmp.eq.s32.totalorder %s15, 0
    %p84 = por %p82, %p83
    %s85 = ssub.s32 %s9, %s16
    %p86 = scmp.eq.s32.totalorder %s85, 0
    %s88 = sadd.s32 %s87, 1
    %s89 = scalar_select %p86, %s87, %s88
    %p92 = pneg %p86
    %p93 = scmp.eq.s32.totalorder %s9, 7
    %p94 = por %p92, %p93
    %p95 = scmp.ne.s32.totalorder %s87, %s90
    %p96 = scmp.eq.s32.totalorder %s9, 0
    %p97 = por %p95, %p96
    %p98 = scmp.ne.s32.totalorder %s87, %s90
    %p99 = scmp.eq.s32.totalorder %s14, 7
    %p100 = por %p98, %p99
    %p101 = scmp.ne.s32.totalorder %s90, %s91
    %p102 = scmp.eq.s32.totalorder %s14, 0
    %p103 = por %p101, %p102
    %p104 = scmp.ne.s32.totalorder %s90, %s91
    %p105 = scmp.eq.s32.totalorder %s15, 7
    %p106 = por %p104, %p105
    %p108 = scmp.ne.s32.totalorder %s91, %s107
    %p109 = scmp.eq.s32.totalorder %s15, 0
    %p110 = por %p108, %p109
    %p111 = scmp.le.s32.totalorder 1, %s9
    %p112 = scmp.lt.s32.totalorder %s9, 9
    %p113 = pnand %p111, %p112
    %p114 = pneg %p113
    // Predicated region
    $region9: #{convgru_forward.4} parent=5 // pred_check
      _
    $region10: #{convgru_forward.4} parent=5 // pred_check_branch
      %116 = sbr.rel (%p113) target = $region12
    $region11: #{convgru_forward.4} parent=5 // pred_region
      %s117 = ssub.s32 %s9, 1
      // Predicated region
      $region13: #{convgru_forward.4} parent=11 // pred_check
        %p118 = pneg %p56
      $region14: #{convgru_forward.4} parent=11 // pred_check_branch
        %120 = sbr.rel (%p118) target = $region16
      $region15: #{convgru_forward.4} parent=11 // pred_region
        _
      $region16: #{convgru_forward.4} parent=11 // pred_fallthru
        _
      // Predicated region
      $region17: #{convgru_forward.4} parent=11 // pred_check
        %p121 = pneg %p77
      $region18: #{convgru_forward.4} parent=11 // pred_check_branch
        %123 = sbr.rel (%p121) target = $region20
      $region19: #{convgru_forward.4} parent=11 // pred_region
        _
      $region20: #{convgru_forward.4} parent=11 // pred_fallthru
        _
    $region12: #{convgru_forward.4} parent=5 // pred_fallthru
      _
    %p124 = scmp.lt.s32.totalorder %s9, 8
    // Predicated region
    $region21: #{convgru_forward.4} parent=5 // pred_check
      %p125 = pneg %p124
    $region22: #{convgru_forward.4} parent=5 // pred_check_branch
      %127 = sbr.rel (%p125) target = $region24
    $region23: #{convgru_forward.4} parent=5 // pred_region
      // Predicated region
      $region25: #{convgru_forward.4} parent=23 // pred_check
        %p128 = pneg %p29
      $region26: #{convgru_forward.4} parent=23 // pred_check_branch
        %130 = sbr.rel (%p128) target = $region28
      $region27: #{convgru_forward.4} parent=23 // pred_region
        %p131 = scmp.lt.s32.totalorder %s9, 7
        %s132 = scalar_select %p131, %s9, 7
        %s133 = smul.addr %s132, 16
        %s134 = smul.addr %s133, 8
        %s135 = scalar_lea.vmem %s0, %s134
      $region28: #{convgru_forward.4} parent=23 // pred_fallthru
        _
    $region24: #{convgru_forward.4} parent=5 // pred_fallthru
      _
    %p136 = scmp.le.s32.totalorder 1, %s9
    %p137 = scmp.lt.s32.totalorder %s9, 9
    %p138 = pnand %p136, %p137
    %p139 = pneg %p138
    // Predicated region
    $region29: #{convgru_forward.4} parent=5 // pred_check
      _
    $region30: #{convgru_forward.4} parent=5 // pred_check_branch
      %141 = sbr.rel (%p138) target = $region32
    $region31: #{convgru_forward.4} parent=5 // pred_region
      %s142 = ssub.s32 %s9, 1
      %p143 = scmp.lt.s32.totalorder %s14, 7
      %s144 = scalar_select %p143, %s14, 7
      %s145 = smul.addr %s144, 16
      %s146 = smul.addr %s145, 8
      %s147 = scalar_lea.vmem %s0, %s146
      %p148 = pneg %p35
      %p149 = pneg %p32
      %p150 = pneg %p56
      %p151 = pneg %p53
      %p152 = pneg %p77
      %p153 = pneg %p74
      %p154 = pneg %p103
      %p155 = pneg %p100
      %p156 = scmp.lt.s32.totalorder %s14, 7
      %s157 = scalar_select %p156, %s14, 7
      %s158 = smul.addr %s157, 16
      %s159 = smul.addr %s158, 8
      %s160 = scalar_lea.vmem %s3, %s159
      %p161 = scmp.lt.s32.totalorder %s14, 7
      %s162 = scalar_select %p161, %s14, 7
      %s163 = smul.addr %s162, 16
      %s164 = smul.addr %s163, 8
      %s165 = scalar_lea.vmem %s0, %s164
      %p166 = scmp.lt.s32.totalorder %s14, 7
      %s167 = scalar_select %p166, %s14, 7
      %s168 = smul.addr %s167, 16
      %s169 = smul.addr %s168, 8
      %s170 = scalar_lea.vmem %s3, %s169
      %vm171 = vcmask 31744
      %172 = vst.msk [vmem:[#allocation2] sm:$0xff] %vm171, 0.0
      %vm173 = vcmask 25600
      %174 = vst.msk [vmem:[#allocation2 + $0x8] sm:$0x3] %vm173, 0.0
      %175 = vst.msk [vmem:[#allocation2 + $0x10] sm:$0xff] %vm171, 0.0
      %176 = vst.msk [vmem:[#allocation2 + $0x18] sm:$0x3] %vm173, 0.0
      %177 = vst.msk [vmem:[#allocation2 + $0x20] sm:$0xff] %vm171, 0.0
      %178 = vst.msk [vmem:[#allocation2 + $0x28] sm:$0x3] %vm173, 0.0
      %179 = vst.msk [vmem:[#allocation2 + $0x30] sm:$0xff] %vm171, 0.0
      %180 = vst.msk [vmem:[#allocation2 + $0x38] sm:$0x3] %vm173, 0.0
      %181 = vst.msk [vmem:[#allocation2 + $0x40] sm:$0xff] %vm171, 0.0
      %182 = vst.msk [vmem:[#allocation2 + $0x48] sm:$0x3] %vm173, 0.0
      %183 = vst.msk [vmem:[#allocation2 + $0x50] sm:$0xff] %vm171, 0.0
      %184 = vst.msk [vmem:[#allocation2 + $0x58] sm:$0x3] %vm173, 0.0
      %185 = vst.msk [vmem:[#allocation2 + $0x60] sm:$0xff] %vm171, 0.0
      %186 = vst.msk [vmem:[#allocation2 + $0x68] sm:$0x3] %vm173, 0.0
      %187 = vst.msk [vmem:[#allocation2 + $0x70] sm:$0xff] %vm171, 0.0
      %188 = vst.msk [vmem:[#allocation2 + $0x78] sm:$0x3] %vm173, 0.0
      %189 = vst.msk [vmem:[#allocation2 + $0x80] sm:$0xff] %vm171, 0.0
      %190 = vst.msk [vmem:[#allocation2 + $0x88] sm:$0x3] %vm173, 0.0
      %191 = vst.msk [vmem:[#allocation2 + $0x90] sm:$0xff] %vm171, 0.0
      %192 = vst.msk [vmem:[#allocation2 + $0x98] sm:$0x3] %vm173, 0.0
      %193 = vst.msk [vmem:[#allocation2 + $0xa0] sm:$0xff] %vm171, 0.0
      %194 = vst.msk [vmem:[#allocation2 + $0xa8] sm:$0x3] %vm173, 0.0
      %195 = vst.msk [vmem:[#allocation2 + $0xb0] sm:$0xff] %vm171, 0.0
      %196 = vst.msk [vmem:[#allocation2 + $0xb8] sm:$0x3] %vm173, 0.0
      %197 = vst.msk [vmem:[#allocation2 + $0xc0] sm:$0xff] %vm171, 0.0
      %198 = vst.msk [vmem:[#allocation2 + $0xc8] sm:$0x3] %vm173, 0.0
      %199 = vst.msk [vmem:[#allocation2 + $0xd0] sm:$0xff] %vm171, 0.0
      %200 = vst.msk [vmem:[#allocation2 + $0xd8] sm:$0x3] %vm173, 0.0
      %201 = vst.msk [vmem:[#allocation2 + $0xe0] sm:$0xff] %vm171, 0.0
      %202 = vst.msk [vmem:[#allocation2 + $0xe8] sm:$0x3] %vm173, 0.0
      %203 = vst.msk [vmem:[#allocation2 + $0xf0] sm:$0xff] %vm171, 0.0
      %204 = vst.msk [vmem:[#allocation2 + $0xf8] sm:$0x3] %vm173, 0.0
      %205 = vst.msk [vmem:[#allocation2 + $0x100] sm:$0xff] %vm171, 0.0
      %206 = vst.msk [vmem:[#allocation2 + $0x108] sm:$0x3] %vm173, 0.0
      %207 = vst.msk [vmem:[#allocation2 + $0x110] sm:$0xff] %vm171, 0.0
      %208 = vst.msk [vmem:[#allocation2 + $0x118] sm:$0x3] %vm173, 0.0
      %209 = vst.msk [vmem:[#allocation2 + $0x120] sm:$0xff] %vm171, 0.0
      %210 = vst.msk [vmem:[#allocation2 + $0x128] sm:$0x3] %vm173, 0.0
      %211 = vst.msk [vmem:[#allocation2 + $0x130] sm:$0xff] %vm171, 0.0
      %212 = vst.msk [vmem:[#allocation2 + $0x138] sm:$0x3] %vm173, 0.0
      %v213 = vld [vmem:[%s165] sm:$0xff]
      %v214 = vld [vmem:[%s165 + $0x8] sm:$0xff]
      %v215 = vld [vmem:[%s165 + $0x10] sm:$0xff]
      %v216 = vld [vmem:[%s165 + $0x18] sm:$0xff]
      %v217 = vld [vmem:[%s165 + $0x20] sm:$0xff]
      %v218 = vld [vmem:[%s165 + $0x28] sm:$0xff]
      %v219 = vld [vmem:[%s165 + $0x30] sm:$0xff]
      %v220 = vld [vmem:[%s165 + $0x38] sm:$0xff]
      %v221 = vld [vmem:[%s165 + $0x40] sm:$0xff]
      %v222 = vld [vmem:[%s165 + $0x48] sm:$0xff]
      %v223 = vld [vmem:[%s165 + $0x50] sm:$0xff]
      %v224 = vld [vmem:[%s165 + $0x58] sm:$0xff]
      %v225 = vld [vmem:[%s165 + $0x60] sm:$0xff]
      %v226 = vld [vmem:[%s165 + $0x68] sm:$0xff]
      %v227 = vld [vmem:[%s165 + $0x70] sm:$0xff]
      %v228 = vld [vmem:[%s165 + $0x78] sm:$0xff]
      %s229 = scalar_lea.vmem [#allocation2], 16
      %230 = vst.msk [vmem:[%s229 + $0x1] sm:$0xff] %vm171, %v213
      %231 = vst.msk [vmem:[%s229 + $0x11] sm:$0xff] %vm171, %v214
      %232 = vst.msk [vmem:[%s229 + $0x21] sm:$0xff] %vm171, %v215
      %233 = vst.msk [vmem:[%s229 + $0x31] sm:$0xff] %vm171, %v216
      %234 = vst.msk [vmem:[%s229 + $0x41] sm:$0xff] %vm171, %v217
      %235 = vst.msk [vmem:[%s229 + $0x51] sm:$0xff] %vm171, %v218
      %236 = vst.msk [vmem:[%s229 + $0x61] sm:$0xff] %vm171, %v219
      %237 = vst.msk [vmem:[%s229 + $0x71] sm:$0xff] %vm171, %v220
      %238 = vst.msk [vmem:[%s229 + $0xa1] sm:$0xff] %vm171, %v221
      %239 = vst.msk [vmem:[%s229 + $0xb1] sm:$0xff] %vm171, %v222
      %240 = vst.msk [vmem:[%s229 + $0xc1] sm:$0xff] %vm171, %v223
      %241 = vst.msk [vmem:[%s229 + $0xd1] sm:$0xff] %vm171, %v224
      %242 = vst.msk [vmem:[%s229 + $0xe1] sm:$0xff] %vm171, %v225
      %243 = vst.msk [vmem:[%s229 + $0xf1] sm:$0xff] %vm171, %v226
      %244 = vst.msk [vmem:[%s229 + $0x101] sm:$0xff] %vm171, %v227
      %245 = vst.msk [vmem:[%s229 + $0x111] sm:$0xff] %vm171, %v228
      %v246 = vld [vmem:[#allocation2] sm:$0xff]
      %v247 = vld [vmem:[#allocation2 + $0x8] sm:$0x3]
      %v248 = vld [vmem:[#allocation2 + $0x10] sm:$0xff]
      %v249 = vld [vmem:[#allocation2 + $0x18] sm:$0x3]
      %v250 = vld [vmem:[#allocation2 + $0x20] sm:$0xff]
      %v251 = vld [vmem:[#allocation2 + $0x28] sm:$0x3]
      %v252 = vld [vmem:[#allocation2 + $0x30] sm:$0xff]
      %v253 = vld [vmem:[#allocation2 + $0x38] sm:$0x3]
      %v254 = vld [vmem:[#allocation2 + $0x40] sm:$0xff]
      %v255 = vld [vmem:[#allocation2 + $0x48] sm:$0x3]
      %v256 = vld [vmem:[#allocation2 + $0x50] sm:$0xff]
      %v257 = vld [vmem:[#allocation2 + $0x58] sm:$0x3]
      %v258 = vld [vmem:[#allocation2 + $0x60] sm:$0xff]
      %v259 = vld [vmem:[#allocation2 + $0x68] sm:$0x3]
      %v260 = vld [vmem:[#allocation2 + $0x70] sm:$0xff]
      %v261 = vld [vmem:[#allocation2 + $0x78] sm:$0x3]
      %v262 = vld [vmem:[#allocation2 + $0x80] sm:$0xff]
      %v263 = vld [vmem:[#allocation2 + $0x88] sm:$0x3]
      %v264 = vld [vmem:[#allocation2 + $0x90] sm:$0xff]
      %v265 = vld [vmem:[#allocation2 + $0x98] sm:$0x3]
      %v266 = vld [vmem:[#allocation2 + $0xa0] sm:$0xff]
      %v267 = vld [vmem:[#allocation2 + $0xa8] sm:$0x3]
      %v268 = vld [vmem:[#allocation2 + $0xb0] sm:$0xff]
      %v269 = vld [vmem:[#allocation2 + $0xb8] sm:$0x3]
      %v270 = vld [vmem:[#allocation2 + $0xc0] sm:$0xff]
      %v271 = vld [vmem:[#allocation2 + $0xc8] sm:$0x3]
      %v272 = vld [vmem:[#allocation2 + $0xd0] sm:$0xff]
      %v273 = vld [vmem:[#allocation2 + $0xd8] sm:$0x3]
      %v274 = vld [vmem:[#allocation2 + $0xe0] sm:$0xff]
      %v275 = vld [vmem:[#allocation2 + $0xe8] sm:$0x3]
      %v276 = vld [vmem:[#allocation2 + $0xf0] sm:$0xff]
      %v277 = vld [vmem:[#allocation2 + $0xf8] sm:$0x3]
      %v278 = vld [vmem:[#allocation2 + $0x100] sm:$0xff]
      %v279 = vld [vmem:[#allocation2 + $0x108] sm:$0x3]
      %v280 = vld [vmem:[#allocation2 + $0x110] sm:$0xff]
      %v281 = vld [vmem:[#allocation2 + $0x118] sm:$0x3]
      %v282 = vld [vmem:[#allocation2 + $0x120] sm:$0xff]
      %v283 = vld [vmem:[#allocation2 + $0x128] sm:$0x3]
      %v284 = vld [vmem:[#allocation2 + $0x130] sm:$0xff]
      %v285 = vld [vmem:[#allocation2 + $0x138] sm:$0x3]
      %vm318 = vcmask 1046528
      %v319 = vrot.slane %v246, 1
      %v320 = vrot.slane %v247, 1
      %v321 = vsel %vm318, %v319, %v320
      %v322 = vrot.slane %v248, 1
      %v323 = vrot.slane %v249, 1
      %v324 = vsel %vm318, %v322, %v323
      %v325 = vrot.slane %v250, 1
      %v326 = vrot.slane %v251, 1
      %v327 = vsel %vm318, %v325, %v326
      %v328 = vrot.slane %v252, 1
      %v329 = vrot.slane %v253, 1
      %v330 = vsel %vm318, %v328, %v329
      %v331 = vrot.slane %v254, 1
      %v332 = vrot.slane %v255, 1
      %v333 = vsel %vm318, %v331, %v332
      %v334 = vrot.slane %v256, 1
      %v335 = vrot.slane %v257, 1
      %v336 = vsel %vm318, %v334, %v335
      %v337 = vrot.slane %v258, 1
      %v338 = vrot.slane %v259, 1
      %v339 = vsel %vm318, %v337, %v338
      %v340 = vrot.slane %v260, 1
      %v341 = vrot.slane %v261, 1
      %v342 = vsel %vm318, %v340, %v341
      %v343 = vrot.slane %v266, 1
      %v344 = vrot.slane %v267, 1
      %v345 = vsel %vm318, %v343, %v344
      %v346 = vrot.slane %v268, 1
      %v347 = vrot.slane %v269, 1
      %v348 = vsel %vm318, %v346, %v347
      %v349 = vrot.slane %v270, 1
      %v350 = vrot.slane %v271, 1
      %v351 = vsel %vm318, %v349, %v350
      %v352 = vrot.slane %v272, 1
      %v353 = vrot.slane %v273, 1
      %v354 = vsel %vm318, %v352, %v353
      %v355 = vrot.slane %v274, 1
      %v356 = vrot.slane %v275, 1
      %v357 = vsel %vm318, %v355, %v356
      %v358 = vrot.slane %v276, 1
      %v359 = vrot.slane %v277, 1
      %v360 = vsel %vm318, %v358, %v359
      %v361 = vrot.slane %v278, 1
      %v362 = vrot.slane %v279, 1
      %v363 = vsel %vm318, %v361, %v362
      %v364 = vrot.slane %v280, 1
      %v365 = vrot.slane %v281, 1
      %v366 = vsel %vm318, %v364, %v365
      %vm367 = vcmask 1045504
      %v368 = vrot.slane %v246, 2
      %v369 = vrot.slane %v247, 2
      %v370 = vsel %vm367, %v368, %v369
      %v371 = vrot.slane %v248, 2
      %v372 = vrot.slane %v249, 2
      %v373 = vsel %vm367, %v371, %v372
      %v374 = vrot.slane %v250, 2
      %v375 = vrot.slane %v251, 2
      %v376 = vsel %vm367, %v374, %v375
      %v377 = vrot.slane %v252, 2
      %v378 = vrot.slane %v253, 2
      %v379 = vsel %vm367, %v377, %v378
      %v380 = vrot.slane %v254, 2
      %v381 = vrot.slane %v255, 2
      %v382 = vsel %vm367, %v380, %v381
      %v383 = vrot.slane %v256, 2
      %v384 = vrot.slane %v257, 2
      %v385 = vsel %vm367, %v383, %v384
      %v386 = vrot.slane %v258, 2
      %v387 = vrot.slane %v259, 2
      %v388 = vsel %vm367, %v386, %v387
      %v389 = vrot.slane %v260, 2
      %v390 = vrot.slane %v261, 2
      %v391 = vsel %vm367, %v389, %v390
      %v392 = vrot.slane %v266, 2
      %v393 = vrot.slane %v267, 2
      %v394 = vsel %vm367, %v392, %v393
      %v395 = vrot.slane %v268, 2
      %v396 = vrot.slane %v269, 2
      %v397 = vsel %vm367, %v395, %v396
      %v398 = vrot.slane %v270, 2
      %v399 = vrot.slane %v271, 2
      %v400 = vsel %vm367, %v398, %v399
      %v401 = vrot.slane %v272, 2
      %v402 = vrot.slane %v273, 2
      %v403 = vsel %vm367, %v401, %v402
      %v404 = vrot.slane %v274, 2
      %v405 = vrot.slane %v275, 2
      %v406 = vsel %vm367, %v404, %v405
      %v407 = vrot.slane %v276, 2
      %v408 = vrot.slane %v277, 2
      %v409 = vsel %vm367, %v407, %v408
      %v410 = vrot.slane %v278, 2
      %v411 = vrot.slane %v279, 2
      %v412 = vsel %vm367, %v410, %v411
      %v413 = vrot.slane %v280, 2
      %v414 = vrot.slane %v281, 2
      %v415 = vsel %vm367, %v413, %v414
      %v420 = vrot.slane %v262, 1
      %v421 = vrot.slane %v263, 1
      %v422 = vsel %vm318, %v420, %v421
      %v423 = vrot.slane %v282, 1
      %v424 = vrot.slane %v283, 1
      %v425 = vsel %vm318, %v423, %v424
      %v426 = vrot.slane %v262, 2
      %v427 = vrot.slane %v263, 2
      %v428 = vsel %vm367, %v426, %v427
      %v429 = vrot.slane %v282, 2
      %v430 = vrot.slane %v283, 2
      %v431 = vsel %vm367, %v429, %v430
      %v436 = vrot.slane %v264, 1
      %v437 = vrot.slane %v265, 1
      %v438 = vsel %vm318, %v436, %v437
      %v439 = vrot.slane %v284, 1
      %v440 = vrot.slane %v285, 1
      %v441 = vsel %vm318, %v439, %v440
      %v442 = vrot.slane %v264, 2
      %v443 = vrot.slane %v265, 2
      %v444 = vsel %vm367, %v442, %v443
      %v445 = vrot.slane %v284, 2
      %v446 = vrot.slane %v285, 2
      %v447 = vsel %vm367, %v445, %v446
      %448 = vrot.lane.b32.xlu0 %v321, 4
      %v449 = vpop.permute.xlu0 %448
      %450 = vrot.lane.b32.xlu0 %v324, 4
      %v451 = vpop.permute.xlu0 %450
      %452 = vrot.lane.b32.xlu0 %v327, 4
      %v453 = vpop.permute.xlu0 %452
      %454 = vrot.lane.b32.xlu0 %v330, 4
      %v455 = vpop.permute.xlu0 %454
      %456 = vrot.lane.b32.xlu0 %v333, 4
      %v457 = vpop.permute.xlu0 %456
      %458 = vrot.lane.b32.xlu0 %v336, 4
      %v459 = vpop.permute.xlu0 %458
      %460 = vrot.lane.b32.xlu0 %v339, 4
      %v461 = vpop.permute.xlu0 %460
      %462 = vrot.lane.b32.xlu0 %v342, 4
      %v463 = vpop.permute.xlu0 %462
      %464 = vrot.lane.b32.xlu0 %v345, 4
      %v465 = vpop.permute.xlu0 %464
      %466 = vrot.lane.b32.xlu0 %v348, 4
      %v467 = vpop.permute.xlu0 %466
      %468 = vrot.lane.b32.xlu0 %v351, 4
      %v469 = vpop.permute.xlu0 %468
      %470 = vrot.lane.b32.xlu0 %v354, 4
      %v471 = vpop.permute.xlu0 %470
      %472 = vrot.lane.b32.xlu0 %v357, 4
      %v473 = vpop.permute.xlu0 %472
      %474 = vrot.lane.b32.xlu0 %v360, 4
      %v475 = vpop.permute.xlu0 %474
      %476 = vrot.lane.b32.xlu0 %v363, 4
      %v477 = vpop.permute.xlu0 %476
      %478 = vrot.lane.b32.xlu0 %v366, 4
      %v479 = vpop.permute.xlu0 %478
      %496 = vrot.lane.b32.xlu0 %v370, 8
      %v497 = vpop.permute.xlu0 %496
      %498 = vrot.lane.b32.xlu0 %v373, 8
      %v499 = vpop.permute.xlu0 %498
      %500 = vrot.lane.b32.xlu0 %v376, 8
      %v501 = vpop.permute.xlu0 %500
      %502 = vrot.lane.b32.xlu0 %v379, 8
      %v503 = vpop.permute.xlu0 %502
      %504 = vrot.lane.b32.xlu0 %v382, 8
      %v505 = vpop.permute.xlu0 %504
      %506 = vrot.lane.b32.xlu0 %v385, 8
      %v507 = vpop.permute.xlu0 %506
      %508 = vrot.lane.b32.xlu0 %v388, 8
      %v509 = vpop.permute.xlu0 %508
      %510 = vrot.lane.b32.xlu0 %v391, 8
      %v511 = vpop.permute.xlu0 %510
      %512 = vrot.lane.b32.xlu0 %v394, 8
      %v513 = vpop.permute.xlu0 %512
      %514 = vrot.lane.b32.xlu0 %v397, 8
      %v515 = vpop.permute.xlu0 %514
      %516 = vrot.lane.b32.xlu0 %v400, 8
      %v517 = vpop.permute.xlu0 %516
      %518 = vrot.lane.b32.xlu0 %v403, 8
      %v519 = vpop.permute.xlu0 %518
      %520 = vrot.lane.b32.xlu0 %v406, 8
      %v521 = vpop.permute.xlu0 %520
      %522 = vrot.lane.b32.xlu0 %v409, 8
      %v523 = vpop.permute.xlu0 %522
      %524 = vrot.lane.b32.xlu0 %v412, 8
      %v525 = vpop.permute.xlu0 %524
      %526 = vrot.lane.b32.xlu0 %v415, 8
      %v527 = vpop.permute.xlu0 %526
      %544 = vrot.lane.b32.xlu0 %v248, 12
      %v545 = vpop.permute.xlu0 %544
      %546 = vrot.lane.b32.xlu0 %v250, 12
      %v547 = vpop.permute.xlu0 %546
      %548 = vrot.lane.b32.xlu0 %v252, 12
      %v549 = vpop.permute.xlu0 %548
      %550 = vrot.lane.b32.xlu0 %v254, 12
      %v551 = vpop.permute.xlu0 %550
      %552 = vrot.lane.b32.xlu0 %v256, 12
      %v553 = vpop.permute.xlu0 %552
      %554 = vrot.lane.b32.xlu0 %v258, 12
      %v555 = vpop.permute.xlu0 %554
      %556 = vrot.lane.b32.xlu0 %v260, 12
      %v557 = vpop.permute.xlu0 %556
      %558 = vrot.lane.b32.xlu0 %v262, 12
      %v559 = vpop.permute.xlu0 %558
      %560 = vrot.lane.b32.xlu0 %v268, 12
      %v561 = vpop.permute.xlu0 %560
      %562 = vrot.lane.b32.xlu0 %v270, 12
      %v563 = vpop.permute.xlu0 %562
      %564 = vrot.lane.b32.xlu0 %v272, 12
      %v565 = vpop.permute.xlu0 %564
      %566 = vrot.lane.b32.xlu0 %v274, 12
      %v567 = vpop.permute.xlu0 %566
      %568 = vrot.lane.b32.xlu0 %v276, 12
      %v569 = vpop.permute.xlu0 %568
      %570 = vrot.lane.b32.xlu0 %v278, 12
      %v571 = vpop.permute.xlu0 %570
      %572 = vrot.lane.b32.xlu0 %v280, 12
      %v573 = vpop.permute.xlu0 %572
      %574 = vrot.lane.b32.xlu0 %v282, 12
      %v575 = vpop.permute.xlu0 %574
      %592 = vrot.lane.b32.xlu0 %v324, 16
      %v593 = vpop.permute.xlu0 %592
      %594 = vrot.lane.b32.xlu0 %v327, 16
      %v595 = vpop.permute.xlu0 %594
      %596 = vrot.lane.b32.xlu0 %v330, 16
      %v597 = vpop.permute.xlu0 %596
      %598 = vrot.lane.b32.xlu0 %v333, 16
      %v599 = vpop.permute.xlu0 %598
      %600 = vrot.lane.b32.xlu0 %v336, 16
      %v601 = vpop.permute.xlu0 %600
      %602 = vrot.lane.b32.xlu0 %v339, 16
      %v603 = vpop.permute.xlu0 %602
      %604 = vrot.lane.b32.xlu0 %v342, 16
      %v605 = vpop.permute.xlu0 %604
      %606 = vrot.lane.b32.xlu0 %v422, 16
      %v607 = vpop.permute.xlu0 %606
      %608 = vrot.lane.b32.xlu0 %v348, 16
      %v609 = vpop.permute.xlu0 %608
      %610 = vrot.lane.b32.xlu0 %v351, 16
      %v611 = vpop.permute.xlu0 %610
      %612 = vrot.lane.b32.xlu0 %v354, 16
      %v613 = vpop.permute.xlu0 %612
      %614 = vrot.lane.b32.xlu0 %v357, 16
      %v615 = vpop.permute.xlu0 %614
      %616 = vrot.lane.b32.xlu0 %v360, 16
      %v617 = vpop.permute.xlu0 %616
      %618 = vrot.lane.b32.xlu0 %v363, 16
      %v619 = vpop.permute.xlu0 %618
      %620 = vrot.lane.b32.xlu0 %v366, 16
      %v621 = vpop.permute.xlu0 %620
      %622 = vrot.lane.b32.xlu0 %v425, 16
      %v623 = vpop.permute.xlu0 %622
      %640 = vrot.lane.b32.xlu0 %v373, 20
      %v641 = vpop.permute.xlu0 %640
      %642 = vrot.lane.b32.xlu0 %v376, 20
      %v643 = vpop.permute.xlu0 %642
      %644 = vrot.lane.b32.xlu0 %v379, 20
      %v645 = vpop.permute.xlu0 %644
      %646 = vrot.lane.b32.xlu0 %v382, 20
      %v647 = vpop.permute.xlu0 %646
      %648 = vrot.lane.b32.xlu0 %v385, 20
      %v649 = vpop.permute.xlu0 %648
      %650 = vrot.lane.b32.xlu0 %v388, 20
      %v651 = vpop.permute.xlu0 %650
      %652 = vrot.lane.b32.xlu0 %v391, 20
      %v653 = vpop.permute.xlu0 %652
      %654 = vrot.lane.b32.xlu0 %v428, 20
      %v655 = vpop.permute.xlu0 %654
      %656 = vrot.lane.b32.xlu0 %v397, 20
      %v657 = vpop.permute.xlu0 %656
      %658 = vrot.lane.b32.xlu0 %v400, 20
      %v659 = vpop.permute.xlu0 %658
      %660 = vrot.lane.b32.xlu0 %v403, 20
      %v661 = vpop.permute.xlu0 %660
      %662 = vrot.lane.b32.xlu0 %v406, 20
      %v663 = vpop.permute.xlu0 %662
      %664 = vrot.lane.b32.xlu0 %v409, 20
      %v665 = vpop.permute.xlu0 %664
      %666 = vrot.lane.b32.xlu0 %v412, 20
      %v667 = vpop.permute.xlu0 %666
      %668 = vrot.lane.b32.xlu0 %v415, 20
      %v669 = vpop.permute.xlu0 %668
      %670 = vrot.lane.b32.xlu0 %v431, 20
      %v671 = vpop.permute.xlu0 %670
      %688 = vrot.lane.b32.xlu0 %v250, 24
      %v689 = vpop.permute.xlu0 %688
      %690 = vrot.lane.b32.xlu0 %v252, 24
      %v691 = vpop.permute.xlu0 %690
      %692 = vrot.lane.b32.xlu0 %v254, 24
      %v693 = vpop.permute.xlu0 %692
      %694 = vrot.lane.b32.xlu0 %v256, 24
      %v695 = vpop.permute.xlu0 %694
      %696 = vrot.lane.b32.xlu0 %v258, 24
      %v697 = vpop.permute.xlu0 %696
      %698 = vrot.lane.b32.xlu0 %v260, 24
      %v699 = vpop.permute.xlu0 %698
      %700 = vrot.lane.b32.xlu0 %v262, 24
      %v701 = vpop.permute.xlu0 %700
      %702 = vrot.lane.b32.xlu0 %v264, 24
      %v703 = vpop.permute.xlu0 %702
      %704 = vrot.lane.b32.xlu0 %v270, 24
      %v705 = vpop.permute.xlu0 %704
      %706 = vrot.lane.b32.xlu0 %v272, 24
      %v707 = vpop.permute.xlu0 %706
      %708 = vrot.lane.b32.xlu0 %v274, 24
      %v709 = vpop.permute.xlu0 %708
      %710 = vrot.lane.b32.xlu0 %v276, 24
      %v711 = vpop.permute.xlu0 %710
      %712 = vrot.lane.b32.xlu0 %v278, 24
      %v713 = vpop.permute.xlu0 %712
      %714 = vrot.lane.b32.xlu0 %v280, 24
      %v715 = vpop.permute.xlu0 %714
      %716 = vrot.lane.b32.xlu0 %v282, 24
      %v717 = vpop.permute.xlu0 %716
      %718 = vrot.lane.b32.xlu0 %v284, 24
      %v719 = vpop.permute.xlu0 %718
      %736 = vrot.lane.b32.xlu0 %v327, 28
      %v737 = vpop.permute.xlu0 %736
      %738 = vrot.lane.b32.xlu0 %v330, 28
      %v739 = vpop.permute.xlu0 %738
      %740 = vrot.lane.b32.xlu0 %v333, 28
      %v741 = vpop.permute.xlu0 %740
      %742 = vrot.lane.b32.xlu0 %v336, 28
      %v743 = vpop.permute.xlu0 %742
      %744 = vrot.lane.b32.xlu0 %v339, 28
      %v745 = vpop.permute.xlu0 %744
      %746 = vrot.lane.b32.xlu0 %v342, 28
      %v747 = vpop.permute.xlu0 %746
      %748 = vrot.lane.b32.xlu0 %v422, 28
      %v749 = vpop.permute.xlu0 %748
      %750 = vrot.lane.b32.xlu0 %v438, 28
      %v751 = vpop.permute.xlu0 %750
      %752 = vrot.lane.b32.xlu0 %v351, 28
      %v753 = vpop.permute.xlu0 %752
      %754 = vrot.lane.b32.xlu0 %v354, 28
      %v755 = vpop.permute.xlu0 %754
      %756 = vrot.lane.b32.xlu0 %v357, 28
      %v757 = vpop.permute.xlu0 %756
      %758 = vrot.lane.b32.xlu0 %v360, 28
      %v759 = vpop.permute.xlu0 %758
      %760 = vrot.lane.b32.xlu0 %v363, 28
      %v761 = vpop.permute.xlu0 %760
      %762 = vrot.lane.b32.xlu0 %v366, 28
      %v763 = vpop.permute.xlu0 %762
      %764 = vrot.lane.b32.xlu0 %v425, 28
      %v765 = vpop.permute.xlu0 %764
      %766 = vrot.lane.b32.xlu0 %v441, 28
      %v767 = vpop.permute.xlu0 %766
      %784 = vrot.lane.b32.xlu0 %v376, 32
      %v785 = vpop.permute.xlu0 %784
      %786 = vrot.lane.b32.xlu0 %v379, 32
      %v787 = vpop.permute.xlu0 %786
      %788 = vrot.lane.b32.xlu0 %v382, 32
      %v789 = vpop.permute.xlu0 %788
      %790 = vrot.lane.b32.xlu0 %v385, 32
      %v791 = vpop.permute.xlu0 %790
      %792 = vrot.lane.b32.xlu0 %v388, 32
      %v793 = vpop.permute.xlu0 %792
      %794 = vrot.lane.b32.xlu0 %v391, 32
      %v795 = vpop.permute.xlu0 %794
      %796 = vrot.lane.b32.xlu0 %v428, 32
      %v797 = vpop.permute.xlu0 %796
      %798 = vrot.lane.b32.xlu0 %v444, 32
      %v799 = vpop.permute.xlu0 %798
      %800 = vrot.lane.b32.xlu0 %v400, 32
      %v801 = vpop.permute.xlu0 %800
      %802 = vrot.lane.b32.xlu0 %v403, 32
      %v803 = vpop.permute.xlu0 %802
      %804 = vrot.lane.b32.xlu0 %v406, 32
      %v805 = vpop.permute.xlu0 %804
      %806 = vrot.lane.b32.xlu0 %v409, 32
      %v807 = vpop.permute.xlu0 %806
      %808 = vrot.lane.b32.xlu0 %v412, 32
      %v809 = vpop.permute.xlu0 %808
      %810 = vrot.lane.b32.xlu0 %v415, 32
      %v811 = vpop.permute.xlu0 %810
      %812 = vrot.lane.b32.xlu0 %v431, 32
      %v813 = vpop.permute.xlu0 %812
      %814 = vrot.lane.b32.xlu0 %v447, 32
      %v815 = vpop.permute.xlu0 %814
      %v832 = vsel %vm171, %v246, %v449
      %v833 = vsel %vm171, %v248, %v451
      %v834 = vsel %vm171, %v250, %v453
      %v835 = vsel %vm171, %v252, %v455
      %v836 = vsel %vm171, %v254, %v457
      %v837 = vsel %vm171, %v256, %v459
      %v838 = vsel %vm171, %v258, %v461
      %v839 = vsel %vm171, %v260, %v463
      %v840 = vsel %vm171, %v266, %v465
      %v841 = vsel %vm171, %v268, %v467
      %v842 = vsel %vm171, %v270, %v469
      %v843 = vsel %vm171, %v272, %v471
      %v844 = vsel %vm171, %v274, %v473
      %v845 = vsel %vm171, %v276, %v475
      %v846 = vsel %vm171, %v278, %v477
      %v847 = vsel %vm171, %v280, %v479
      %vm848 = vcmask 64512
      %v849 = vsel %vm848, %v832, %v497
      %v850 = vsel %vm848, %v833, %v499
      %v851 = vsel %vm848, %v834, %v501
      %v852 = vsel %vm848, %v835, %v503
      %v853 = vsel %vm848, %v836, %v505
      %v854 = vsel %vm848, %v837, %v507
      %v855 = vsel %vm848, %v838, %v509
      %v856 = vsel %vm848, %v839, %v511
      %v857 = vsel %vm848, %v840, %v513
      %v858 = vsel %vm848, %v841, %v515
      %v859 = vsel %vm848, %v842, %v517
      %v860 = vsel %vm848, %v843, %v519
      %v861 = vsel %vm848, %v844, %v521
      %v862 = vsel %vm848, %v845, %v523
      %v863 = vsel %vm848, %v846, %v525
      %v864 = vsel %vm848, %v847, %v527
      %vm865 = vcmask 97280
      %v866 = vsel %vm865, %v849, %v545
      %v867 = vsel %vm865, %v850, %v547
      %v868 = vsel %vm865, %v851, %v549
      %v869 = vsel %vm865, %v852, %v551
      %v870 = vsel %vm865, %v853, %v553
      %v871 = vsel %vm865, %v854, %v555
      %v872 = vsel %vm865, %v855, %v557
      %v873 = vsel %vm865, %v856, %v559
      %v874 = vsel %vm865, %v857, %v561
      %v875 = vsel %vm865, %v858, %v563
      %v876 = vsel %vm865, %v859, %v565
      %v877 = vsel %vm865, %v860, %v567
      %v878 = vsel %vm865, %v861, %v569
      %v879 = vsel %vm865, %v862, %v571
      %v880 = vsel %vm865, %v863, %v573
      %v881 = vsel %vm865, %v864, %v575
      %vm882 = vcmask 130048
      %v883 = vsel %vm882, %v866, %v593
      %v884 = vsel %vm882, %v867, %v595
      %v885 = vsel %vm882, %v868, %v597
      %v886 = vsel %vm882, %v869, %v599
      %v887 = vsel %vm882, %v870, %v601
      %v888 = vsel %vm882, %v871, %v603
      %v889 = vsel %vm882, %v872, %v605
      %v890 = vsel %vm882, %v873, %v607
      %v891 = vsel %vm882, %v874, %v609
      %v892 = vsel %vm882, %v875, %v611
      %v893 = vsel %vm882, %v876, %v613
      %v894 = vsel %vm882, %v877, %v615
      %v895 = vsel %vm882, %v878, %v617
      %v896 = vsel %vm882, %v879, %v619
      %v897 = vsel %vm882, %v880, %v621
      %v898 = vsel %vm882, %v881, %v623
      %vm899 = vcmask 162816
      %v900 = vsel %vm899, %v883, %v641
      %v901 = vsel %vm899, %v884, %v643
      %v902 = vsel %vm899, %v885, %v645
      %v903 = vsel %vm899, %v886, %v647
      %v904 = vsel %vm899, %v887, %v649
      %v905 = vsel %vm899, %v888, %v651
      %v906 = vsel %vm899, %v889, %v653
      %v907 = vsel %vm899, %v890, %v655
      %v908 = vsel %vm899, %v891, %v657
      %v909 = vsel %vm899, %v892, %v659
      %v910 = vsel %vm899, %v893, %v661
      %v911 = vsel %vm899, %v894, %v663
      %v912 = vsel %vm899, %v895, %v665
      %v913 = vsel %vm899, %v896, %v667
      %v914 = vsel %vm899, %v897, %v669
      %v915 = vsel %vm899, %v898, %v671
      %vm916 = vcmask 195584
      %v917 = vsel %vm916, %v900, %v689
      %v918 = vsel %vm916, %v901, %v691
      %v919 = vsel %vm916, %v902, %v693
      %v920 = vsel %vm916, %v903, %v695
      %v921 = vsel %vm916, %v904, %v697
      %v922 = vsel %vm916, %v905, %v699
      %v923 = vsel %vm916, %v906, %v701
      %v924 = vsel %vm916, %v907, %v703
      %v925 = vsel %vm916, %v908, %v705
      %v926 = vsel %vm916, %v909, %v707
      %v927 = vsel %vm916, %v910, %v709
      %v928 = vsel %vm916, %v911, %v711
      %v929 = vsel %vm916, %v912, %v713
      %v930 = vsel %vm916, %v913, %v715
      %v931 = vsel %vm916, %v914, %v717
      %v932 = vsel %vm916, %v915, %v719
      %vm933 = vcmask 228352
      %v934 = vsel %vm933, %v917, %v737
      %v935 = vsel %vm933, %v918, %v739
      %v936 = vsel %vm933, %v919, %v741
      %v937 = vsel %vm933, %v920, %v743
      %v938 = vsel %vm933, %v921, %v745
      %v939 = vsel %vm933, %v922, %v747
      %v940 = vsel %vm933, %v923, %v749
      %v941 = vsel %vm933, %v924, %v751
      %v942 = vsel %vm933, %v925, %v753
      %v943 = vsel %vm933, %v926, %v755
      %v944 = vsel %vm933, %v927, %v757
      %v945 = vsel %vm933, %v928, %v759
      %v946 = vsel %vm933, %v929, %v761
      %v947 = vsel %vm933, %v930, %v763
      %v948 = vsel %vm933, %v931, %v765
      %v949 = vsel %vm933, %v932, %v767
      %vm950 = vcmask 261120
      %v951 = vsel %vm950, %v934, %v785
      %v952 = vsel %vm950, %v935, %v787
      %v953 = vsel %vm950, %v936, %v789
      %v954 = vsel %vm950, %v937, %v791
      %v955 = vsel %vm950, %v938, %v793
      %v956 = vsel %vm950, %v939, %v795
      %v957 = vsel %vm950, %v940, %v797
      %v958 = vsel %vm950, %v941, %v799
      %v959 = vsel %vm950, %v942, %v801
      %v960 = vsel %vm950, %v943, %v803
      %v961 = vsel %vm950, %v944, %v805
      %v962 = vsel %vm950, %v945, %v807
      %v963 = vsel %vm950, %v946, %v809
      %v964 = vsel %vm950, %v947, %v811
      %v965 = vsel %vm950, %v948, %v813
      %v966 = vsel %vm950, %v949, %v815
      %v967 = vld [vmem:[%s1] sm:$0xff]
      %v968 = vld [vmem:[%s1 + $0x8] sm:$0xff]
      %v969 = vld [vmem:[%s1 + $0x10] sm:$0xff]
      %v970 = vld [vmem:[%s1 + $0x18] sm:$0xff]
      %v971 = vld [vmem:[%s1 + $0x20] sm:$0xf]
      %v972 = vld [vmem:[%s2] sm:$0x1]
      %v974 = vperm.slane %v972, 0
      %vm976 = vcmask 293888
      %v978 = vsel %vm976, %v951, 0
      %v981 = vsel %vm976, %v952, 0
      %v984 = vsel %vm976, %v953, 0
      %v987 = vsel %vm976, %v954, 0
      %v990 = vsel %vm976, %v955, 0
      %v993 = vsel %vm976, %v956, 0
      %v996 = vsel %vm976, %v957, 0
      %v999 = vsel %vm976, %v958, 0
      %v1002 = vsel %vm976, %v959, 0
      %v1005 = vsel %vm976, %v960, 0
      %v1008 = vsel %vm976, %v961, 0
      %v1011 = vsel %vm976, %v962, 0
      %v1014 = vsel %vm976, %v963, 0
      %v1017 = vsel %vm976, %v964, 0
      %v1020 = vsel %vm976, %v965, 0
      %v1023 = vsel %vm976, %v966, 0
      %vm1025 = vcmask 1043456
      %v1027 = vsel %vm1025, %v971, 0
      %1029 = vmatpush.msra.mxu0 0.0
      %1030 = vmatpush.msra.mxu0 0.0
      %1031 = vmatpush.msra.mxu0 0.0
      %1032 = vmatpush.msra.mxu0 0.0
      %1033 = vmatpush.msra.mxu0 0.0
      %1034 = vmatpush.msra.mxu0 0.0
      %1035 = vmatpush.msra.mxu0 0.0
      %1036 = vmatpush.msra.mxu0 0.0
      %1037 = vmatpush.msra.mxu0 0.0
      %1038 = vmatpush.msra.mxu0 0.0
      %1039 = vmatpush.msra.mxu0 0.0
      %1040 = vmatpush.msra.mxu0 %v1027
      %1041 = vmatpush.msra.mxu0 %v970
      %1042 = vmatpush.msra.mxu0 %v969
      %1043 = vmatpush.msra.mxu0 %v968
      %1044 = vmatpush.msra.mxu0 %v967
      %1045 = vmatmul.f32.gmra.mxu0 %v978
      %v1046 = vpop.f32.mrf.mxu0
      %v1047 = vadd.f32 %v974, %v1046
      %1048 = vmatmul.f32.gmra.mxu0 %v981
      %v1049 = vpop.f32.mrf.mxu0
      %v1050 = vadd.f32 %v974, %v1049
      %1051 = vmatmul.f32.gmra.mxu0 %v984
      %v1052 = vpop.f32.mrf.mxu0
      %v1053 = vadd.f32 %v974, %v1052
      %1054 = vmatmul.f32.gmra.mxu0 %v987
      %v1055 = vpop.f32.mrf.mxu0
      %v1056 = vadd.f32 %v974, %v1055
      %1057 = vmatmul.f32.gmra.mxu0 %v990
      %v1058 = vpop.f32.mrf.mxu0
      %v1059 = vadd.f32 %v974, %v1058
      %1060 = vmatmul.f32.gmra.mxu0 %v993
      %v1061 = vpop.f32.mrf.mxu0
      %v1062 = vadd.f32 %v974, %v1061
      %1063 = vmatmul.f32.gmra.mxu0 %v996
      %v1064 = vpop.f32.mrf.mxu0
      %v1065 = vadd.f32 %v974, %v1064
      %1066 = vmatmul.f32.gmra.mxu0 %v999
      %v1067 = vpop.f32.mrf.mxu0
      %v1068 = vadd.f32 %v974, %v1067
      %1069 = vmatmul.f32.gmra.mxu0 %v1002
      %v1070 = vpop.f32.mrf.mxu0
      %v1071 = vadd.f32 %v974, %v1070
      %1072 = vmatmul.f32.gmra.mxu0 %v1005
      %v1073 = vpop.f32.mrf.mxu0
      %v1074 = vadd.f32 %v974, %v1073
      %1075 = vmatmul.f32.gmra.mxu0 %v1008
      %v1076 = vpop.f32.mrf.mxu0
      %v1077 = vadd.f32 %v974, %v1076
      %1078 = vmatmul.f32.gmra.mxu0 %v1011
      %v1079 = vpop.f32.mrf.mxu0
      %v1080 = vadd.f32 %v974, %v1079
      %1081 = vmatmul.f32.gmra.mxu0 %v1014
      %v1082 = vpop.f32.mrf.mxu0
      %v1083 = vadd.f32 %v974, %v1082
      %1084 = vmatmul.f32.gmra.mxu0 %v1017
      %v1085 = vpop.f32.mrf.mxu0
      %v1086 = vadd.f32 %v974, %v1085
      %1087 = vmatmul.f32.gmra.mxu0 %v1020
      %v1088 = vpop.f32.mrf.mxu0
      %v1089 = vadd.f32 %v974, %v1088
      %1090 = vmatmul.f32.gmra.mxu0 %v1023
      %v1091 = vpop.f32.mrf.mxu0
      %v1092 = vadd.f32 %v974, %v1091
      %1093 = vdwg.mxu0
      %1094 = vst [vmem:[%s170] sm:$0xff] %v1047
      %1095 = vst [vmem:[%s170 + $0x8] sm:$0xff] %v1050
      %1096 = vst [vmem:[%s170 + $0x10] sm:$0xff] %v1053
      %1097 = vst [vmem:[%s170 + $0x18] sm:$0xff] %v1056
      %1098 = vst [vmem:[%s170 + $0x20] sm:$0xff] %v1059
      %1099 = vst [vmem:[%s170 + $0x28] sm:$0xff] %v1062
      %1100 = vst [vmem:[%s170 + $0x30] sm:$0xff] %v1065
      %1101 = vst [vmem:[%s170 + $0x38] sm:$0xff] %v1068
      %1102 = vst [vmem:[%s170 + $0x40] sm:$0xff] %v1071
      %1103 = vst [vmem:[%s170 + $0x48] sm:$0xff] %v1074
      %1104 = vst [vmem:[%s170 + $0x50] sm:$0xff] %v1077
      %1105 = vst [vmem:[%s170 + $0x58] sm:$0xff] %v1080
      %1106 = vst [vmem:[%s170 + $0x60] sm:$0xff] %v1083
      %1107 = vst [vmem:[%s170 + $0x68] sm:$0xff] %v1086
      %1108 = vst [vmem:[%s170 + $0x70] sm:$0xff] %v1089
      %1109 = vst [vmem:[%s170 + $0x78] sm:$0xff] %v1092
      %p1110 = scmp.lt.s32.totalorder %s14, 7
      %s1111 = scalar_select %p1110, %s14, 7
      %s1112 = smul.addr %s1111, 16
      %s1113 = smul.addr %s1112, 8
      %s1114 = scalar_lea.vmem %s3, %s1113
      // Predicated region
      $region33: #{convgru_forward.4} parent=31 // pred_check
        %p1115 = pneg %p100
      $region34: #{convgru_forward.4} parent=31 // pred_check_branch
        %1117 = sbr.rel (%p1115) target = $region36
      $region35: #{convgru_forward.4} parent=31 // pred_region
        _
      $region36: #{convgru_forward.4} parent=31 // pred_fallthru
        _
    $region32: #{convgru_forward.4} parent=5 // pred_fallthru
      _
    %p1118 = scmp.le.s32.totalorder 2, %s9
    // Predicated region
    $region37: #{convgru_forward.4} parent=5 // pred_check
      %p1119 = pneg %p1118
    $region38: #{convgru_forward.4} parent=5 // pred_check_branch
      %1121 = sbr.rel (%p1119) target = $region40
    $region39: #{convgru_forward.4} parent=5 // pred_region
      %s1122 = ssub.s32 %s9, 2
      // Predicated region
      $region41: #{convgru_forward.4} parent=39 // pred_check
        %p1123 = pneg %p106
      $region42: #{convgru_forward.4} parent=39 // pred_check_branch
        %1125 = sbr.rel (%p1123) target = $region44
      $region43: #{convgru_forward.4} parent=39 // pred_region
        %p1126 = scmp.lt.s32.totalorder %s15, 7
        %s1127 = scalar_select %p1126, %s15, 7
        %s1128 = smul.addr %s1127, 16
        %s1129 = smul.addr %s1128, 8
        %s1130 = scalar_lea.vmem %s3, %s1129
      $region44: #{convgru_forward.4} parent=39 // pred_fallthru
        _
    $region40: #{convgru_forward.4} parent=5 // pred_fallthru
      _
  $region6: #{convgru_forward.4} parent=0 // loop_footer
    %s13 = sadd.s32 1, %s9
  $region7: #{convgru_forward.4} parent=0 // loop_footer_branch
    %8 = sbr.rel target = $region3
  $region8: #{convgru_forward.4} parent=0 // loop_exit
    _

</llo_original>
